<compile_context>
chip_gen: v6e
topology: v6e:2x2x1
jax: 0.10.0
libtpu: 0.0.40
codegen_flags: <defaults>
</compile_context>

<pallas_src>
import numpy as np
import jax
import jax.numpy as jnp
from jax.experimental import pallas as pl
from jax.experimental.pallas import tpu as pltpu

LEAKY_SLOPE = 0.2
BN_EPS = 1e-5        # nn.BatchNorm2d default eps (training-mode batch stats)
MBSTD_EPS = 1e-8


def _leaky(x):
    return jnp.where(x > 0, x, LEAKY_SLOPE * x)


# ------------------------------ fused Pallas kernel ------------------------------

def _disc_kernel(x_ref,
                 r1_ref, b1_ref,
                 r2_ref, b2_ref, g2_ref, be2_ref, p2_ref, pt2_ref,
                 r3_ref, b3_ref, g3_ref, be3_ref, p3_ref, pt3_ref,
                 r4_ref, b4_ref,
                 avgn_ref, w5rep_ref, pooln_ref, w5sum_ref,
                 o_ref):
    f32 = jnp.float32

    def conv3x3(x, r, b):
        # x: (rows_in, Win*Cin)   laid out row=(n,h), col=(w,c)
        # r: (3*rows_out, rows_in)        circular height gather + stride, per kh
        # b: (3*Win*Cin, Wout*Cout)       circular width gather + stride folded w/ weights
        rows_out = r.shape[0] // 3
        k_in = b.shape[0] // 3
        xr = jnp.dot(r, x, preferred_element_type=f32)            # (3*rows_out, Win*Cin)
        y = jnp.dot(xr[0:rows_out, :], b[0:k_in, :], preferred_element_type=f32)
        y = y + jnp.dot(xr[rows_out:2 * rows_out, :], b[k_in:2 * k_in, :],
                        preferred_element_type=f32)
        y = y + jnp.dot(xr[2 * rows_out:3 * rows_out, :], b[2 * k_in:3 * k_in, :],
                        preferred_element_type=f32)
        return y                                                   # (rows_out, Wout*Cout)

    def bn_leaky(y, gamma, beta, p, pt):
        # training-mode BatchNorm2d over (N, H, W) per channel; single-pass stats
        c = p.shape[1]
        cnt = float(y.shape[0] * (y.shape[1] // c))                # N*Ho*Wo
        s = jnp.sum(y, axis=0, keepdims=True)                      # (1, Wo*C)
        ss = jnp.sum(y * y, axis=0, keepdims=True)
        ch_s = jnp.dot(s, p, preferred_element_type=f32)           # (1, C)
        ch_ss = jnp.dot(ss, p, preferred_element_type=f32)
        mean = ch_s / cnt
        var = jnp.maximum(ch_ss / cnt - mean * mean, 0.0)          # biased, as PyTorch norm
        scale = gamma * jax.lax.rsqrt(var + BN_EPS)
        shift = beta - mean * scale
        scale_f = jnp.dot(scale, pt, preferred_element_type=f32)   # back to (1, Wo*C)
        shift_f = jnp.dot(shift, pt, preferred_element_type=f32)
        return _leaky(y * scale_f + shift_f)

    x0 = x_ref[...]
    y1 = _leaky(conv3x3(x0, r1_ref[...], b1_ref[...]))             # (N*32, 128)
    y2 = bn_leaky(conv3x3(y1, r2_ref[...], b2_ref[...]),
                  g2_ref[...], be2_ref[...], p2_ref[...], pt2_ref[...])   # (N*16, 128)
    y3 = bn_leaky(conv3x3(y2, r3_ref[...], b3_ref[...]),
                  g3_ref[...], be3_ref[...], p3_ref[...], pt3_ref[...])   # (N*8, 128)
    y4 = conv3x3(y3, r4_ref[...], b4_ref[...])                     # (N*4, 4*hd) = (8, 128)

    # MinibatchStdDev: scalar = mean over elements of the per-element batch std
    avgn = avgn_ref[...]                                           # (4, N*4): average over n
    m = jnp.dot(avgn, y4, preferred_element_type=f32)              # (4, 4*hd)
    m2 = jnp.dot(avgn, y4 * y4, preferred_element_type=f32)
    var_b = jnp.maximum(m2 - m * m, 0.0)
    std = jnp.sqrt(var_b + MBSTD_EPS)
    n_elem = float(std.shape[0] * std.shape[1])                    # 4*4*hd
    std_scalar = jnp.sum(jnp.sum(std, axis=1, keepdims=True),
                         axis=0, keepdims=True) / n_elem           # (1, 1)

    # LeakyReLU -> Conv2d(hd+1, 1, 4, bias=False) -> Sigmoid
    # (std channel folded in; LeakyReLU(std) == std since std >= 0)
    lk = _leaky(y4)
    prod = lk * w5rep_ref[...]                                     # (N*4, 4*hd)
    pooled = jnp.dot(pooln_ref[...], prod, preferred_element_type=f32)   # (N, 4*hd)
    out_pre = jnp.sum(pooled, axis=1, keepdims=True)               # (N, 1)
    out_pre = out_pre + std_scalar * w5sum_ref[...]
    o_ref[...] = jax.nn.sigmoid(out_pre)


# ------------------------- host-side one-time precomputation ---------------------

def _build_row_select(n, h_in, h_out, stride, k):
    """Stacked-over-kh 0/1 row-gather matrix: (k*n*h_out, n*h_in)."""
    p = k // 2
    r = np.zeros((k, n, h_out, n, h_in), np.float32)
    for kh in range(k):
        for b in range(n):
            for ho in range(h_out):
                r[kh, b, ho, b, (stride * ho + kh - p) % h_in] = 1.0
    return r.reshape(k * n * h_out, n * h_in)


def _build_col_weight(w_in, c_in, w_out, c_out, stride, k, wt):
    """Stacked-over-kh width-gather folded with the conv weights.

    wt: (c_out, c_in, k, k) PyTorch layout.  Returns (k*w_in*c_in, w_out*c_out) with
    B[kh, w, ci, wo, co] = wt[co, ci, kh, kw] where w = (stride*wo + kw - k//2) % w_in.
    """
    p = k // 2
    b = np.zeros((k, w_in, c_in, w_out, c_out), np.float32)
    for kh in range(k):
        for kw in range(k):
            for wo in range(w_out):
                w = (stride * wo + kw - p) % w_in
                b[kh, w, :, wo, :] += wt[:, :, kh, kw].T
    return b.reshape(k * w_in * c_in, w_out * c_out)


def _build_channel_pool(w_out, c):
    """Channel-pooling 0/1 matrix P: (w_out*c, c); returns (P, P^T)."""
    p = np.zeros((w_out, c, c), np.float32)
    for ci in range(c):
        p[:, ci, ci] = 1.0
    p = p.reshape(w_out * c, c)
    return p, np.ascontiguousarray(p.T)


def init_discriminator(key, img_size, nc, hd, batch):
    assert img_size % 16 == 0 and img_size // 16 == 4, \
        "4 stride-2 convs + final 4x4 conv require img_size == 64"
    n = batch
    ks = jax.random.split(key, 5)

    def conv_w(k, cout, cin, kh, kw):
        # deterministic synthetic init, PyTorch (Cout, Cin, Kh, Kw) layout
        return np.asarray(jax.random.normal(k, (cout, cin, kh, kw), jnp.float32)) * 0.05

    w1 = conv_w(ks[0], hd // 8, nc, 3, 3)
    w2 = conv_w(ks[1], hd // 4, hd // 8, 3, 3)
    w3 = conv_w(ks[2], hd // 2, hd // 4, 3, 3)
    w4 = conv_w(ks[3], hd, hd // 2, 3, 3)
    w5 = conv_w(ks[4], 1, hd + 1, 4, 4)

    h0, h1, h2, h3, h4 = img_size, img_size // 2, img_size // 4, img_size // 8, img_size // 16
    c1, c2, c3, c4 = hd // 8, hd // 4, hd // 2, hd

    p2, pt2 = _build_channel_pool(h2, c2)
    p3, pt3 = _build_channel_pool(h3, c3)

    avgn = np.zeros((h4, n * h4), np.float32)
    pooln = np.zeros((n, n * h4), np.float32)
    for b in range(n):
        for h in range(h4):
            avgn[h, b * h4 + h] = 1.0 / n
            pooln[b, b * h4 + h] = 1.0

    w5rep = np.zeros((n * h4, h4 * c4), np.float32)
    for b in range(n):
        for h in range(h4):
            for w in range(h4):
                w5rep[b * h4 + h, w * c4:(w + 1) * c4] = w5[0, :c4, h, w]
    w5sum = np.array([[w5[0, c4, :, :].sum()]], np.float32)

    kernel_inputs = {
        "r1": _build_row_select(n, h0, h1, 2, 3),
        "b1": _build_col_weight(h0, nc, h1, c1, 2, 3, w1),
        "r2": _build_row_select(n, h1, h2, 2, 3),
        "b2": _build_col_weight(h1, c1, h2, c2, 2, 3, w2),
        "g2": np.ones((1, c2), np.float32), "be2": np.zeros((1, c2), np.float32),
        "p2": p2, "pt2": pt2,
        "r3": _build_row_select(n, h2, h3, 2, 3),
        "b3": _build_col_weight(h2, c2, h3, c3, 2, 3, w3),
        "g3": np.ones((1, c3), np.float32), "be3": np.zeros((1, c3), np.float32),
        "p3": p3, "pt3": pt3,
        "r4": _build_row_select(n, h3, h4, 2, 3),
        "b4": _build_col_weight(h3, c3, h4, c4, 2, 3, w4),
        "avgn": avgn, "w5rep": w5rep, "pooln": pooln, "w5sum": w5sum,
    }
    kernel_inputs = {k: jnp.asarray(v) for k, v in kernel_inputs.items()}

    def im2col_w(wt):  # (Cout,Cin,Kh,Kw) -> (Kh*Kw*Cin, Cout)
        return jnp.asarray(np.transpose(wt, (2, 3, 1, 0)).reshape(-1, wt.shape[0]))

    reference_params = {
        "w1m": im2col_w(w1), "w2m": im2col_w(w2), "w3m": im2col_w(w3),
        "w4m": im2col_w(w4), "w5m": im2col_w(w5),
        "g2": jnp.ones((c2,), jnp.float32), "b2": jnp.zeros((c2,), jnp.float32),
        "g3": jnp.ones((c3,), jnp.float32), "b3": jnp.zeros((c3,), jnp.float32),
    }
    return kernel_inputs, reference_params


# ----------------------------------- forward -------------------------------------

def discriminator_forward(x_nchw, kp):
    """x_nchw: (N, nc, H, W) f32 -> (N, 1, 1, 1) f32 (same as the PyTorch module)."""
    n, nc, h, w = x_nchw.shape
    x2d = jnp.transpose(x_nchw, (0, 2, 3, 1)).reshape(n * h, w * nc)   # row=(n,h), col=(w,c)

    args = [x2d,
            kp["r1"], kp["b1"],
            kp["r2"], kp["b2"], kp["g2"], kp["be2"], kp["p2"], kp["pt2"],
            kp["r3"], kp["b3"], kp["g3"], kp["be3"], kp["p3"], kp["pt3"],
            kp["r4"], kp["b4"],
            kp["avgn"], kp["w5rep"], kp["pooln"], kp["w5sum"]]

    out = pl.pallas_call(
        _disc_kernel,
        out_shape=jax.ShapeDtypeStruct((n, 1), jnp.float32),
        in_specs=[pl.BlockSpec(memory_space=pltpu.MemorySpace.VMEM) for _ in args],
        out_specs=pl.BlockSpec(memory_space=pltpu.MemorySpace.VMEM),
    )(*args)
    return out.reshape(n, 1, 1, 1)


# ------------------------- pure-JAX reference (verification) ---------------------

def _reference_forward(x_nchw, rp):
    x = jnp.transpose(x_nchw, (0, 2, 3, 1))
    n = x.shape[0]

    def pconv(x, w_mat, k=3, stride=2):
        p = k // 2
        nb, hh, ww, c = x.shape
        xp = jnp.pad(x, ((0, 0), (p, p), (p, p), (0, 0)), mode="wrap")
        ho = (hh + 2 * p - k) // stride + 1
        wo = (ww + 2 * p - k) // stride + 1
        cols = []
        for kh in range(k):
            for kw in range(k):
                cols.append(xp[:, kh:kh + stride * ho:stride, kw:kw + stride * wo:stride, :])
        patches = jnp.stack(cols, axis=3).reshape(nb * ho * wo, k * k * c)
        return jnp.dot(patches, w_mat).reshape(nb, ho, wo, -1)

    y = _leaky(pconv(x, rp["w1m"]))
    for wm, g, b in (("w2m", "g2", "b2"), ("w3m", "g3", "b3")):
        y = pconv(y, rp[wm])
        mean = jnp.mean(y, axis=(0, 1, 2), keepdims=True)
        var = jnp.mean((y - mean) ** 2, axis=(0, 1, 2), keepdims=True)
        y = (y - mean) * jax.lax.rsqrt(var + BN_EPS)
        y = y * rp[g].reshape(1, 1, 1, -1) + rp[b].reshape(1, 1, 1, -1)
        y = _leaky(y)
    y = pconv(y, rp["w4m"])                                        # (N, 4, 4, hd)

    flat = y.reshape(n, -1)
    mean = jnp.mean(flat, axis=0, keepdims=True)
    var = jnp.mean((flat - mean) ** 2, axis=0, keepdims=True)
    s = jnp.mean(jnp.sqrt(var + MBSTD_EPS))
    y = jnp.concatenate([y, jnp.broadcast_to(s, y.shape[:3] + (1,))], axis=-1)
    y = _leaky(y)
    out = jnp.dot(y.reshape(n, -1), rp["w5m"])
    return jax.nn.sigmoid(out).reshape(n, 1, 1, 1)


# ------------------------------------- main ---------------------------------------

if __name__ == "__main__":
    # Smallest shapes consistent with the module: 4 stride-2 convs + a final 4x4
    # conv require img_size = 64.  batch=2, nc=3, hd=32.
    img_size, nc, hd, batch = 64, 3, 32, 2

    key = jax.random.PRNGKey(0)
    k_x, k_p = jax.random.split(key)
    x = jax.random.normal(k_x, (batch, nc, img_size, img_size), jnp.float32)
    kernel_inputs, reference_params = init_discriminator(k_p, img_size, nc, hd, batch)

    fwd = jax.jit(discriminator_forward)
    out = fwd(x, kernel_inputs)
    jax.block_until_ready(out)

    assert out.shape == (batch, 1, 1, 1)
    assert bool(jnp.all(jnp.isfinite(out)))
    assert bool(jnp.all((out >= 0.0) & (out <= 1.0)))

    # Cross-check the fused Pallas kernel against a pure-JAX reference with the same
    # (assumed) semantics.
    ref = jax.jit(_reference_forward)(x, reference_params)
    jax.block_until_ready(ref)
    max_err = float(jnp.max(jnp.abs(out - ref)))
    assert max_err < 5e-3, f"kernel/reference mismatch: max abs err = {max_err}"

    print("KERNEL_OK")
</pallas_src>

<mosaic_0001>
module attributes {stable_mosaic.version = 11 : i64} {
  func.func @_disc_kernel(%arg0: memref<128x192xf32, #tpu.memory_space<vmem>>, %arg1: memref<192x128xf32, #tpu.memory_space<vmem>>, %arg2: memref<576x128xf32, #tpu.memory_space<vmem>>, %arg3: memref<96x64xf32, #tpu.memory_space<vmem>>, %arg4: memref<384x128xf32, #tpu.memory_space<vmem>>, %arg5: memref<1x8xf32, #tpu.memory_space<vmem>>, %arg6: memref<1x8xf32, #tpu.memory_space<vmem>>, %arg7: memref<128x8xf32, #tpu.memory_space<vmem>>, %arg8: memref<8x128xf32, #tpu.memory_space<vmem>>, %arg9: memref<48x32xf32, #tpu.memory_space<vmem>>, %arg10: memref<384x128xf32, #tpu.memory_space<vmem>>, %arg11: memref<1x16xf32, #tpu.memory_space<vmem>>, %arg12: memref<1x16xf32, #tpu.memory_space<vmem>>, %arg13: memref<128x16xf32, #tpu.memory_space<vmem>>, %arg14: memref<16x128xf32, #tpu.memory_space<vmem>>, %arg15: memref<24x16xf32, #tpu.memory_space<vmem>>, %arg16: memref<384x128xf32, #tpu.memory_space<vmem>>, %arg17: memref<4x8xf32, #tpu.memory_space<vmem>>, %arg18: memref<8x128xf32, #tpu.memory_space<vmem>>, %arg19: memref<2x8xf32, #tpu.memory_space<vmem>>, %arg20: memref<1x1xf32, #tpu.memory_space<vmem>>, %arg21: memref<2x1xf32, #tpu.memory_space<vmem>>) attributes {dimension_semantics = [], scalar_prefetch = 0 : i64, scratch_operands = 0 : i64, tpu.core_type = #tpu.core_type<tc>} {
    %c0 = arith.constant 0 : index
    %c0_0 = arith.constant 0 : index
    %0 = vector.load %arg0[%c0, %c0_0] : memref<128x192xf32, #tpu.memory_space<vmem>>, vector<128x192xf32>
    %c0_1 = arith.constant 0 : index
    %c0_2 = arith.constant 0 : index
    %1 = vector.load %arg1[%c0_1, %c0_2] : memref<192x128xf32, #tpu.memory_space<vmem>>, vector<192x128xf32>
    %c0_3 = arith.constant 0 : index
    %c0_4 = arith.constant 0 : index
    %2 = vector.load %arg2[%c0_3, %c0_4] : memref<576x128xf32, #tpu.memory_space<vmem>>, vector<576x128xf32>
    %cst = arith.constant dense<0.000000e+00> : vector<192x192xf32>
    %3 = tpu.matmul %1, %0, %cst {dimension_numbers = #tpu.dot_dimension_numbers<[1], [0], [0], [1], [0, 0, 1, 1], [], []>} : vector<192x128xf32>, vector<128x192xf32>, vector<192x192xf32> -> vector<192x192xf32>
    %4 = vector.extract_strided_slice %3 {offsets = [0, 0], sizes = [64, 192], strides = [1, 1]} : vector<192x192xf32> to vector<64x192xf32>
    %5 = vector.extract_strided_slice %2 {offsets = [0, 0], sizes = [192, 128], strides = [1, 1]} : vector<576x128xf32> to vector<192x128xf32>
    %cst_5 = arith.constant dense<0.000000e+00> : vector<64x128xf32>
    %6 = tpu.matmul %4, %5, %cst_5 {dimension_numbers = #tpu.dot_dimension_numbers<[1], [0], [0], [1], [0, 0, 1, 1], [], []>} : vector<64x192xf32>, vector<192x128xf32>, vector<64x128xf32> -> vector<64x128xf32>
    %7 = vector.extract_strided_slice %3 {offsets = [64, 0], sizes = [64, 192], strides = [1, 1]} : vector<192x192xf32> to vector<64x192xf32>
    %8 = vector.extract_strided_slice %2 {offsets = [192, 0], sizes = [192, 128], strides = [1, 1]} : vector<576x128xf32> to vector<192x128xf32>
    %cst_6 = arith.constant dense<0.000000e+00> : vector<64x128xf32>
    %9 = tpu.matmul %7, %8, %cst_6 {dimension_numbers = #tpu.dot_dimension_numbers<[1], [0], [0], [1], [0, 0, 1, 1], [], []>} : vector<64x192xf32>, vector<192x128xf32>, vector<64x128xf32> -> vector<64x128xf32>
    %10 = arith.addf %6, %9 : vector<64x128xf32>
    %11 = vector.extract_strided_slice %3 {offsets = [128, 0], sizes = [64, 192], strides = [1, 1]} : vector<192x192xf32> to vector<64x192xf32>
    %12 = vector.extract_strided_slice %2 {offsets = [384, 0], sizes = [192, 128], strides = [1, 1]} : vector<576x128xf32> to vector<192x128xf32>
    %cst_7 = arith.constant dense<0.000000e+00> : vector<64x128xf32>
    %13 = tpu.matmul %11, %12, %cst_7 {dimension_numbers = #tpu.dot_dimension_numbers<[1], [0], [0], [1], [0, 0, 1, 1], [], []>} : vector<64x192xf32>, vector<192x128xf32>, vector<64x128xf32> -> vector<64x128xf32>
    %14 = arith.addf %10, %13 : vector<64x128xf32>
    %cst_8 = arith.constant 0.000000e+00 : f32
    %15 = vector.broadcast %cst_8 : f32 to vector<64x128xf32>
    %16 = arith.cmpf ogt, %14, %15 : vector<64x128xf32>
    %cst_9 = arith.constant 2.000000e-01 : f32
    %17 = vector.broadcast %cst_9 : f32 to vector<64x128xf32>
    %18 = arith.mulf %17, %14 : vector<64x128xf32>
    %19 = arith.select %16, %14, %18 : vector<64x128xi1>, vector<64x128xf32>
    %c0_10 = arith.constant 0 : index
    %c0_11 = arith.constant 0 : index
    %20 = vector.load %arg3[%c0_10, %c0_11] : memref<96x64xf32, #tpu.memory_space<vmem>>, vector<96x64xf32>
    %c0_12 = arith.constant 0 : index
    %c0_13 = arith.constant 0 : index
    %21 = vector.load %arg4[%c0_12, %c0_13] : memref<384x128xf32, #tpu.memory_space<vmem>>, vector<384x128xf32>
    %cst_14 = arith.constant dense<0.000000e+00> : vector<96x128xf32>
    %22 = tpu.matmul %20, %19, %cst_14 {dimension_numbers = #tpu.dot_dimension_numbers<[1], [0], [0], [1], [0, 0, 1, 1], [], []>} : vector<96x64xf32>, vector<64x128xf32>, vector<96x128xf32> -> vector<96x128xf32>
    %23 = vector.extract_strided_slice %22 {offsets = [0, 0], sizes = [32, 128], strides = [1, 1]} : vector<96x128xf32> to vector<32x128xf32>
    %24 = vector.extract_strided_slice %21 {offsets = [0, 0], sizes = [128, 128], strides = [1, 1]} : vector<384x128xf32> to vector<128x128xf32>
    %cst_15 = arith.constant dense<0.000000e+00> : vector<32x128xf32>
    %25 = tpu.matmul %23, %24, %cst_15 {dimension_numbers = #tpu.dot_dimension_numbers<[1], [0], [0], [1], [0, 0, 1, 1], [], []>} : vector<32x128xf32>, vector<128x128xf32>, vector<32x128xf32> -> vector<32x128xf32>
    %26 = vector.extract_strided_slice %22 {offsets = [32, 0], sizes = [32, 128], strides = [1, 1]} : vector<96x128xf32> to vector<32x128xf32>
    %27 = vector.extract_strided_slice %21 {offsets = [128, 0], sizes = [128, 128], strides = [1, 1]} : vector<384x128xf32> to vector<128x128xf32>
    %cst_16 = arith.constant dense<0.000000e+00> : vector<32x128xf32>
    %28 = tpu.matmul %26, %27, %cst_16 {dimension_numbers = #tpu.dot_dimension_numbers<[1], [0], [0], [1], [0, 0, 1, 1], [], []>} : vector<32x128xf32>, vector<128x128xf32>, vector<32x128xf32> -> vector<32x128xf32>
    %29 = arith.addf %25, %28 : vector<32x128xf32>
    %30 = vector.extract_strided_slice %22 {offsets = [64, 0], sizes = [32, 128], strides = [1, 1]} : vector<96x128xf32> to vector<32x128xf32>
    %31 = vector.extract_strided_slice %21 {offsets = [256, 0], sizes = [128, 128], strides = [1, 1]} : vector<384x128xf32> to vector<128x128xf32>
    %cst_17 = arith.constant dense<0.000000e+00> : vector<32x128xf32>
    %32 = tpu.matmul %30, %31, %cst_17 {dimension_numbers = #tpu.dot_dimension_numbers<[1], [0], [0], [1], [0, 0, 1, 1], [], []>} : vector<32x128xf32>, vector<128x128xf32>, vector<32x128xf32> -> vector<32x128xf32>
    %33 = arith.addf %29, %32 : vector<32x128xf32>
    %c0_18 = arith.constant 0 : index
    %c0_19 = arith.constant 0 : index
    %34 = vector.load %arg5[%c0_18, %c0_19] : memref<1x8xf32, #tpu.memory_space<vmem>>, vector<1x8xf32>
    %c0_20 = arith.constant 0 : index
    %c0_21 = arith.constant 0 : index
    %35 = vector.load %arg6[%c0_20, %c0_21] : memref<1x8xf32, #tpu.memory_space<vmem>>, vector<1x8xf32>
    %c0_22 = arith.constant 0 : index
    %c0_23 = arith.constant 0 : index
    %36 = vector.load %arg7[%c0_22, %c0_23] : memref<128x8xf32, #tpu.memory_space<vmem>>, vector<128x8xf32>
    %c0_24 = arith.constant 0 : index
    %c0_25 = arith.constant 0 : index
    %37 = vector.load %arg8[%c0_24, %c0_25] : memref<8x128xf32, #tpu.memory_space<vmem>>, vector<8x128xf32>
    %cst_26 = arith.constant dense<0.000000e+00> : vector<128xf32>
    %38 = vector.multi_reduction <add>, %33, %cst_26 [0] : vector<32x128xf32> to vector<128xf32>
    %39 = vector.shape_cast %38 : vector<128xf32> to vector<1x128xf32>
    %40 = arith.mulf %33, %33 : vector<32x128xf32>
    %cst_27 = arith.constant dense<0.000000e+00> : vector<128xf32>
    %41 = vector.multi_reduction <add>, %40, %cst_27 [0] : vector<32x128xf32> to vector<128xf32>
    %42 = vector.shape_cast %41 : vector<128xf32> to vector<1x128xf32>
    %cst_28 = arith.constant dense<0.000000e+00> : vector<1x8xf32>
    %43 = tpu.matmul %39, %36, %cst_28 {dimension_numbers = #tpu.dot_dimension_numbers<[1], [0], [0], [1], [0, 0, 1, 1], [], []>} : vector<1x128xf32>, vector<128x8xf32>, vector<1x8xf32> -> vector<1x8xf32>
    %cst_29 = arith.constant dense<0.000000e+00> : vector<1x8xf32>
    %44 = tpu.matmul %42, %36, %cst_29 {dimension_numbers = #tpu.dot_dimension_numbers<[1], [0], [0], [1], [0, 0, 1, 1], [], []>} : vector<1x128xf32>, vector<128x8xf32>, vector<1x8xf32> -> vector<1x8xf32>
    %cst_30 = arith.constant 5.120000e+02 : f32
    %45 = vector.broadcast %cst_30 : f32 to vector<1x8xf32>
    %46 = arith.divf %43, %45 : vector<1x8xf32>
    %cst_31 = arith.constant 5.120000e+02 : f32
    %47 = vector.broadcast %cst_31 : f32 to vector<1x8xf32>
    %48 = arith.divf %44, %47 : vector<1x8xf32>
    %49 = arith.mulf %46, %46 : vector<1x8xf32>
    %50 = arith.subf %48, %49 : vector<1x8xf32>
    %cst_32 = arith.constant 0.000000e+00 : f32
    %51 = vector.broadcast %cst_32 : f32 to vector<1x8xf32>
    %52 = arith.maximumf %50, %51 : vector<1x8xf32>
    %cst_33 = arith.constant 9.99999974E-6 : f32
    %53 = vector.broadcast %cst_33 : f32 to vector<1x8xf32>
    %54 = arith.addf %52, %53 : vector<1x8xf32>
    %55 = math.rsqrt %54 : vector<1x8xf32>
    %56 = arith.mulf %34, %55 : vector<1x8xf32>
    %57 = arith.mulf %46, %56 : vector<1x8xf32>
    %58 = arith.subf %35, %57 : vector<1x8xf32>
    %cst_34 = arith.constant dense<0.000000e+00> : vector<1x128xf32>
    %59 = tpu.matmul %56, %37, %cst_34 {dimension_numbers = #tpu.dot_dimension_numbers<[1], [0], [0], [1], [0, 0, 1, 1], [], []>} : vector<1x8xf32>, vector<8x128xf32>, vector<1x128xf32> -> vector<1x128xf32>
    %cst_35 = arith.constant dense<0.000000e+00> : vector<1x128xf32>
    %60 = tpu.matmul %58, %37, %cst_35 {dimension_numbers = #tpu.dot_dimension_numbers<[1], [0], [0], [1], [0, 0, 1, 1], [], []>} : vector<1x8xf32>, vector<8x128xf32>, vector<1x128xf32> -> vector<1x128xf32>
    %61 = vector.broadcast %59 : vector<1x128xf32> to vector<32x128xf32>
    %62 = arith.mulf %33, %61 : vector<32x128xf32>
    %63 = vector.broadcast %60 : vector<1x128xf32> to vector<32x128xf32>
    %64 = arith.addf %62, %63 : vector<32x128xf32>
    %cst_36 = arith.constant 0.000000e+00 : f32
    %65 = vector.broadcast %cst_36 : f32 to vector<32x128xf32>
    %66 = arith.cmpf ogt, %64, %65 : vector<32x128xf32>
    %cst_37 = arith.constant 2.000000e-01 : f32
    %67 = vector.broadcast %cst_37 : f32 to vector<32x128xf32>
    %68 = arith.mulf %67, %64 : vector<32x128xf32>
    %69 = arith.select %66, %64, %68 : vector<32x128xi1>, vector<32x128xf32>
    %c0_38 = arith.constant 0 : index
    %c0_39 = arith.constant 0 : index
    %70 = vector.load %arg9[%c0_38, %c0_39] : memref<48x32xf32, #tpu.memory_space<vmem>>, vector<48x32xf32>
    %c0_40 = arith.constant 0 : index
    %c0_41 = arith.constant 0 : index
    %71 = vector.load %arg10[%c0_40, %c0_41] : memref<384x128xf32, #tpu.memory_space<vmem>>, vector<384x128xf32>
    %cst_42 = arith.constant dense<0.000000e+00> : vector<48x128xf32>
    %72 = tpu.matmul %70, %69, %cst_42 {dimension_numbers = #tpu.dot_dimension_numbers<[1], [0], [0], [1], [0, 0, 1, 1], [], []>} : vector<48x32xf32>, vector<32x128xf32>, vector<48x128xf32> -> vector<48x128xf32>
    %73 = vector.extract_strided_slice %72 {offsets = [0, 0], sizes = [16, 128], strides = [1, 1]} : vector<48x128xf32> to vector<16x128xf32>
    %74 = vector.extract_strided_slice %71 {offsets = [0, 0], sizes = [128, 128], strides = [1, 1]} : vector<384x128xf32> to vector<128x128xf32>
    %cst_43 = arith.constant dense<0.000000e+00> : vector<16x128xf32>
    %75 = tpu.matmul %73, %74, %cst_43 {dimension_numbers = #tpu.dot_dimension_numbers<[1], [0], [0], [1], [0, 0, 1, 1], [], []>} : vector<16x128xf32>, vector<128x128xf32>, vector<16x128xf32> -> vector<16x128xf32>
    %76 = vector.extract_strided_slice %72 {offsets = [16, 0], sizes = [16, 128], strides = [1, 1]} : vector<48x128xf32> to vector<16x128xf32>
    %77 = vector.extract_strided_slice %71 {offsets = [128, 0], sizes = [128, 128], strides = [1, 1]} : vector<384x128xf32> to vector<128x128xf32>
    %cst_44 = arith.constant dense<0.000000e+00> : vector<16x128xf32>
    %78 = tpu.matmul %76, %77, %cst_44 {dimension_numbers = #tpu.dot_dimension_numbers<[1], [0], [0], [1], [0, 0, 1, 1], [], []>} : vector<16x128xf32>, vector<128x128xf32>, vector<16x128xf32> -> vector<16x128xf32>
    %79 = arith.addf %75, %78 : vector<16x128xf32>
    %80 = vector.extract_strided_slice %72 {offsets = [32, 0], sizes = [16, 128], strides = [1, 1]} : vector<48x128xf32> to vector<16x128xf32>
    %81 = vector.extract_strided_slice %71 {offsets = [256, 0], sizes = [128, 128], strides = [1, 1]} : vector<384x128xf32> to vector<128x128xf32>
    %cst_45 = arith.constant dense<0.000000e+00> : vector<16x128xf32>
    %82 = tpu.matmul %80, %81, %cst_45 {dimension_numbers = #tpu.dot_dimension_numbers<[1], [0], [0], [1], [0, 0, 1, 1], [], []>} : vector<16x128xf32>, vector<128x128xf32>, vector<16x128xf32> -> vector<16x128xf32>
    %83 = arith.addf %79, %82 : vector<16x128xf32>
    %c0_46 = arith.constant 0 : index
    %c0_47 = arith.constant 0 : index
    %84 = vector.load %arg11[%c0_46, %c0_47] : memref<1x16xf32, #tpu.memory_space<vmem>>, vector<1x16xf32>
    %c0_48 = arith.constant 0 : index
    %c0_49 = arith.constant 0 : index
    %85 = vector.load %arg12[%c0_48, %c0_49] : memref<1x16xf32, #tpu.memory_space<vmem>>, vector<1x16xf32>
    %c0_50 = arith.constant 0 : index
    %c0_51 = arith.constant 0 : index
    %86 = vector.load %arg13[%c0_50, %c0_51] : memref<128x16xf32, #tpu.memory_space<vmem>>, vector<128x16xf32>
    %c0_52 = arith.constant 0 : index
    %c0_53 = arith.constant 0 : index
    %87 = vector.load %arg14[%c0_52, %c0_53] : memref<16x128xf32, #tpu.memory_space<vmem>>, vector<16x128xf32>
    %cst_54 = arith.constant dense<0.000000e+00> : vector<128xf32>
    %88 = vector.multi_reduction <add>, %83, %cst_54 [0] : vector<16x128xf32> to vector<128xf32>
    %89 = vector.shape_cast %88 : vector<128xf32> to vector<1x128xf32>
    %90 = arith.mulf %83, %83 : vector<16x128xf32>
    %cst_55 = arith.constant dense<0.000000e+00> : vector<128xf32>
    %91 = vector.multi_reduction <add>, %90, %cst_55 [0] : vector<16x128xf32> to vector<128xf32>
    %92 = vector.shape_cast %91 : vector<128xf32> to vector<1x128xf32>
    %cst_56 = arith.constant dense<0.000000e+00> : vector<1x16xf32>
    %93 = tpu.matmul %89, %86, %cst_56 {dimension_numbers = #tpu.dot_dimension_numbers<[1], [0], [0], [1], [0, 0, 1, 1], [], []>} : vector<1x128xf32>, vector<128x16xf32>, vector<1x16xf32> -> vector<1x16xf32>
    %cst_57 = arith.constant dense<0.000000e+00> : vector<1x16xf32>
    %94 = tpu.matmul %92, %86, %cst_57 {dimension_numbers = #tpu.dot_dimension_numbers<[1], [0], [0], [1], [0, 0, 1, 1], [], []>} : vector<1x128xf32>, vector<128x16xf32>, vector<1x16xf32> -> vector<1x16xf32>
    %cst_58 = arith.constant 1.280000e+02 : f32
    %95 = vector.broadcast %cst_58 : f32 to vector<1x16xf32>
    %96 = arith.divf %93, %95 : vector<1x16xf32>
    %cst_59 = arith.constant 1.280000e+02 : f32
    %97 = vector.broadcast %cst_59 : f32 to vector<1x16xf32>
    %98 = arith.divf %94, %97 : vector<1x16xf32>
    %99 = arith.mulf %96, %96 : vector<1x16xf32>
    %100 = arith.subf %98, %99 : vector<1x16xf32>
    %cst_60 = arith.constant 0.000000e+00 : f32
    %101 = vector.broadcast %cst_60 : f32 to vector<1x16xf32>
    %102 = arith.maximumf %100, %101 : vector<1x16xf32>
    %cst_61 = arith.constant 9.99999974E-6 : f32
    %103 = vector.broadcast %cst_61 : f32 to vector<1x16xf32>
    %104 = arith.addf %102, %103 : vector<1x16xf32>
    %105 = math.rsqrt %104 : vector<1x16xf32>
    %106 = arith.mulf %84, %105 : vector<1x16xf32>
    %107 = arith.mulf %96, %106 : vector<1x16xf32>
    %108 = arith.subf %85, %107 : vector<1x16xf32>
    %cst_62 = arith.constant dense<0.000000e+00> : vector<1x128xf32>
    %109 = tpu.matmul %106, %87, %cst_62 {dimension_numbers = #tpu.dot_dimension_numbers<[1], [0], [0], [1], [0, 0, 1, 1], [], []>} : vector<1x16xf32>, vector<16x128xf32>, vector<1x128xf32> -> vector<1x128xf32>
    %cst_63 = arith.constant dense<0.000000e+00> : vector<1x128xf32>
    %110 = tpu.matmul %108, %87, %cst_63 {dimension_numbers = #tpu.dot_dimension_numbers<[1], [0], [0], [1], [0, 0, 1, 1], [], []>} : vector<1x16xf32>, vector<16x128xf32>, vector<1x128xf32> -> vector<1x128xf32>
    %111 = vector.broadcast %109 : vector<1x128xf32> to vector<16x128xf32>
    %112 = arith.mulf %83, %111 : vector<16x128xf32>
    %113 = vector.broadcast %110 : vector<1x128xf32> to vector<16x128xf32>
    %114 = arith.addf %112, %113 : vector<16x128xf32>
    %cst_64 = arith.constant 0.000000e+00 : f32
    %115 = vector.broadcast %cst_64 : f32 to vector<16x128xf32>
    %116 = arith.cmpf ogt, %114, %115 : vector<16x128xf32>
    %cst_65 = arith.constant 2.000000e-01 : f32
    %117 = vector.broadcast %cst_65 : f32 to vector<16x128xf32>
    %118 = arith.mulf %117, %114 : vector<16x128xf32>
    %119 = arith.select %116, %114, %118 : vector<16x128xi1>, vector<16x128xf32>
    %c0_66 = arith.constant 0 : index
    %c0_67 = arith.constant 0 : index
    %120 = vector.load %arg15[%c0_66, %c0_67] : memref<24x16xf32, #tpu.memory_space<vmem>>, vector<24x16xf32>
    %c0_68 = arith.constant 0 : index
    %c0_69 = arith.constant 0 : index
    %121 = vector.load %arg16[%c0_68, %c0_69] : memref<384x128xf32, #tpu.memory_space<vmem>>, vector<384x128xf32>
    %cst_70 = arith.constant dense<0.000000e+00> : vector<24x128xf32>
    %122 = tpu.matmul %120, %119, %cst_70 {dimension_numbers = #tpu.dot_dimension_numbers<[1], [0], [0], [1], [0, 0, 1, 1], [], []>} : vector<24x16xf32>, vector<16x128xf32>, vector<24x128xf32> -> vector<24x128xf32>
    %123 = vector.extract_strided_slice %122 {offsets = [0, 0], sizes = [8, 128], strides = [1, 1]} : vector<24x128xf32> to vector<8x128xf32>
    %124 = vector.extract_strided_slice %121 {offsets = [0, 0], sizes = [128, 128], strides = [1, 1]} : vector<384x128xf32> to vector<128x128xf32>
    %cst_71 = arith.constant dense<0.000000e+00> : vector<8x128xf32>
    %125 = tpu.matmul %123, %124, %cst_71 {dimension_numbers = #tpu.dot_dimension_numbers<[1], [0], [0], [1], [0, 0, 1, 1], [], []>} : vector<8x128xf32>, vector<128x128xf32>, vector<8x128xf32> -> vector<8x128xf32>
    %126 = vector.extract_strided_slice %122 {offsets = [8, 0], sizes = [8, 128], strides = [1, 1]} : vector<24x128xf32> to vector<8x128xf32>
    %127 = vector.extract_strided_slice %121 {offsets = [128, 0], sizes = [128, 128], strides = [1, 1]} : vector<384x128xf32> to vector<128x128xf32>
    %cst_72 = arith.constant dense<0.000000e+00> : vector<8x128xf32>
    %128 = tpu.matmul %126, %127, %cst_72 {dimension_numbers = #tpu.dot_dimension_numbers<[1], [0], [0], [1], [0, 0, 1, 1], [], []>} : vector<8x128xf32>, vector<128x128xf32>, vector<8x128xf32> -> vector<8x128xf32>
    %129 = arith.addf %125, %128 : vector<8x128xf32>
    %130 = vector.extract_strided_slice %122 {offsets = [16, 0], sizes = [8, 128], strides = [1, 1]} : vector<24x128xf32> to vector<8x128xf32>
    %131 = vector.extract_strided_slice %121 {offsets = [256, 0], sizes = [128, 128], strides = [1, 1]} : vector<384x128xf32> to vector<128x128xf32>
    %cst_73 = arith.constant dense<0.000000e+00> : vector<8x128xf32>
    %132 = tpu.matmul %130, %131, %cst_73 {dimension_numbers = #tpu.dot_dimension_numbers<[1], [0], [0], [1], [0, 0, 1, 1], [], []>} : vector<8x128xf32>, vector<128x128xf32>, vector<8x128xf32> -> vector<8x128xf32>
    %133 = arith.addf %129, %132 : vector<8x128xf32>
    %c0_74 = arith.constant 0 : index
    %c0_75 = arith.constant 0 : index
    %134 = vector.load %arg17[%c0_74, %c0_75] : memref<4x8xf32, #tpu.memory_space<vmem>>, vector<4x8xf32>
    %cst_76 = arith.constant dense<0.000000e+00> : vector<4x128xf32>
    %135 = tpu.matmul %134, %133, %cst_76 {dimension_numbers = #tpu.dot_dimension_numbers<[1], [0], [0], [1], [0, 0, 1, 1], [], []>} : vector<4x8xf32>, vector<8x128xf32>, vector<4x128xf32> -> vector<4x128xf32>
    %136 = arith.mulf %133, %133 : vector<8x128xf32>
    %cst_77 = arith.constant dense<0.000000e+00> : vector<4x128xf32>
    %137 = tpu.matmul %134, %136, %cst_77 {dimension_numbers = #tpu.dot_dimension_numbers<[1], [0], [0], [1], [0, 0, 1, 1], [], []>} : vector<4x8xf32>, vector<8x128xf32>, vector<4x128xf32> -> vector<4x128xf32>
    %138 = arith.mulf %135, %135 : vector<4x128xf32>
    %139 = arith.subf %137, %138 : vector<4x128xf32>
    %cst_78 = arith.constant 0.000000e+00 : f32
    %140 = vector.broadcast %cst_78 : f32 to vector<4x128xf32>
    %141 = arith.maximumf %139, %140 : vector<4x128xf32>
    %cst_79 = arith.constant 9.99999993E-9 : f32
    %142 = vector.broadcast %cst_79 : f32 to vector<4x128xf32>
    %143 = arith.addf %141, %142 : vector<4x128xf32>
    %144 = math.sqrt %143 : vector<4x128xf32>
    %cst_80 = arith.constant dense<0.000000e+00> : vector<4xf32>
    %145 = vector.multi_reduction <add>, %144, %cst_80 [1] : vector<4x128xf32> to vector<4xf32>
    %146 = vector.shape_cast %145 : vector<4xf32> to vector<4x1xf32>
    %cst_81 = arith.constant dense<0.000000e+00> : vector<1xf32>
    %147 = vector.multi_reduction <add>, %146, %cst_81 [0] : vector<4x1xf32> to vector<1xf32>
    %148 = vector.shape_cast %147 : vector<1xf32> to vector<1x1xf32>
    %cst_82 = arith.constant 5.120000e+02 : f32
    %149 = vector.broadcast %cst_82 : f32 to vector<1x1xf32>
    %150 = arith.divf %148, %149 : vector<1x1xf32>
    %cst_83 = arith.constant 0.000000e+00 : f32
    %151 = vector.broadcast %cst_83 : f32 to vector<8x128xf32>
    %152 = arith.cmpf ogt, %133, %151 : vector<8x128xf32>
    %cst_84 = arith.constant 2.000000e-01 : f32
    %153 = vector.broadcast %cst_84 : f32 to vector<8x128xf32>
    %154 = arith.mulf %153, %133 : vector<8x128xf32>
    %155 = arith.select %152, %133, %154 : vector<8x128xi1>, vector<8x128xf32>
    %c0_85 = arith.constant 0 : index
    %c0_86 = arith.constant 0 : index
    %156 = vector.load %arg18[%c0_85, %c0_86] : memref<8x128xf32, #tpu.memory_space<vmem>>, vector<8x128xf32>
    %157 = arith.mulf %155, %156 : vector<8x128xf32>
    %c0_87 = arith.constant 0 : index
    %c0_88 = arith.constant 0 : index
    %158 = vector.load %arg19[%c0_87, %c0_88] : memref<2x8xf32, #tpu.memory_space<vmem>>, vector<2x8xf32>
    %cst_89 = arith.constant dense<0.000000e+00> : vector<2x128xf32>
    %159 = tpu.matmul %158, %157, %cst_89 {dimension_numbers = #tpu.dot_dimension_numbers<[1], [0], [0], [1], [0, 0, 1, 1], [], []>} : vector<2x8xf32>, vector<8x128xf32>, vector<2x128xf32> -> vector<2x128xf32>
    %cst_90 = arith.constant dense<0.000000e+00> : vector<2xf32>
    %160 = vector.multi_reduction <add>, %159, %cst_90 [1] : vector<2x128xf32> to vector<2xf32>
    %161 = vector.shape_cast %160 : vector<2xf32> to vector<2x1xf32>
    %c0_91 = arith.constant 0 : index
    %c0_92 = arith.constant 0 : index
    %162 = vector.load %arg20[%c0_91, %c0_92] : memref<1x1xf32, #tpu.memory_space<vmem>>, vector<1x1xf32>
    %163 = arith.mulf %150, %162 : vector<1x1xf32>
    %164 = vector.broadcast %163 : vector<1x1xf32> to vector<2x1xf32>
    %165 = arith.addf %161, %164 : vector<2x1xf32>
    %166 = arith.negf %165 : vector<2x1xf32>
    %167 = math.exp %166 : vector<2x1xf32>
    %cst_93 = arith.constant 1.000000e+00 : f32
    %168 = vector.broadcast %cst_93 : f32 to vector<2x1xf32>
    %169 = arith.addf %168, %167 : vector<2x1xf32>
    %170 = arith.divf %168, %169 : vector<2x1xf32>
    %c0_94 = arith.constant 0 : index
    %c0_95 = arith.constant 0 : index
    %171 = vector.load %arg21[%c0_94, %c0_95] : memref<2x1xf32, #tpu.memory_space<vmem>>, vector<2x1xf32>
    tpu.vector_store %arg21[%c0_94, %c0_95], %170 {strides = array<i32>} : memref<2x1xf32, #tpu.memory_space<vmem>>, vector<2x1xf32>,
    return
  }
}

</mosaic_0001>

<llo_original>
// kernel: discriminator_forward.1
$region0: #{discriminator_forward.1}
  #allocation0 [shape = 'u32[]', space=smem, size = 0x4, offset = 0x4, fixed_abs, tag = 'smem constant byte address 0x4 - core index']
  #allocation1 [shape = 'u32[144,128]{1,0:T(1,128)}', space=vmem, size = 0x12000, scoped, tag = 'internal scratch']
  #allocation2 [shape = 'f32[1,1]{1,0:T(1,128)S(1)}', space=vmem, size = 0x200, scoped, tag = 'scoped memory for discriminator_forward.1']
  %s0 = inlined_call_operand.vmem [shape: f32[128,192], index: 0, kind: input, shape index: {}]
  %s1 = inlined_call_operand.vmem [shape: f32[192,128], index: 1, kind: input, shape index: {}]
  %s2 = inlined_call_operand.vmem [shape: f32[576,128], index: 2, kind: input, shape index: {}]
  %s3 = inlined_call_operand.vmem [shape: f32[96,64], index: 3, kind: input, shape index: {}]
  %s4 = inlined_call_operand.vmem [shape: f32[384,128], index: 4, kind: input, shape index: {}]
  %s5 = inlined_call_operand.vmem [shape: f32[1,8], index: 5, kind: input, shape index: {}]
  %s6 = inlined_call_operand.vmem [shape: f32[1,8], index: 6, kind: input, shape index: {}]
  %s7 = inlined_call_operand.vmem [shape: f32[128,8], index: 7, kind: input, shape index: {}]
  %s8 = inlined_call_operand.vmem [shape: f32[8,128], index: 8, kind: input, shape index: {}]
  %s9 = inlined_call_operand.vmem [shape: f32[48,32], index: 9, kind: input, shape index: {}]
  %s10 = inlined_call_operand.vmem [shape: f32[384,128], index: 10, kind: input, shape index: {}]
  %s11 = inlined_call_operand.vmem [shape: f32[1,16], index: 11, kind: input, shape index: {}]
  %s12 = inlined_call_operand.vmem [shape: f32[1,16], index: 12, kind: input, shape index: {}]
  %s13 = inlined_call_operand.vmem [shape: f32[128,16], index: 13, kind: input, shape index: {}]
  %s14 = inlined_call_operand.vmem [shape: f32[16,128], index: 14, kind: input, shape index: {}]
  %s15 = inlined_call_operand.vmem [shape: f32[24,16], index: 15, kind: input, shape index: {}]
  %s16 = inlined_call_operand.vmem [shape: f32[384,128], index: 16, kind: input, shape index: {}]
  %s17 = inlined_call_operand.vmem [shape: f32[4,8], index: 17, kind: input, shape index: {}]
  %s18 = inlined_call_operand.vmem [shape: f32[8,128], index: 18, kind: input, shape index: {}]
  %s19 = inlined_call_operand.vmem [shape: f32[2,8], index: 19, kind: input, shape index: {}]
  %s20 = inlined_call_operand.<no memory space> [shape: f32[1,1], index: 20, kind: input, shape index: {}]
  %s21 = inlined_call_operand.vmem [shape: f32[2,1], index: 21, kind: output, shape index: {}]
  %s22 = sld [smem:[#allocation0]]
  $region94: #{discriminator_forward.1} parent=0
    _
  %s24 = ssub.s32 1, %s22
  %s25 = scalar_select 0, %s24, %s22
  %v26 = vstv %s20
  %27 = vst [vmem:[#allocation2] sm:$0x1] %v26
  // Predicated region
  $region2: #{discriminator_forward.1} parent=0 // pred_check
    _
  $region3: #{discriminator_forward.1} parent=0 // pred_check_branch
    %29 = sbr.rel (0) target = $region5
  $region4: #{discriminator_forward.1} parent=0 // pred_region
    _
  $region5: #{discriminator_forward.1} parent=0 // pred_fallthru
    _
  // Predicated region
  $region6: #{discriminator_forward.1} parent=0 // pred_check
    _
  $region7: #{discriminator_forward.1} parent=0 // pred_check_branch
    %31 = sbr.rel (0) target = $region9
  $region8: #{discriminator_forward.1} parent=0 // pred_region
    _
  $region9: #{discriminator_forward.1} parent=0 // pred_fallthru
    _
  // Predicated region
  $region10: #{discriminator_forward.1} parent=0 // pred_check
    _
  $region11: #{discriminator_forward.1} parent=0 // pred_check_branch
    %33 = sbr.rel (0) target = $region13
  $region12: #{discriminator_forward.1} parent=0 // pred_region
    _
  $region13: #{discriminator_forward.1} parent=0 // pred_fallthru
    _
  // Predicated region
  $region14: #{discriminator_forward.1} parent=0 // pred_check
    _
  $region15: #{discriminator_forward.1} parent=0 // pred_check_branch
    %35 = sbr.rel (0) target = $region17
  $region16: #{discriminator_forward.1} parent=0 // pred_region
    _
  $region17: #{discriminator_forward.1} parent=0 // pred_fallthru
    _
  // Predicated region
  $region18: #{discriminator_forward.1} parent=0 // pred_check
    _
  $region19: #{discriminator_forward.1} parent=0 // pred_check_branch
    %37 = sbr.rel (0) target = $region21
  $region20: #{discriminator_forward.1} parent=0 // pred_region
    _
  $region21: #{discriminator_forward.1} parent=0 // pred_fallthru
    _
  // Predicated region
  $region22: #{discriminator_forward.1} parent=0 // pred_check
    _
  $region23: #{discriminator_forward.1} parent=0 // pred_check_branch
    %39 = sbr.rel (0) target = $region25
  $region24: #{discriminator_forward.1} parent=0 // pred_region
    _
  $region25: #{discriminator_forward.1} parent=0 // pred_fallthru
    _
  // Predicated region
  $region26: #{discriminator_forward.1} parent=0 // pred_check
    _
  $region27: #{discriminator_forward.1} parent=0 // pred_check_branch
    %41 = sbr.rel (0) target = $region29
  $region28: #{discriminator_forward.1} parent=0 // pred_region
    _
  $region29: #{discriminator_forward.1} parent=0 // pred_fallthru
    _
  // Predicated region
  $region30: #{discriminator_forward.1} parent=0 // pred_check
    _
  $region31: #{discriminator_forward.1} parent=0 // pred_check_branch
    %43 = sbr.rel (0) target = $region33
  $region32: #{discriminator_forward.1} parent=0 // pred_region
    _
  $region33: #{discriminator_forward.1} parent=0 // pred_fallthru
    _
  // Predicated region
  $region34: #{discriminator_forward.1} parent=0 // pred_check
    _
  $region35: #{discriminator_forward.1} parent=0 // pred_check_branch
    %45 = sbr.rel (0) target = $region37
  $region36: #{discriminator_forward.1} parent=0 // pred_region
    _
  $region37: #{discriminator_forward.1} parent=0 // pred_fallthru
    _
  // Predicated region
  $region38: #{discriminator_forward.1} parent=0 // pred_check
    _
  $region39: #{discriminator_forward.1} parent=0 // pred_check_branch
    %47 = sbr.rel (0) target = $region41
  $region40: #{discriminator_forward.1} parent=0 // pred_region
    _
  $region41: #{discriminator_forward.1} parent=0 // pred_fallthru
    _
  // Predicated region
  $region42: #{discriminator_forward.1} parent=0 // pred_check
    _
  $region43: #{discriminator_forward.1} parent=0 // pred_check_branch
    %49 = sbr.rel (0) target = $region45
  $region44: #{discriminator_forward.1} parent=0 // pred_region
    _
  $region45: #{discriminator_forward.1} parent=0 // pred_fallthru
    _
  // Predicated region
  $region46: #{discriminator_forward.1} parent=0 // pred_check
    _
  $region47: #{discriminator_forward.1} parent=0 // pred_check_branch
    %51 = sbr.rel (0) target = $region49
  $region48: #{discriminator_forward.1} parent=0 // pred_region
    _
  $region49: #{discriminator_forward.1} parent=0 // pred_fallthru
    _
  // Predicated region
  $region50: #{discriminator_forward.1} parent=0 // pred_check
    _
  $region51: #{discriminator_forward.1} parent=0 // pred_check_branch
    %53 = sbr.rel (0) target = $region53
  $region52: #{discriminator_forward.1} parent=0 // pred_region
    _
  $region53: #{discriminator_forward.1} parent=0 // pred_fallthru
    _
  // Predicated region
  $region54: #{discriminator_forward.1} parent=0 // pred_check
    _
  $region55: #{discriminator_forward.1} parent=0 // pred_check_branch
    %55 = sbr.rel (0) target = $region57
  $region56: #{discriminator_forward.1} parent=0 // pred_region
    _
  $region57: #{discriminator_forward.1} parent=0 // pred_fallthru
    _
  // Predicated region
  $region58: #{discriminator_forward.1} parent=0 // pred_check
    _
  $region59: #{discriminator_forward.1} parent=0 // pred_check_branch
    %57 = sbr.rel (0) target = $region61
  $region60: #{discriminator_forward.1} parent=0 // pred_region
    _
  $region61: #{discriminator_forward.1} parent=0 // pred_fallthru
    _
  // Predicated region
  $region62: #{discriminator_forward.1} parent=0 // pred_check
    _
  $region63: #{discriminator_forward.1} parent=0 // pred_check_branch
    %59 = sbr.rel (0) target = $region65
  $region64: #{discriminator_forward.1} parent=0 // pred_region
    _
  $region65: #{discriminator_forward.1} parent=0 // pred_fallthru
    _
  // Predicated region
  $region66: #{discriminator_forward.1} parent=0 // pred_check
    _
  $region67: #{discriminator_forward.1} parent=0 // pred_check_branch
    %61 = sbr.rel (0) target = $region69
  $region68: #{discriminator_forward.1} parent=0 // pred_region
    _
  $region69: #{discriminator_forward.1} parent=0 // pred_fallthru
    _
  // Predicated region
  $region70: #{discriminator_forward.1} parent=0 // pred_check
    _
  $region71: #{discriminator_forward.1} parent=0 // pred_check_branch
    %63 = sbr.rel (0) target = $region73
  $region72: #{discriminator_forward.1} parent=0 // pred_region
    _
  $region73: #{discriminator_forward.1} parent=0 // pred_fallthru
    _
  // Predicated region
  $region74: #{discriminator_forward.1} parent=0 // pred_check
    _
  $region75: #{discriminator_forward.1} parent=0 // pred_check_branch
    %65 = sbr.rel (0) target = $region77
  $region76: #{discriminator_forward.1} parent=0 // pred_region
    _
  $region77: #{discriminator_forward.1} parent=0 // pred_fallthru
    _
  // Predicated region
  $region78: #{discriminator_forward.1} parent=0 // pred_check
    _
  $region79: #{discriminator_forward.1} parent=0 // pred_check_branch
    %67 = sbr.rel (0) target = $region81
  $region80: #{discriminator_forward.1} parent=0 // pred_region
    _
  $region81: #{discriminator_forward.1} parent=0 // pred_fallthru
    _
  // Predicated region
  $region82: #{discriminator_forward.1} parent=0 // pred_check
    _
  $region83: #{discriminator_forward.1} parent=0 // pred_check_branch
    %69 = sbr.rel (0) target = $region85
  $region84: #{discriminator_forward.1} parent=0 // pred_region
    _
  $region85: #{discriminator_forward.1} parent=0 // pred_fallthru
    _
  %v70 = vld [vmem:[%s0] sm:$0xff]
  %v71 = vld [vmem:[%s0 + $0x8] sm:$0xff]
  %v72 = vld [vmem:[%s0 + $0x10] sm:$0xff]
  %v73 = vld [vmem:[%s0 + $0x18] sm:$0xff]
  %v74 = vld [vmem:[%s0 + $0x20] sm:$0xff]
  %v75 = vld [vmem:[%s0 + $0x28] sm:$0xff]
  %v76 = vld [vmem:[%s0 + $0x30] sm:$0xff]
  %v77 = vld [vmem:[%s0 + $0x38] sm:$0xff]
  %v78 = vld [vmem:[%s0 + $0x40] sm:$0xff]
  %v79 = vld [vmem:[%s0 + $0x48] sm:$0xff]
  %v80 = vld [vmem:[%s0 + $0x50] sm:$0xff]
  %v81 = vld [vmem:[%s0 + $0x58] sm:$0xff]
  %v82 = vld [vmem:[%s0 + $0x60] sm:$0xff]
  %v83 = vld [vmem:[%s0 + $0x68] sm:$0xff]
  %v84 = vld [vmem:[%s0 + $0x70] sm:$0xff]
  %v85 = vld [vmem:[%s0 + $0x78] sm:$0xff]
  %v86 = vld [vmem:[%s0 + $0x80] sm:$0xff]
  %v87 = vld [vmem:[%s0 + $0x88] sm:$0xff]
  %v88 = vld [vmem:[%s0 + $0x90] sm:$0xff]
  %v89 = vld [vmem:[%s0 + $0x98] sm:$0xff]
  %v90 = vld [vmem:[%s0 + $0xa0] sm:$0xff]
  %v91 = vld [vmem:[%s0 + $0xa8] sm:$0xff]
  %v92 = vld [vmem:[%s0 + $0xb0] sm:$0xff]
  %v93 = vld [vmem:[%s0 + $0xb8] sm:$0xff]
  %v94 = vld [vmem:[%s0 + $0xc0] sm:$0xff]
  %v95 = vld [vmem:[%s0 + $0xc8] sm:$0xff]
  %v96 = vld [vmem:[%s0 + $0xd0] sm:$0xff]
  %v97 = vld [vmem:[%s0 + $0xd8] sm:$0xff]
  %v98 = vld [vmem:[%s0 + $0xe0] sm:$0xff]
  %v99 = vld [vmem:[%s0 + $0xe8] sm:$0xff]
  %v100 = vld [vmem:[%s0 + $0xf0] sm:$0xff]
  %v101 = vld [vmem:[%s0 + $0xf8] sm:$0xff]
  %v102 = vld [vmem:[%s1] sm:$0xff]
  %v103 = vld [vmem:[%s1 + $0x8] sm:$0xff]
  %v104 = vld [vmem:[%s1 + $0x10] sm:$0xff]
  %v105 = vld [vmem:[%s1 + $0x18] sm:$0xff]
  %v106 = vld [vmem:[%s1 + $0x20] sm:$0xff]
  %v107 = vld [vmem:[%s1 + $0x28] sm:$0xff]
  %v108 = vld [vmem:[%s1 + $0x30] sm:$0xff]
  %v109 = vld [vmem:[%s1 + $0x38] sm:$0xff]
  %v110 = vld [vmem:[%s1 + $0x40] sm:$0xff]
  %v111 = vld [vmem:[%s1 + $0x48] sm:$0xff]
  %v112 = vld [vmem:[%s1 + $0x50] sm:$0xff]
  %v113 = vld [vmem:[%s1 + $0x58] sm:$0xff]
  %v114 = vld [vmem:[%s1 + $0x60] sm:$0xff]
  %v115 = vld [vmem:[%s1 + $0x68] sm:$0xff]
  %v116 = vld [vmem:[%s1 + $0x70] sm:$0xff]
  %v117 = vld [vmem:[%s1 + $0x78] sm:$0xff]
  %v118 = vld [vmem:[%s1 + $0x80] sm:$0xff]
  %v119 = vld [vmem:[%s1 + $0x88] sm:$0xff]
  %v120 = vld [vmem:[%s1 + $0x90] sm:$0xff]
  %v121 = vld [vmem:[%s1 + $0x98] sm:$0xff]
  %v122 = vld [vmem:[%s1 + $0xa0] sm:$0xff]
  %v123 = vld [vmem:[%s1 + $0xa8] sm:$0xff]
  %v124 = vld [vmem:[%s1 + $0xb0] sm:$0xff]
  %v125 = vld [vmem:[%s1 + $0xb8] sm:$0xff]
  %v126 = vld [vmem:[%s2] sm:$0xff]
  %v127 = vld [vmem:[%s2 + $0x8] sm:$0xff]
  %v128 = vld [vmem:[%s2 + $0x10] sm:$0xff]
  %v129 = vld [vmem:[%s2 + $0x18] sm:$0xff]
  %v130 = vld [vmem:[%s2 + $0x20] sm:$0xff]
  %v131 = vld [vmem:[%s2 + $0x28] sm:$0xff]
  %v132 = vld [vmem:[%s2 + $0x30] sm:$0xff]
  %v133 = vld [vmem:[%s2 + $0x38] sm:$0xff]
  %v134 = vld [vmem:[%s2 + $0x40] sm:$0xff]
  %v135 = vld [vmem:[%s2 + $0x48] sm:$0xff]
  %v136 = vld [vmem:[%s2 + $0x50] sm:$0xff]
  %v137 = vld [vmem:[%s2 + $0x58] sm:$0xff]
  %v138 = vld [vmem:[%s2 + $0x60] sm:$0xff]
  %v139 = vld [vmem:[%s2 + $0x68] sm:$0xff]
  %v140 = vld [vmem:[%s2 + $0x70] sm:$0xff]
  %v141 = vld [vmem:[%s2 + $0x78] sm:$0xff]
  %v142 = vld [vmem:[%s2 + $0x80] sm:$0xff]
  %v143 = vld [vmem:[%s2 + $0x88] sm:$0xff]
  %v144 = vld [vmem:[%s2 + $0x90] sm:$0xff]
  %v145 = vld [vmem:[%s2 + $0x98] sm:$0xff]
  %v146 = vld [vmem:[%s2 + $0xa0] sm:$0xff]
  %v147 = vld [vmem:[%s2 + $0xa8] sm:$0xff]
  %v148 = vld [vmem:[%s2 + $0xb0] sm:$0xff]
  %v149 = vld [vmem:[%s2 + $0xb8] sm:$0xff]
  %v150 = vld [vmem:[%s2 + $0xc0] sm:$0xff]
  %v151 = vld [vmem:[%s2 + $0xc8] sm:$0xff]
  %v152 = vld [vmem:[%s2 + $0xd0] sm:$0xff]
  %v153 = vld [vmem:[%s2 + $0xd8] sm:$0xff]
  %v154 = vld [vmem:[%s2 + $0xe0] sm:$0xff]
  %v155 = vld [vmem:[%s2 + $0xe8] sm:$0xff]
  %v156 = vld [vmem:[%s2 + $0xf0] sm:$0xff]
  %v157 = vld [vmem:[%s2 + $0xf8] sm:$0xff]
  %v158 = vld [vmem:[%s2 + $0x100] sm:$0xff]
  %v159 = vld [vmem:[%s2 + $0x108] sm:$0xff]
  %v160 = vld [vmem:[%s2 + $0x110] sm:$0xff]
  %v161 = vld [vmem:[%s2 + $0x118] sm:$0xff]
  %v162 = vld [vmem:[%s2 + $0x120] sm:$0xff]
  %v163 = vld [vmem:[%s2 + $0x128] sm:$0xff]
  %v164 = vld [vmem:[%s2 + $0x130] sm:$0xff]
  %v165 = vld [vmem:[%s2 + $0x138] sm:$0xff]
  %v166 = vld [vmem:[%s2 + $0x140] sm:$0xff]
  %v167 = vld [vmem:[%s2 + $0x148] sm:$0xff]
  %v168 = vld [vmem:[%s2 + $0x150] sm:$0xff]
  %v169 = vld [vmem:[%s2 + $0x158] sm:$0xff]
  %v170 = vld [vmem:[%s2 + $0x160] sm:$0xff]
  %v171 = vld [vmem:[%s2 + $0x168] sm:$0xff]
  %v172 = vld [vmem:[%s2 + $0x170] sm:$0xff]
  %v173 = vld [vmem:[%s2 + $0x178] sm:$0xff]
  %v174 = vld [vmem:[%s2 + $0x180] sm:$0xff]
  %v175 = vld [vmem:[%s2 + $0x188] sm:$0xff]
  %v176 = vld [vmem:[%s2 + $0x190] sm:$0xff]
  %v177 = vld [vmem:[%s2 + $0x198] sm:$0xff]
  %v178 = vld [vmem:[%s2 + $0x1a0] sm:$0xff]
  %v179 = vld [vmem:[%s2 + $0x1a8] sm:$0xff]
  %v180 = vld [vmem:[%s2 + $0x1b0] sm:$0xff]
  %v181 = vld [vmem:[%s2 + $0x1b8] sm:$0xff]
  %v182 = vld [vmem:[%s2 + $0x1c0] sm:$0xff]
  %v183 = vld [vmem:[%s2 + $0x1c8] sm:$0xff]
  %v184 = vld [vmem:[%s2 + $0x1d0] sm:$0xff]
  %v185 = vld [vmem:[%s2 + $0x1d8] sm:$0xff]
  %v186 = vld [vmem:[%s2 + $0x1e0] sm:$0xff]
  %v187 = vld [vmem:[%s2 + $0x1e8] sm:$0xff]
  %v188 = vld [vmem:[%s2 + $0x1f0] sm:$0xff]
  %v189 = vld [vmem:[%s2 + $0x1f8] sm:$0xff]
  %v190 = vld [vmem:[%s2 + $0x200] sm:$0xff]
  %v191 = vld [vmem:[%s2 + $0x208] sm:$0xff]
  %v192 = vld [vmem:[%s2 + $0x210] sm:$0xff]
  %v193 = vld [vmem:[%s2 + $0x218] sm:$0xff]
  %v194 = vld [vmem:[%s2 + $0x220] sm:$0xff]
  %v195 = vld [vmem:[%s2 + $0x228] sm:$0xff]
  %v196 = vld [vmem:[%s2 + $0x230] sm:$0xff]
  %v197 = vld [vmem:[%s2 + $0x238] sm:$0xff]
  %198 = vmatprep.subr.mxu0 %v101
  %199 = vmatpush1.msra.mxu0 %v100
  %200 = vmatprep.subr.mxu0 %v99
  %201 = vmatpush1.msra.mxu0 %v98
  %202 = vmatprep.subr.mxu0 %v97
  %203 = vmatpush1.msra.mxu0 %v96
  %204 = vmatprep.subr.mxu0 %v95
  %205 = vmatpush1.msra.mxu0 %v94
  %206 = vmatprep.subr.mxu0 %v93
  %207 = vmatpush1.msra.mxu0 %v92
  %208 = vmatprep.subr.mxu0 %v91
  %209 = vmatpush1.msra.mxu0 %v90
  %210 = vmatprep.subr.mxu0 %v89
  %211 = vmatpush1.msra.mxu0 %v88
  %212 = vmatprep.subr.mxu0 %v87
  %213 = vmatpush1.msra.mxu0 %v86
  %214 = vmatprep.subr.mxu0 %v85
  %215 = vmatpush1.msra.mxu0 %v84
  %216 = vmatprep.subr.mxu0 %v83
  %217 = vmatpush1.msra.mxu0 %v82
  %218 = vmatprep.subr.mxu0 %v81
  %219 = vmatpush1.msra.mxu0 %v80
  %220 = vmatprep.subr.mxu0 %v79
  %221 = vmatpush1.msra.mxu0 %v78
  %222 = vmatprep.subr.mxu0 %v77
  %223 = vmatpush1.msra.mxu0 %v76
  %224 = vmatprep.subr.mxu0 %v75
  %225 = vmatpush1.msra.mxu0 %v74
  %226 = vmatprep.subr.mxu0 %v73
  %227 = vmatpush1.msra.mxu0 %v72
  %228 = vmatprep.subr.mxu0 %v71
  %229 = vmatpush1.msra.mxu0 %v70
  %230 = vmatprep.subr.mxu0 0.0
  %231 = vmatpush2.msra.mxu0 0.0
  %232 = vmatprep.subr.mxu0 0.0
  %233 = vmatpush2.msra.mxu0 0.0
  %234 = vmatprep.subr.mxu0 0.0
  %235 = vmatpush2.msra.mxu0 0.0
  %236 = vmatprep.subr.mxu0 0.0
  %237 = vmatpush2.msra.mxu0 0.0
  %238 = vmatprep.subr.mxu0 0.0
  %239 = vmatpush2.msra.mxu0 0.0
  %240 = vmatprep.subr.mxu0 0.0
  %241 = vmatpush2.msra.mxu0 0.0
  %242 = vmatprep.subr.mxu0 0.0
  %243 = vmatpush2.msra.mxu0 0.0
  %244 = vmatprep.subr.mxu0 0.0
  %245 = vmatpush2.msra.mxu0 0.0
  %246 = vmatprep.subr.mxu0 0.0
  %247 = vmatpush2.msra.mxu0 0.0
  %248 = vmatprep.subr.mxu0 0.0
  %249 = vmatpush2.msra.mxu0 0.0
  %250 = vmatprep.subr.mxu0 0.0
  %251 = vmatpush2.msra.mxu0 0.0
  %252 = vmatprep.subr.mxu0 0.0
  %253 = vmatpush2.msra.mxu0 0.0
  %254 = vmatprep.subr.mxu0 0.0
  %255 = vmatpush2.msra.mxu0 0.0
  %256 = vmatprep.subr.mxu0 0.0
  %257 = vmatpush2.msra.mxu0 0.0
  %258 = vmatprep.subr.mxu0 0.0
  %259 = vmatpush2.msra.mxu0 0.0
  %260 = vmatprep.subr.mxu0 0.0
  %261 = vmatpush2.msra.mxu0 0.0
  %262 = vmatprep.mubr.f32.mxu0 0.0
  %263 = vmatmul.mubr.f32.gmra.mxu0 %v102
  %v264 = vpop.f32.mrf.mxu0
  %v265 = vadd.f32 0.0, %v264
  %v266 = vpop.f32.mrf.mxu0
  %v267 = vadd.f32 0.0, %v266
  %268 = vmatprep.mubr.f32.mxu0 0.0
  %269 = vmatmul.mubr.f32.gmra.mxu0 %v103
  %v270 = vpop.f32.mrf.mxu0
  %v271 = vadd.f32 0.0, %v270
  %v272 = vpop.f32.mrf.mxu0
  %v273 = vadd.f32 0.0, %v272
  %274 = vmatprep.mubr.f32.mxu0 0.0
  %275 = vmatmul.mubr.f32.gmra.mxu0 %v104
  %v276 = vpop.f32.mrf.mxu0
  %v277 = vadd.f32 0.0, %v276
  %v278 = vpop.f32.mrf.mxu0
  %v279 = vadd.f32 0.0, %v278
  %280 = vmatprep.mubr.f32.mxu0 0.0
  %281 = vmatmul.mubr.f32.gmra.mxu0 %v105
  %v282 = vpop.f32.mrf.mxu0
  %v283 = vadd.f32 0.0, %v282
  %v284 = vpop.f32.mrf.mxu0
  %v285 = vadd.f32 0.0, %v284
  %286 = vmatprep.mubr.f32.mxu0 0.0
  %287 = vmatmul.mubr.f32.gmra.mxu0 %v106
  %v288 = vpop.f32.mrf.mxu0
  %v289 = vadd.f32 0.0, %v288
  %v290 = vpop.f32.mrf.mxu0
  %v291 = vadd.f32 0.0, %v290
  %292 = vmatprep.mubr.f32.mxu0 0.0
  %293 = vmatmul.mubr.f32.gmra.mxu0 %v107
  %v294 = vpop.f32.mrf.mxu0
  %v295 = vadd.f32 0.0, %v294
  %v296 = vpop.f32.mrf.mxu0
  %v297 = vadd.f32 0.0, %v296
  %298 = vmatprep.mubr.f32.mxu0 0.0
  %299 = vmatmul.mubr.f32.gmra.mxu0 %v108
  %v300 = vpop.f32.mrf.mxu0
  %v301 = vadd.f32 0.0, %v300
  %v302 = vpop.f32.mrf.mxu0
  %v303 = vadd.f32 0.0, %v302
  %304 = vmatprep.mubr.f32.mxu0 0.0
  %305 = vmatmul.mubr.f32.gmra.mxu0 %v109
  %v306 = vpop.f32.mrf.mxu0
  %v307 = vadd.f32 0.0, %v306
  %v308 = vpop.f32.mrf.mxu0
  %v309 = vadd.f32 0.0, %v308
  %310 = vmatprep.mubr.f32.mxu0 0.0
  %311 = vmatmul.mubr.f32.gmra.mxu0 %v110
  %v312 = vpop.f32.mrf.mxu0
  %v313 = vadd.f32 0.0, %v312
  %v314 = vpop.f32.mrf.mxu0
  %v315 = vadd.f32 0.0, %v314
  %316 = vmatprep.mubr.f32.mxu0 0.0
  %317 = vmatmul.mubr.f32.gmra.mxu0 %v111
  %v318 = vpop.f32.mrf.mxu0
  %v319 = vadd.f32 0.0, %v318
  %v320 = vpop.f32.mrf.mxu0
  %v321 = vadd.f32 0.0, %v320
  %322 = vmatprep.mubr.f32.mxu0 0.0
  %323 = vmatmul.mubr.f32.gmra.mxu0 %v112
  %v324 = vpop.f32.mrf.mxu0
  %v325 = vadd.f32 0.0, %v324
  %v326 = vpop.f32.mrf.mxu0
  %v327 = vadd.f32 0.0, %v326
  %328 = vmatprep.mubr.f32.mxu0 0.0
  %329 = vmatmul.mubr.f32.gmra.mxu0 %v113
  %v330 = vpop.f32.mrf.mxu0
  %v331 = vadd.f32 0.0, %v330
  %v332 = vpop.f32.mrf.mxu0
  %v333 = vadd.f32 0.0, %v332
  %334 = vmatprep.mubr.f32.mxu0 0.0
  %335 = vmatmul.mubr.f32.gmra.mxu0 %v114
  %v336 = vpop.f32.mrf.mxu0
  %v337 = vadd.f32 0.0, %v336
  %v338 = vpop.f32.mrf.mxu0
  %v339 = vadd.f32 0.0, %v338
  %340 = vmatprep.mubr.f32.mxu0 0.0
  %341 = vmatmul.mubr.f32.gmra.mxu0 %v115
  %v342 = vpop.f32.mrf.mxu0
  %v343 = vadd.f32 0.0, %v342
  %v344 = vpop.f32.mrf.mxu0
  %v345 = vadd.f32 0.0, %v344
  %346 = vmatprep.mubr.f32.mxu0 0.0
  %347 = vmatmul.mubr.f32.gmra.mxu0 %v116
  %v348 = vpop.f32.mrf.mxu0
  %v349 = vadd.f32 0.0, %v348
  %v350 = vpop.f32.mrf.mxu0
  %v351 = vadd.f32 0.0, %v350
  %352 = vmatprep.mubr.f32.mxu0 0.0
  %353 = vmatmul.mubr.f32.gmra.mxu0 %v117
  %v354 = vpop.f32.mrf.mxu0
  %v355 = vadd.f32 0.0, %v354
  %v356 = vpop.f32.mrf.mxu0
  %v357 = vadd.f32 0.0, %v356
  %358 = vmatprep.mubr.f32.mxu0 0.0
  %359 = vmatmul.mubr.f32.gmra.mxu0 %v118
  %v360 = vpop.f32.mrf.mxu0
  %v361 = vadd.f32 0.0, %v360
  %v362 = vpop.f32.mrf.mxu0
  %v363 = vadd.f32 0.0, %v362
  %364 = vmatprep.mubr.f32.mxu0 0.0
  %365 = vmatmul.mubr.f32.gmra.mxu0 %v119
  %v366 = vpop.f32.mrf.mxu0
  %v367 = vadd.f32 0.0, %v366
  %v368 = vpop.f32.mrf.mxu0
  %v369 = vadd.f32 0.0, %v368
  %370 = vmatprep.mubr.f32.mxu0 0.0
  %371 = vmatmul.mubr.f32.gmra.mxu0 %v120
  %v372 = vpop.f32.mrf.mxu0
  %v373 = vadd.f32 0.0, %v372
  %v374 = vpop.f32.mrf.mxu0
  %v375 = vadd.f32 0.0, %v374
  %376 = vmatprep.mubr.f32.mxu0 0.0
  %377 = vmatmul.mubr.f32.gmra.mxu0 %v121
  %v378 = vpop.f32.mrf.mxu0
  %v379 = vadd.f32 0.0, %v378
  %v380 = vpop.f32.mrf.mxu0
  %v381 = vadd.f32 0.0, %v380
  %382 = vmatprep.mubr.f32.mxu0 0.0
  %383 = vmatmul.mubr.f32.gmra.mxu0 %v122
  %v384 = vpop.f32.mrf.mxu0
  %v385 = vadd.f32 0.0, %v384
  %v386 = vpop.f32.mrf.mxu0
  %v387 = vadd.f32 0.0, %v386
  %388 = vmatprep.mubr.f32.mxu0 0.0
  %389 = vmatmul.mubr.f32.gmra.mxu0 %v123
  %v390 = vpop.f32.mrf.mxu0
  %v391 = vadd.f32 0.0, %v390
  %v392 = vpop.f32.mrf.mxu0
  %v393 = vadd.f32 0.0, %v392
  %394 = vmatprep.mubr.f32.mxu0 0.0
  %395 = vmatmul.mubr.f32.gmra.mxu0 %v124
  %v396 = vpop.f32.mrf.mxu0
  %v397 = vadd.f32 0.0, %v396
  %v398 = vpop.f32.mrf.mxu0
  %v399 = vadd.f32 0.0, %v398
  %400 = vmatprep.mubr.f32.mxu0 0.0
  %401 = vmatmul.mubr.f32.gmra.mxu0 %v125
  %v402 = vpop.f32.mrf.mxu0
  %v403 = vadd.f32 0.0, %v402
  %v404 = vpop.f32.mrf.mxu0
  %v405 = vadd.f32 0.0, %v404
  %406 = vdwg.mxu0
  %vm407 = vcmask 523264
  %v409 = vsel %vm407, %v315, 0
  %v412 = vsel %vm407, %v321, 0
  %v415 = vsel %vm407, %v327, 0
  %v418 = vsel %vm407, %v333, 0
  %v421 = vsel %vm407, %v339, 0
  %v424 = vsel %vm407, %v345, 0
  %v427 = vsel %vm407, %v351, 0
  %v430 = vsel %vm407, %v357, 0
  %432 = vmatprep.subr.mxu0 0.0
  %433 = vmatpush1.msra.mxu0 %v165
  %434 = vmatprep.subr.mxu0 0.0
  %435 = vmatpush1.msra.mxu0 %v164
  %436 = vmatprep.subr.mxu0 0.0
  %437 = vmatpush1.msra.mxu0 %v163
  %438 = vmatprep.subr.mxu0 0.0
  %439 = vmatpush1.msra.mxu0 %v162
  %440 = vmatprep.subr.mxu0 0.0
  %441 = vmatpush1.msra.mxu0 %v161
  %442 = vmatprep.subr.mxu0 0.0
  %443 = vmatpush1.msra.mxu0 %v160
  %444 = vmatprep.subr.mxu0 0.0
  %445 = vmatpush1.msra.mxu0 %v159
  %446 = vmatprep.subr.mxu0 0.0
  %447 = vmatpush1.msra.mxu0 %v158
  %448 = vmatprep.subr.mxu0 0.0
  %449 = vmatpush1.msra.mxu0 %v157
  %450 = vmatprep.subr.mxu0 0.0
  %451 = vmatpush1.msra.mxu0 %v156
  %452 = vmatprep.subr.mxu0 0.0
  %453 = vmatpush1.msra.mxu0 %v155
  %454 = vmatprep.subr.mxu0 0.0
  %455 = vmatpush1.msra.mxu0 %v154
  %456 = vmatprep.subr.mxu0 0.0
  %457 = vmatpush1.msra.mxu0 %v153
  %458 = vmatprep.subr.mxu0 0.0
  %459 = vmatpush1.msra.mxu0 %v152
  %460 = vmatprep.subr.mxu0 0.0
  %461 = vmatpush1.msra.mxu0 %v151
  %462 = vmatprep.subr.mxu0 0.0
  %463 = vmatpush1.msra.mxu0 %v150
  %464 = vmatprep.subr.mxu0 0.0
  %465 = vmatpush2.msra.mxu0 0.0
  %466 = vmatprep.subr.mxu0 0.0
  %467 = vmatpush2.msra.mxu0 0.0
  %468 = vmatprep.subr.mxu0 0.0
  %469 = vmatpush2.msra.mxu0 0.0
  %470 = vmatprep.subr.mxu0 0.0
  %471 = vmatpush2.msra.mxu0 0.0
  %472 = vmatprep.subr.mxu0 0.0
  %473 = vmatpush2.msra.mxu0 0.0
  %474 = vmatprep.subr.mxu0 0.0
  %475 = vmatpush2.msra.mxu0 0.0
  %476 = vmatprep.subr.mxu0 0.0
  %477 = vmatpush2.msra.mxu0 0.0
  %478 = vmatprep.subr.mxu0 0.0
  %479 = vmatpush2.msra.mxu0 0.0
  %480 = vmatprep.subr.mxu0 0.0
  %481 = vmatpush2.msra.mxu0 %v173
  %482 = vmatprep.subr.mxu0 0.0
  %483 = vmatpush2.msra.mxu0 %v172
  %484 = vmatprep.subr.mxu0 0.0
  %485 = vmatpush2.msra.mxu0 %v171
  %486 = vmatprep.subr.mxu0 0.0
  %487 = vmatpush2.msra.mxu0 %v170
  %488 = vmatprep.subr.mxu0 0.0
  %489 = vmatpush2.msra.mxu0 %v169
  %490 = vmatprep.subr.mxu0 0.0
  %491 = vmatpush2.msra.mxu0 %v168
  %492 = vmatprep.subr.mxu0 0.0
  %493 = vmatpush2.msra.mxu0 %v167
  %494 = vmatprep.subr.mxu0 0.0
  %495 = vmatpush2.msra.mxu0 %v166
  %496 = vmatprep.mubr.f32.mxu0 %v409
  %497 = vmatmul.mubr.f32.gmra.mxu0 %v313
  %v498 = vpop.f32.mrf.mxu0
  %v499 = vadd.f32 0.0, %v498
  %v500 = vpop.f32.mrf.mxu0
  %501 = vmatprep.mubr.f32.mxu0 %v412
  %502 = vmatmul.mubr.f32.gmra.mxu0 %v319
  %v503 = vpop.f32.mrf.mxu0
  %v504 = vadd.f32 0.0, %v503
  %v505 = vpop.f32.mrf.mxu0
  %506 = vmatprep.mubr.f32.mxu0 %v415
  %507 = vmatmul.mubr.f32.gmra.mxu0 %v325
  %v508 = vpop.f32.mrf.mxu0
  %v509 = vadd.f32 0.0, %v508
  %v510 = vpop.f32.mrf.mxu0
  %511 = vmatprep.mubr.f32.mxu0 %v418
  %512 = vmatmul.mubr.f32.gmra.mxu0 %v331
  %v513 = vpop.f32.mrf.mxu0
  %v514 = vadd.f32 0.0, %v513
  %v515 = vpop.f32.mrf.mxu0
  %516 = vmatprep.mubr.f32.mxu0 %v421
  %517 = vmatmul.mubr.f32.gmra.mxu0 %v337
  %v518 = vpop.f32.mrf.mxu0
  %v519 = vadd.f32 0.0, %v518
  %v520 = vpop.f32.mrf.mxu0
  %521 = vmatprep.mubr.f32.mxu0 %v424
  %522 = vmatmul.mubr.f32.gmra.mxu0 %v343
  %v523 = vpop.f32.mrf.mxu0
  %v524 = vadd.f32 0.0, %v523
  %v525 = vpop.f32.mrf.mxu0
  %526 = vmatprep.mubr.f32.mxu0 %v427
  %527 = vmatmul.mubr.f32.gmra.mxu0 %v349
  %v528 = vpop.f32.mrf.mxu0
  %v529 = vadd.f32 0.0, %v528
  %v530 = vpop.f32.mrf.mxu0
  %531 = vmatprep.mubr.f32.mxu0 %v430
  %532 = vmatmul.mubr.f32.gmra.mxu0 %v355
  %v533 = vpop.f32.mrf.mxu0
  %v534 = vadd.f32 0.0, %v533
  %v535 = vpop.f32.mrf.mxu0
  %536 = vdwg.mxu0
  %v538 = vsel %vm407, %v267, 0
  %v541 = vsel %vm407, %v273, 0
  %v544 = vsel %vm407, %v279, 0
  %v547 = vsel %vm407, %v285, 0
  %v550 = vsel %vm407, %v291, 0
  %v553 = vsel %vm407, %v297, 0
  %v556 = vsel %vm407, %v303, 0
  %v559 = vsel %vm407, %v309, 0
  %561 = vmatprep.subr.mxu0 0.0
  %562 = vmatpush1.msra.mxu0 %v141
  %563 = vmatprep.subr.mxu0 0.0
  %564 = vmatpush1.msra.mxu0 %v140
  %565 = vmatprep.subr.mxu0 0.0
  %566 = vmatpush1.msra.mxu0 %v139
  %567 = vmatprep.subr.mxu0 0.0
  %568 = vmatpush1.msra.mxu0 %v138
  %569 = vmatprep.subr.mxu0 0.0
  %570 = vmatpush1.msra.mxu0 %v137
  %571 = vmatprep.subr.mxu0 0.0
  %572 = vmatpush1.msra.mxu0 %v136
  %573 = vmatprep.subr.mxu0 0.0
  %574 = vmatpush1.msra.mxu0 %v135
  %575 = vmatprep.subr.mxu0 0.0
  %576 = vmatpush1.msra.mxu0 %v134
  %577 = vmatprep.subr.mxu0 0.0
  %578 = vmatpush1.msra.mxu0 %v133
  %579 = vmatprep.subr.mxu0 0.0
  %580 = vmatpush1.msra.mxu0 %v132
  %581 = vmatprep.subr.mxu0 0.0
  %582 = vmatpush1.msra.mxu0 %v131
  %583 = vmatprep.subr.mxu0 0.0
  %584 = vmatpush1.msra.mxu0 %v130
  %585 = vmatprep.subr.mxu0 0.0
  %586 = vmatpush1.msra.mxu0 %v129
  %587 = vmatprep.subr.mxu0 0.0
  %588 = vmatpush1.msra.mxu0 %v128
  %589 = vmatprep.subr.mxu0 0.0
  %590 = vmatpush1.msra.mxu0 %v127
  %591 = vmatprep.subr.mxu0 0.0
  %592 = vmatpush1.msra.mxu0 %v126
  %593 = vmatprep.subr.mxu0 0.0
  %594 = vmatpush2.msra.mxu0 0.0
  %595 = vmatprep.subr.mxu0 0.0
  %596 = vmatpush2.msra.mxu0 0.0
  %597 = vmatprep.subr.mxu0 0.0
  %598 = vmatpush2.msra.mxu0 0.0
  %599 = vmatprep.subr.mxu0 0.0
  %600 = vmatpush2.msra.mxu0 0.0
  %601 = vmatprep.subr.mxu0 0.0
  %602 = vmatpush2.msra.mxu0 0.0
  %603 = vmatprep.subr.mxu0 0.0
  %604 = vmatpush2.msra.mxu0 0.0
  %605 = vmatprep.subr.mxu0 0.0
  %606 = vmatpush2.msra.mxu0 0.0
  %607 = vmatprep.subr.mxu0 0.0
  %608 = vmatpush2.msra.mxu0 0.0
  %609 = vmatprep.subr.mxu0 0.0
  %610 = vmatpush2.msra.mxu0 %v149
  %611 = vmatprep.subr.mxu0 0.0
  %612 = vmatpush2.msra.mxu0 %v148
  %613 = vmatprep.subr.mxu0 0.0
  %614 = vmatpush2.msra.mxu0 %v147
  %615 = vmatprep.subr.mxu0 0.0
  %616 = vmatpush2.msra.mxu0 %v146
  %617 = vmatprep.subr.mxu0 0.0
  %618 = vmatpush2.msra.mxu0 %v145
  %619 = vmatprep.subr.mxu0 0.0
  %620 = vmatpush2.msra.mxu0 %v144
  %621 = vmatprep.subr.mxu0 0.0
  %622 = vmatpush2.msra.mxu0 %v143
  %623 = vmatprep.subr.mxu0 0.0
  %624 = vmatpush2.msra.mxu0 %v142
  %625 = vmatprep.mubr.f32.mxu0 %v538
  %626 = vmatmul.mubr.f32.gmra.mxu0 %v265
  %v627 = vpop.f32.mrf.mxu0
  %v628 = vadd.f32 %v499, %v627
  %v629 = vpop.f32.mrf.mxu0
  %630 = vmatprep.mubr.f32.mxu0 %v541
  %631 = vmatmul.mubr.f32.gmra.mxu0 %v271
  %v632 = vpop.f32.mrf.mxu0
  %v633 = vadd.f32 %v504, %v632
  %v634 = vpop.f32.mrf.mxu0
  %635 = vmatprep.mubr.f32.mxu0 %v544
  %636 = vmatmul.mubr.f32.gmra.mxu0 %v277
  %v637 = vpop.f32.mrf.mxu0
  %v638 = vadd.f32 %v509, %v637
  %v639 = vpop.f32.mrf.mxu0
  %640 = vmatprep.mubr.f32.mxu0 %v547
  %641 = vmatmul.mubr.f32.gmra.mxu0 %v283
  %v642 = vpop.f32.mrf.mxu0
  %v643 = vadd.f32 %v514, %v642
  %v644 = vpop.f32.mrf.mxu0
  %645 = vmatprep.mubr.f32.mxu0 %v550
  %646 = vmatmul.mubr.f32.gmra.mxu0 %v289
  %v647 = vpop.f32.mrf.mxu0
  %v648 = vadd.f32 %v519, %v647
  %v649 = vpop.f32.mrf.mxu0
  %650 = vmatprep.mubr.f32.mxu0 %v553
  %651 = vmatmul.mubr.f32.gmra.mxu0 %v295
  %v652 = vpop.f32.mrf.mxu0
  %v653 = vadd.f32 %v524, %v652
  %v654 = vpop.f32.mrf.mxu0
  %655 = vmatprep.mubr.f32.mxu0 %v556
  %656 = vmatmul.mubr.f32.gmra.mxu0 %v301
  %v657 = vpop.f32.mrf.mxu0
  %v658 = vadd.f32 %v529, %v657
  %v659 = vpop.f32.mrf.mxu0
  %660 = vmatprep.mubr.f32.mxu0 %v559
  %661 = vmatmul.mubr.f32.gmra.mxu0 %v307
  %v662 = vpop.f32.mrf.mxu0
  %v663 = vadd.f32 %v534, %v662
  %v664 = vpop.f32.mrf.mxu0
  %665 = vdwg.mxu0
  %v667 = vsel %vm407, %v363, 0
  %v670 = vsel %vm407, %v369, 0
  %v673 = vsel %vm407, %v375, 0
  %v676 = vsel %vm407, %v381, 0
  %v679 = vsel %vm407, %v387, 0
  %v682 = vsel %vm407, %v393, 0
  %v685 = vsel %vm407, %v399, 0
  %v688 = vsel %vm407, %v405, 0
  %690 = vmatprep.subr.mxu0 0.0
  %691 = vmatpush1.msra.mxu0 %v189
  %692 = vmatprep.subr.mxu0 0.0
  %693 = vmatpush1.msra.mxu0 %v188
  %694 = vmatprep.subr.mxu0 0.0
  %695 = vmatpush1.msra.mxu0 %v187
  %696 = vmatprep.subr.mxu0 0.0
  %697 = vmatpush1.msra.mxu0 %v186
  %698 = vmatprep.subr.mxu0 0.0
  %699 = vmatpush1.msra.mxu0 %v185
  %700 = vmatprep.subr.mxu0 0.0
  %701 = vmatpush1.msra.mxu0 %v184
  %702 = vmatprep.subr.mxu0 0.0
  %703 = vmatpush1.msra.mxu0 %v183
  %704 = vmatprep.subr.mxu0 0.0
  %705 = vmatpush1.msra.mxu0 %v182
  %706 = vmatprep.subr.mxu0 0.0
  %707 = vmatpush1.msra.mxu0 %v181
  %708 = vmatprep.subr.mxu0 0.0
  %709 = vmatpush1.msra.mxu0 %v180
  %710 = vmatprep.subr.mxu0 0.0
  %711 = vmatpush1.msra.mxu0 %v179
  %712 = vmatprep.subr.mxu0 0.0
  %713 = vmatpush1.msra.mxu0 %v178
  %714 = vmatprep.subr.mxu0 0.0
  %715 = vmatpush1.msra.mxu0 %v177
  %716 = vmatprep.subr.mxu0 0.0
  %717 = vmatpush1.msra.mxu0 %v176
  %718 = vmatprep.subr.mxu0 0.0
  %719 = vmatpush1.msra.mxu0 %v175
  %720 = vmatprep.subr.mxu0 0.0
  %721 = vmatpush1.msra.mxu0 %v174
  %722 = vmatprep.subr.mxu0 0.0
  %723 = vmatpush2.msra.mxu0 0.0
  %724 = vmatprep.subr.mxu0 0.0
  %725 = vmatpush2.msra.mxu0 0.0
  %726 = vmatprep.subr.mxu0 0.0
  %727 = vmatpush2.msra.mxu0 0.0
  %728 = vmatprep.subr.mxu0 0.0
  %729 = vmatpush2.msra.mxu0 0.0
  %730 = vmatprep.subr.mxu0 0.0
  %731 = vmatpush2.msra.mxu0 0.0
  %732 = vmatprep.subr.mxu0 0.0
  %733 = vmatpush2.msra.mxu0 0.0
  %734 = vmatprep.subr.mxu0 0.0
  %735 = vmatpush2.msra.mxu0 0.0
  %736 = vmatprep.subr.mxu0 0.0
  %737 = vmatpush2.msra.mxu0 0.0
  %738 = vmatprep.subr.mxu0 0.0
  %739 = vmatpush2.msra.mxu0 %v197
  %740 = vmatprep.subr.mxu0 0.0
  %741 = vmatpush2.msra.mxu0 %v196
  %742 = vmatprep.subr.mxu0 0.0
  %743 = vmatpush2.msra.mxu0 %v195
  %744 = vmatprep.subr.mxu0 0.0
  %745 = vmatpush2.msra.mxu0 %v194
  %746 = vmatprep.subr.mxu0 0.0
  %747 = vmatpush2.msra.mxu0 %v193
  %748 = vmatprep.subr.mxu0 0.0
  %749 = vmatpush2.msra.mxu0 %v192
  %750 = vmatprep.subr.mxu0 0.0
  %751 = vmatpush2.msra.mxu0 %v191
  %752 = vmatprep.subr.mxu0 0.0
  %753 = vmatpush2.msra.mxu0 %v190
  %754 = vmatprep.mubr.f32.mxu0 %v667
  %755 = vmatmul.mubr.f32.gmra.mxu0 %v361
  %v756 = vpop.f32.mrf.mxu0
  %v757 = vadd.f32 0.0, %v756
  %v758 = vpop.f32.mrf.mxu0
  %759 = vmatprep.mubr.f32.mxu0 %v670
  %760 = vmatmul.mubr.f32.gmra.mxu0 %v367
  %v761 = vpop.f32.mrf.mxu0
  %v762 = vadd.f32 0.0, %v761
  %v763 = vpop.f32.mrf.mxu0
  %764 = vmatprep.mubr.f32.mxu0 %v673
  %765 = vmatmul.mubr.f32.gmra.mxu0 %v373
  %v766 = vpop.f32.mrf.mxu0
  %v767 = vadd.f32 0.0, %v766
  %v768 = vpop.f32.mrf.mxu0
  %769 = vmatprep.mubr.f32.mxu0 %v676
  %770 = vmatmul.mubr.f32.gmra.mxu0 %v379
  %v771 = vpop.f32.mrf.mxu0
  %v772 = vadd.f32 0.0, %v771
  %v773 = vpop.f32.mrf.mxu0
  %774 = vmatprep.mubr.f32.mxu0 %v679
  %775 = vmatmul.mubr.f32.gmra.mxu0 %v385
  %v776 = vpop.f32.mrf.mxu0
  %v777 = vadd.f32 0.0, %v776
  %v778 = vpop.f32.mrf.mxu0
  %779 = vmatprep.mubr.f32.mxu0 %v682
  %780 = vmatmul.mubr.f32.gmra.mxu0 %v391
  %v781 = vpop.f32.mrf.mxu0
  %v782 = vadd.f32 0.0, %v781
  %v783 = vpop.f32.mrf.mxu0
  %784 = vmatprep.mubr.f32.mxu0 %v685
  %785 = vmatmul.mubr.f32.gmra.mxu0 %v397
  %v786 = vpop.f32.mrf.mxu0
  %v787 = vadd.f32 0.0, %v786
  %v788 = vpop.f32.mrf.mxu0
  %789 = vmatprep.mubr.f32.mxu0 %v688
  %790 = vmatmul.mubr.f32.gmra.mxu0 %v403
  %v791 = vpop.f32.mrf.mxu0
  %v792 = vadd.f32 0.0, %v791
  %v793 = vpop.f32.mrf.mxu0
  %794 = vdwg.mxu0
  %v795 = vadd.f32 %v628, %v757
  %v796 = vadd.f32 %v633, %v762
  %v797 = vadd.f32 %v638, %v767
  %v798 = vadd.f32 %v643, %v772
  %v799 = vadd.f32 %v648, %v777
  %v800 = vadd.f32 %v653, %v782
  %v801 = vadd.f32 %v658, %v787
  %v802 = vadd.f32 %v663, %v792
  %vm803 = vcmp.gt.f32.partialorder %v795, 0.0
  %vm804 = vcmp.gt.f32.partialorder %v796, 0.0
  %vm805 = vcmp.gt.f32.partialorder %v797, 0.0
  %vm806 = vcmp.gt.f32.partialorder %v798, 0.0
  %vm807 = vcmp.gt.f32.partialorder %v799, 0.0
  %vm808 = vcmp.gt.f32.partialorder %v800, 0.0
  %vm809 = vcmp.gt.f32.partialorder %v801, 0.0
  %vm810 = vcmp.gt.f32.partialorder %v802, 0.0
  %v811 = vmul.f32 %v795, 0.2
  %v812 = vmul.f32 %v796, 0.2
  %v813 = vmul.f32 %v797, 0.2
  %v814 = vmul.f32 %v798, 0.2
  %v815 = vmul.f32 %v799, 0.2
  %v816 = vmul.f32 %v800, 0.2
  %v817 = vmul.f32 %v801, 0.2
  %v818 = vmul.f32 %v802, 0.2
  %v819 = vsel %vm803, %v795, %v811
  %v820 = vsel %vm804, %v796, %v812
  %v821 = vsel %vm805, %v797, %v813
  %v822 = vsel %vm806, %v798, %v814
  %v823 = vsel %vm807, %v799, %v815
  %v824 = vsel %vm808, %v800, %v816
  %v825 = vsel %vm809, %v801, %v817
  %v826 = vsel %vm810, %v802, %v818
  %v827 = vld [vmem:[%s3] sm:$0xff]
  %v828 = vld [vmem:[%s3 + $0x8] sm:$0xff]
  %v829 = vld [vmem:[%s3 + $0x10] sm:$0xff]
  %v830 = vld [vmem:[%s3 + $0x18] sm:$0xff]
  %v831 = vld [vmem:[%s3 + $0x20] sm:$0xff]
  %v832 = vld [vmem:[%s3 + $0x28] sm:$0xff]
  %v833 = vld [vmem:[%s3 + $0x30] sm:$0xff]
  %v834 = vld [vmem:[%s3 + $0x38] sm:$0xff]
  %v835 = vld [vmem:[%s3 + $0x40] sm:$0xff]
  %v836 = vld [vmem:[%s3 + $0x48] sm:$0xff]
  %v837 = vld [vmem:[%s3 + $0x50] sm:$0xff]
  %v838 = vld [vmem:[%s3 + $0x58] sm:$0xff]
  %v839 = vld [vmem:[%s4] sm:$0xff]
  %v840 = vld [vmem:[%s4 + $0x8] sm:$0xff]
  %v841 = vld [vmem:[%s4 + $0x10] sm:$0xff]
  %v842 = vld [vmem:[%s4 + $0x18] sm:$0xff]
  %v843 = vld [vmem:[%s4 + $0x20] sm:$0xff]
  %v844 = vld [vmem:[%s4 + $0x28] sm:$0xff]
  %v845 = vld [vmem:[%s4 + $0x30] sm:$0xff]
  %v846 = vld [vmem:[%s4 + $0x38] sm:$0xff]
  %v847 = vld [vmem:[%s4 + $0x40] sm:$0xff]
  %v848 = vld [vmem:[%s4 + $0x48] sm:$0xff]
  %v849 = vld [vmem:[%s4 + $0x50] sm:$0xff]
  %v850 = vld [vmem:[%s4 + $0x58] sm:$0xff]
  %v851 = vld [vmem:[%s4 + $0x60] sm:$0xff]
  %v852 = vld [vmem:[%s4 + $0x68] sm:$0xff]
  %v853 = vld [vmem:[%s4 + $0x70] sm:$0xff]
  %v854 = vld [vmem:[%s4 + $0x78] sm:$0xff]
  %v855 = vld [vmem:[%s4 + $0x80] sm:$0xff]
  %v856 = vld [vmem:[%s4 + $0x88] sm:$0xff]
  %v857 = vld [vmem:[%s4 + $0x90] sm:$0xff]
  %v858 = vld [vmem:[%s4 + $0x98] sm:$0xff]
  %v859 = vld [vmem:[%s4 + $0xa0] sm:$0xff]
  %v860 = vld [vmem:[%s4 + $0xa8] sm:$0xff]
  %v861 = vld [vmem:[%s4 + $0xb0] sm:$0xff]
  %v862 = vld [vmem:[%s4 + $0xb8] sm:$0xff]
  %v863 = vld [vmem:[%s4 + $0xc0] sm:$0xff]
  %v864 = vld [vmem:[%s4 + $0xc8] sm:$0xff]
  %v865 = vld [vmem:[%s4 + $0xd0] sm:$0xff]
  %v866 = vld [vmem:[%s4 + $0xd8] sm:$0xff]
  %v867 = vld [vmem:[%s4 + $0xe0] sm:$0xff]
  %v868 = vld [vmem:[%s4 + $0xe8] sm:$0xff]
  %v869 = vld [vmem:[%s4 + $0xf0] sm:$0xff]
  %v870 = vld [vmem:[%s4 + $0xf8] sm:$0xff]
  %v871 = vld [vmem:[%s4 + $0x100] sm:$0xff]
  %v872 = vld [vmem:[%s4 + $0x108] sm:$0xff]
  %v873 = vld [vmem:[%s4 + $0x110] sm:$0xff]
  %v874 = vld [vmem:[%s4 + $0x118] sm:$0xff]
  %v875 = vld [vmem:[%s4 + $0x120] sm:$0xff]
  %v876 = vld [vmem:[%s4 + $0x128] sm:$0xff]
  %v877 = vld [vmem:[%s4 + $0x130] sm:$0xff]
  %v878 = vld [vmem:[%s4 + $0x138] sm:$0xff]
  %v879 = vld [vmem:[%s4 + $0x140] sm:$0xff]
  %v880 = vld [vmem:[%s4 + $0x148] sm:$0xff]
  %v881 = vld [vmem:[%s4 + $0x150] sm:$0xff]
  %v882 = vld [vmem:[%s4 + $0x158] sm:$0xff]
  %v883 = vld [vmem:[%s4 + $0x160] sm:$0xff]
  %v884 = vld [vmem:[%s4 + $0x168] sm:$0xff]
  %v885 = vld [vmem:[%s4 + $0x170] sm:$0xff]
  %v886 = vld [vmem:[%s4 + $0x178] sm:$0xff]
  %v888 = vsel %vm407, %v827, 0
  %v891 = vsel %vm407, %v828, 0
  %v894 = vsel %vm407, %v829, 0
  %v897 = vsel %vm407, %v830, 0
  %v900 = vsel %vm407, %v831, 0
  %v903 = vsel %vm407, %v832, 0
  %v906 = vsel %vm407, %v833, 0
  %v909 = vsel %vm407, %v834, 0
  %v912 = vsel %vm407, %v835, 0
  %v915 = vsel %vm407, %v836, 0
  %v918 = vsel %vm407, %v837, 0
  %v921 = vsel %vm407, %v838, 0
  %923 = vmatprep.subr.mxu0 0.0
  %924 = vmatpush1.msra.mxu0 0.0
  %925 = vmatprep.subr.mxu0 0.0
  %926 = vmatpush1.msra.mxu0 0.0
  %927 = vmatprep.subr.mxu0 0.0
  %928 = vmatpush1.msra.mxu0 0.0
  %929 = vmatprep.subr.mxu0 0.0
  %930 = vmatpush1.msra.mxu0 0.0
  %931 = vmatprep.subr.mxu0 0.0
  %932 = vmatpush1.msra.mxu0 0.0
  %933 = vmatprep.subr.mxu0 0.0
  %934 = vmatpush1.msra.mxu0 0.0
  %935 = vmatprep.subr.mxu0 0.0
  %936 = vmatpush1.msra.mxu0 0.0
  %937 = vmatprep.subr.mxu0 0.0
  %938 = vmatpush1.msra.mxu0 0.0
  %939 = vmatprep.subr.mxu0 0.0
  %940 = vmatpush1.msra.mxu0 %v826
  %941 = vmatprep.subr.mxu0 0.0
  %942 = vmatpush1.msra.mxu0 %v825
  %943 = vmatprep.subr.mxu0 0.0
  %944 = vmatpush1.msra.mxu0 %v824
  %945 = vmatprep.subr.mxu0 0.0
  %946 = vmatpush1.msra.mxu0 %v823
  %947 = vmatprep.subr.mxu0 0.0
  %948 = vmatpush1.msra.mxu0 %v822
  %949 = vmatprep.subr.mxu0 0.0
  %950 = vmatpush1.msra.mxu0 %v821
  %951 = vmatprep.subr.mxu0 0.0
  %952 = vmatpush1.msra.mxu0 %v820
  %953 = vmatprep.subr.mxu0 0.0
  %954 = vmatpush1.msra.mxu0 %v819
  %955 = vmatprep.subr.mxu0 0.0
  %956 = vmatpush2.msra.mxu0 0.0
  %957 = vmatprep.subr.mxu0 0.0
  %958 = vmatpush2.msra.mxu0 0.0
  %959 = vmatprep.subr.mxu0 0.0
  %960 = vmatpush2.msra.mxu0 0.0
  %961 = vmatprep.subr.mxu0 0.0
  %962 = vmatpush2.msra.mxu0 0.0
  %963 = vmatprep.subr.mxu0 0.0
  %964 = vmatpush2.msra.mxu0 0.0
  %965 = vmatprep.subr.mxu0 0.0
  %966 = vmatpush2.msra.mxu0 0.0
  %967 = vmatprep.subr.mxu0 0.0
  %968 = vmatpush2.msra.mxu0 0.0
  %969 = vmatprep.subr.mxu0 0.0
  %970 = vmatpush2.msra.mxu0 0.0
  %971 = vmatprep.subr.mxu0 0.0
  %972 = vmatpush2.msra.mxu0 0.0
  %973 = vmatprep.subr.mxu0 0.0
  %974 = vmatpush2.msra.mxu0 0.0
  %975 = vmatprep.subr.mxu0 0.0
  %976 = vmatpush2.msra.mxu0 0.0
  %977 = vmatprep.subr.mxu0 0.0
  %978 = vmatpush2.msra.mxu0 0.0
  %979 = vmatprep.subr.mxu0 0.0
  %980 = vmatpush2.msra.mxu0 0.0
  %981 = vmatprep.subr.mxu0 0.0
  %982 = vmatpush2.msra.mxu0 0.0
  %983 = vmatprep.subr.mxu0 0.0
  %984 = vmatpush2.msra.mxu0 0.0
  %985 = vmatprep.subr.mxu0 0.0
  %986 = vmatpush2.msra.mxu0 0.0
  %987 = vmatprep.mubr.f32.mxu0 0.0
  %988 = vmatmul.mubr.f32.gmra.mxu0 %v888
  %v989 = vpop.f32.mrf.mxu0
  %v990 = vadd.f32 0.0, %v989
  %v991 = vpop.f32.mrf.mxu0
  %992 = vmatprep.mubr.f32.mxu0 0.0
  %993 = vmatmul.mubr.f32.gmra.mxu0 %v891
  %v994 = vpop.f32.mrf.mxu0
  %v995 = vadd.f32 0.0, %v994
  %v996 = vpop.f32.mrf.mxu0
  %997 = vmatprep.mubr.f32.mxu0 0.0
  %998 = vmatmul.mubr.f32.gmra.mxu0 %v894
  %v999 = vpop.f32.mrf.mxu0
  %v1000 = vadd.f32 0.0, %v999
  %v1001 = vpop.f32.mrf.mxu0
  %1002 = vmatprep.mubr.f32.mxu0 0.0
  %1003 = vmatmul.mubr.f32.gmra.mxu0 %v897
  %v1004 = vpop.f32.mrf.mxu0
  %v1005 = vadd.f32 0.0, %v1004
  %v1006 = vpop.f32.mrf.mxu0
  %1007 = vmatprep.mubr.f32.mxu0 0.0
  %1008 = vmatmul.mubr.f32.gmra.mxu0 %v900
  %v1009 = vpop.f32.mrf.mxu0
  %v1010 = vadd.f32 0.0, %v1009
  %v1011 = vpop.f32.mrf.mxu0
  %1012 = vmatprep.mubr.f32.mxu0 0.0
  %1013 = vmatmul.mubr.f32.gmra.mxu0 %v903
  %v1014 = vpop.f32.mrf.mxu0
  %v1015 = vadd.f32 0.0, %v1014
  %v1016 = vpop.f32.mrf.mxu0
  %1017 = vmatprep.mubr.f32.mxu0 0.0
  %1018 = vmatmul.mubr.f32.gmra.mxu0 %v906
  %v1019 = vpop.f32.mrf.mxu0
  %v1020 = vadd.f32 0.0, %v1019
  %v1021 = vpop.f32.mrf.mxu0
  %1022 = vmatprep.mubr.f32.mxu0 0.0
  %1023 = vmatmul.mubr.f32.gmra.mxu0 %v909
  %v1024 = vpop.f32.mrf.mxu0
  %v1025 = vadd.f32 0.0, %v1024
  %v1026 = vpop.f32.mrf.mxu0
  %1027 = vmatprep.mubr.f32.mxu0 0.0
  %1028 = vmatmul.mubr.f32.gmra.mxu0 %v912
  %v1029 = vpop.f32.mrf.mxu0
  %v1030 = vadd.f32 0.0, %v1029
  %v1031 = vpop.f32.mrf.mxu0
  %1032 = vmatprep.mubr.f32.mxu0 0.0
  %1033 = vmatmul.mubr.f32.gmra.mxu0 %v915
  %v1034 = vpop.f32.mrf.mxu0
  %v1035 = vadd.f32 0.0, %v1034
  %v1036 = vpop.f32.mrf.mxu0
  %1037 = vmatprep.mubr.f32.mxu0 0.0
  %1038 = vmatmul.mubr.f32.gmra.mxu0 %v918
  %v1039 = vpop.f32.mrf.mxu0
  %v1040 = vadd.f32 0.0, %v1039
  %v1041 = vpop.f32.mrf.mxu0
  %1042 = vmatprep.mubr.f32.mxu0 0.0
  %1043 = vmatmul.mubr.f32.gmra.mxu0 %v921
  %v1044 = vpop.f32.mrf.mxu0
  %v1045 = vadd.f32 0.0, %v1044
  %v1046 = vpop.f32.mrf.mxu0
  %1047 = vdwg.mxu0
  %1048 = vmatprep.subr.mxu0 0.0
  %1049 = vmatpush1.msra.mxu0 %v870
  %1050 = vmatprep.subr.mxu0 0.0
  %1051 = vmatpush1.msra.mxu0 %v869
  %1052 = vmatprep.subr.mxu0 0.0
  %1053 = vmatpush1.msra.mxu0 %v868
  %1054 = vmatprep.subr.mxu0 0.0
  %1055 = vmatpush1.msra.mxu0 %v867
  %1056 = vmatprep.subr.mxu0 0.0
  %1057 = vmatpush1.msra.mxu0 %v866
  %1058 = vmatprep.subr.mxu0 0.0
  %1059 = vmatpush1.msra.mxu0 %v865
  %1060 = vmatprep.subr.mxu0 0.0
  %1061 = vmatpush1.msra.mxu0 %v864
  %1062 = vmatprep.subr.mxu0 0.0
  %1063 = vmatpush1.msra.mxu0 %v863
  %1064 = vmatprep.subr.mxu0 0.0
  %1065 = vmatpush1.msra.mxu0 %v862
  %1066 = vmatprep.subr.mxu0 0.0
  %1067 = vmatpush1.msra.mxu0 %v861
  %1068 = vmatprep.subr.mxu0 0.0
  %1069 = vmatpush1.msra.mxu0 %v860
  %1070 = vmatprep.subr.mxu0 0.0
  %1071 = vmatpush1.msra.mxu0 %v859
  %1072 = vmatprep.subr.mxu0 0.0
  %1073 = vmatpush1.msra.mxu0 %v858
  %1074 = vmatprep.subr.mxu0 0.0
  %1075 = vmatpush1.msra.mxu0 %v857
  %1076 = vmatprep.subr.mxu0 0.0
  %1077 = vmatpush1.msra.mxu0 %v856
  %1078 = vmatprep.subr.mxu0 0.0
  %1079 = vmatpush1.msra.mxu0 %v855
  %1080 = vmatprep.subr.mxu0 0.0
  %1081 = vmatpush2.msra.mxu0 0.0
  %1082 = vmatprep.subr.mxu0 0.0
  %1083 = vmatpush2.msra.mxu0 0.0
  %1084 = vmatprep.subr.mxu0 0.0
  %1085 = vmatpush2.msra.mxu0 0.0
  %1086 = vmatprep.subr.mxu0 0.0
  %1087 = vmatpush2.msra.mxu0 0.0
  %1088 = vmatprep.subr.mxu0 0.0
  %1089 = vmatpush2.msra.mxu0 0.0
  %1090 = vmatprep.subr.mxu0 0.0
  %1091 = vmatpush2.msra.mxu0 0.0
  %1092 = vmatprep.subr.mxu0 0.0
  %1093 = vmatpush2.msra.mxu0 0.0
  %1094 = vmatprep.subr.mxu0 0.0
  %1095 = vmatpush2.msra.mxu0 0.0
  %1096 = vmatprep.subr.mxu0 0.0
  %1097 = vmatpush2.msra.mxu0 0.0
  %1098 = vmatprep.subr.mxu0 0.0
  %1099 = vmatpush2.msra.mxu0 0.0
  %1100 = vmatprep.subr.mxu0 0.0
  %1101 = vmatpush2.msra.mxu0 0.0
  %1102 = vmatprep.subr.mxu0 0.0
  %1103 = vmatpush2.msra.mxu0 0.0
  %1104 = vmatprep.subr.mxu0 0.0
  %1105 = vmatpush2.msra.mxu0 0.0
  %1106 = vmatprep.subr.mxu0 0.0
  %1107 = vmatpush2.msra.mxu0 0.0
  %1108 = vmatprep.subr.mxu0 0.0
  %1109 = vmatpush2.msra.mxu0 0.0
  %1110 = vmatprep.subr.mxu0 0.0
  %1111 = vmatpush2.msra.mxu0 0.0
  %1112 = vmatprep.mubr.f32.mxu0 0.0
  %1113 = vmatmul.mubr.f32.gmra.mxu0 %v1010
  %v1114 = vpop.f32.mrf.mxu0
  %v1115 = vadd.f32 0.0, %v1114
  %v1116 = vpop.f32.mrf.mxu0
  %1117 = vmatprep.mubr.f32.mxu0 0.0
  %1118 = vmatmul.mubr.f32.gmra.mxu0 %v1015
  %v1119 = vpop.f32.mrf.mxu0
  %v1120 = vadd.f32 0.0, %v1119
  %v1121 = vpop.f32.mrf.mxu0
  %1122 = vmatprep.mubr.f32.mxu0 0.0
  %1123 = vmatmul.mubr.f32.gmra.mxu0 %v1020
  %v1124 = vpop.f32.mrf.mxu0
  %v1125 = vadd.f32 0.0, %v1124
  %v1126 = vpop.f32.mrf.mxu0
  %1127 = vmatprep.mubr.f32.mxu0 0.0
  %1128 = vmatmul.mubr.f32.gmra.mxu0 %v1025
  %v1129 = vpop.f32.mrf.mxu0
  %v1130 = vadd.f32 0.0, %v1129
  %v1131 = vpop.f32.mrf.mxu0
  %1132 = vdwg.mxu0
  %1133 = vmatprep.subr.mxu0 0.0
  %1134 = vmatpush1.msra.mxu0 %v854
  %1135 = vmatprep.subr.mxu0 0.0
  %1136 = vmatpush1.msra.mxu0 %v853
  %1137 = vmatprep.subr.mxu0 0.0
  %1138 = vmatpush1.msra.mxu0 %v852
  %1139 = vmatprep.subr.mxu0 0.0
  %1140 = vmatpush1.msra.mxu0 %v851
  %1141 = vmatprep.subr.mxu0 0.0
  %1142 = vmatpush1.msra.mxu0 %v850
  %1143 = vmatprep.subr.mxu0 0.0
  %1144 = vmatpush1.msra.mxu0 %v849
  %1145 = vmatprep.subr.mxu0 0.0
  %1146 = vmatpush1.msra.mxu0 %v848
  %1147 = vmatprep.subr.mxu0 0.0
  %1148 = vmatpush1.msra.mxu0 %v847
  %1149 = vmatprep.subr.mxu0 0.0
  %1150 = vmatpush1.msra.mxu0 %v846
  %1151 = vmatprep.subr.mxu0 0.0
  %1152 = vmatpush1.msra.mxu0 %v845
  %1153 = vmatprep.subr.mxu0 0.0
  %1154 = vmatpush1.msra.mxu0 %v844
  %1155 = vmatprep.subr.mxu0 0.0
  %1156 = vmatpush1.msra.mxu0 %v843
  %1157 = vmatprep.subr.mxu0 0.0
  %1158 = vmatpush1.msra.mxu0 %v842
  %1159 = vmatprep.subr.mxu0 0.0
  %1160 = vmatpush1.msra.mxu0 %v841
  %1161 = vmatprep.subr.mxu0 0.0
  %1162 = vmatpush1.msra.mxu0 %v840
  %1163 = vmatprep.subr.mxu0 0.0
  %1164 = vmatpush1.msra.mxu0 %v839
  %1165 = vmatprep.subr.mxu0 0.0
  %1166 = vmatpush2.msra.mxu0 0.0
  %1167 = vmatprep.subr.mxu0 0.0
  %1168 = vmatpush2.msra.mxu0 0.0
  %1169 = vmatprep.subr.mxu0 0.0
  %1170 = vmatpush2.msra.mxu0 0.0
  %1171 = vmatprep.subr.mxu0 0.0
  %1172 = vmatpush2.msra.mxu0 0.0
  %1173 = vmatprep.subr.mxu0 0.0
  %1174 = vmatpush2.msra.mxu0 0.0
  %1175 = vmatprep.subr.mxu0 0.0
  %1176 = vmatpush2.msra.mxu0 0.0
  %1177 = vmatprep.subr.mxu0 0.0
  %1178 = vmatpush2.msra.mxu0 0.0
  %1179 = vmatprep.subr.mxu0 0.0
  %1180 = vmatpush2.msra.mxu0 0.0
  %1181 = vmatprep.subr.mxu0 0.0
  %1182 = vmatpush2.msra.mxu0 0.0
  %1183 = vmatprep.subr.mxu0 0.0
  %1184 = vmatpush2.msra.mxu0 0.0
  %1185 = vmatprep.subr.mxu0 0.0
  %1186 = vmatpush2.msra.mxu0 0.0
  %1187 = vmatprep.subr.mxu0 0.0
  %1188 = vmatpush2.msra.mxu0 0.0
  %1189 = vmatprep.subr.mxu0 0.0
  %1190 = vmatpush2.msra.mxu0 0.0
  %1191 = vmatprep.subr.mxu0 0.0
  %1192 = vmatpush2.msra.mxu0 0.0
  %1193 = vmatprep.subr.mxu0 0.0
  %1194 = vmatpush2.msra.mxu0 0.0
  %1195 = vmatprep.subr.mxu0 0.0
  %1196 = vmatpush2.msra.mxu0 0.0
  %1197 = vmatprep.mubr.f32.mxu0 0.0
  %1198 = vmatmul.mubr.f32.gmra.mxu0 %v990
  %v1199 = vpop.f32.mrf.mxu0
  %v1200 = vadd.f32 %v1115, %v1199
  %v1201 = vpop.f32.mrf.mxu0
  %1202 = vmatprep.mubr.f32.mxu0 0.0
  %1203 = vmatmul.mubr.f32.gmra.mxu0 %v995
  %v1204 = vpop.f32.mrf.mxu0
  %v1205 = vadd.f32 %v1120, %v1204
  %v1206 = vpop.f32.mrf.mxu0
  %1207 = vmatprep.mubr.f32.mxu0 0.0
  %1208 = vmatmul.mubr.f32.gmra.mxu0 %v1000
  %v1209 = vpop.f32.mrf.mxu0
  %v1210 = vadd.f32 %v1125, %v1209
  %v1211 = vpop.f32.mrf.mxu0
  %1212 = vmatprep.mubr.f32.mxu0 0.0
  %1213 = vmatmul.mubr.f32.gmra.mxu0 %v1005
  %v1214 = vpop.f32.mrf.mxu0
  %v1215 = vadd.f32 %v1130, %v1214
  %v1216 = vpop.f32.mrf.mxu0
  %1217 = vdwg.mxu0
  %1218 = vmatprep.subr.mxu0 0.0
  %1219 = vmatpush1.msra.mxu0 %v886
  %1220 = vmatprep.subr.mxu0 0.0
  %1221 = vmatpush1.msra.mxu0 %v885
  %1222 = vmatprep.subr.mxu0 0.0
  %1223 = vmatpush1.msra.mxu0 %v884
  %1224 = vmatprep.subr.mxu0 0.0
  %1225 = vmatpush1.msra.mxu0 %v883
  %1226 = vmatprep.subr.mxu0 0.0
  %1227 = vmatpush1.msra.mxu0 %v882
  %1228 = vmatprep.subr.mxu0 0.0
  %1229 = vmatpush1.msra.mxu0 %v881
  %1230 = vmatprep.subr.mxu0 0.0
  %1231 = vmatpush1.msra.mxu0 %v880
  %1232 = vmatprep.subr.mxu0 0.0
  %1233 = vmatpush1.msra.mxu0 %v879
  %1234 = vmatprep.subr.mxu0 0.0
  %1235 = vmatpush1.msra.mxu0 %v878
  %1236 = vmatprep.subr.mxu0 0.0
  %1237 = vmatpush1.msra.mxu0 %v877
  %1238 = vmatprep.subr.mxu0 0.0
  %1239 = vmatpush1.msra.mxu0 %v876
  %1240 = vmatprep.subr.mxu0 0.0
  %1241 = vmatpush1.msra.mxu0 %v875
  %1242 = vmatprep.subr.mxu0 0.0
  %1243 = vmatpush1.msra.mxu0 %v874
  %1244 = vmatprep.subr.mxu0 0.0
  %1245 = vmatpush1.msra.mxu0 %v873
  %1246 = vmatprep.subr.mxu0 0.0
  %1247 = vmatpush1.msra.mxu0 %v872
  %1248 = vmatprep.subr.mxu0 0.0
  %1249 = vmatpush1.msra.mxu0 %v871
  %1250 = vmatprep.subr.mxu0 0.0
  %1251 = vmatpush2.msra.mxu0 0.0
  %1252 = vmatprep.subr.mxu0 0.0
  %1253 = vmatpush2.msra.mxu0 0.0
  %1254 = vmatprep.subr.mxu0 0.0
  %1255 = vmatpush2.msra.mxu0 0.0
  %1256 = vmatprep.subr.mxu0 0.0
  %1257 = vmatpush2.msra.mxu0 0.0
  %1258 = vmatprep.subr.mxu0 0.0
  %1259 = vmatpush2.msra.mxu0 0.0
  %1260 = vmatprep.subr.mxu0 0.0
  %1261 = vmatpush2.msra.mxu0 0.0
  %1262 = vmatprep.subr.mxu0 0.0
  %1263 = vmatpush2.msra.mxu0 0.0
  %1264 = vmatprep.subr.mxu0 0.0
  %1265 = vmatpush2.msra.mxu0 0.0
  %1266 = vmatprep.subr.mxu0 0.0
  %1267 = vmatpush2.msra.mxu0 0.0
  %1268 = vmatprep.subr.mxu0 0.0
  %1269 = vmatpush2.msra.mxu0 0.0
  %1270 = vmatprep.subr.mxu0 0.0
  %1271 = vmatpush2.msra.mxu0 0.0
  %1272 = vmatprep.subr.mxu0 0.0
  %1273 = vmatpush2.msra.mxu0 0.0
  %1274 = vmatprep.subr.mxu0 0.0
  %1275 = vmatpush2.msra.mxu0 0.0
  %1276 = vmatprep.subr.mxu0 0.0
  %1277 = vmatpush2.msra.mxu0 0.0
  %1278 = vmatprep.subr.mxu0 0.0
  %1279 = vmatpush2.msra.mxu0 0.0
  %1280 = vmatprep.subr.mxu0 0.0
  %1281 = vmatpush2.msra.mxu0 0.0
  %1282 = vmatprep.mubr.f32.mxu0 0.0
  %1283 = vmatmul.mubr.f32.gmra.mxu0 %v1030
  %v1284 = vpop.f32.mrf.mxu0
  %v1285 = vadd.f32 0.0, %v1284
  %v1286 = vpop.f32.mrf.mxu0
  %1287 = vmatprep.mubr.f32.mxu0 0.0
  %1288 = vmatmul.mubr.f32.gmra.mxu0 %v1035
  %v1289 = vpop.f32.mrf.mxu0
  %v1290 = vadd.f32 0.0, %v1289
  %v1291 = vpop.f32.mrf.mxu0
  %1292 = vmatprep.mubr.f32.mxu0 0.0
  %1293 = vmatmul.mubr.f32.gmra.mxu0 %v1040
  %v1294 = vpop.f32.mrf.mxu0
  %v1295 = vadd.f32 0.0, %v1294
  %v1296 = vpop.f32.mrf.mxu0
  %1297 = vmatprep.mubr.f32.mxu0 0.0
  %1298 = vmatmul.mubr.f32.gmra.mxu0 %v1045
  %v1299 = vpop.f32.mrf.mxu0
  %v1300 = vadd.f32 0.0, %v1299
  %v1301 = vpop.f32.mrf.mxu0
  %1302 = vdwg.mxu0
  %v1303 = vadd.f32 %v1200, %v1285
  %v1304 = vadd.f32 %v1205, %v1290
  %v1305 = vadd.f32 %v1210, %v1295
  %v1306 = vadd.f32 %v1215, %v1300
  %v1307 = vld [vmem:[%s5] sm:$0x1]
  %v1308 = vld [vmem:[%s6] sm:$0x1]
  %v1309 = vld [vmem:[%s7] sm:$0xff]
  %v1310 = vld [vmem:[%s7 + $0x8] sm:$0xff]
  %v1311 = vld [vmem:[%s7 + $0x10] sm:$0xff]
  %v1312 = vld [vmem:[%s7 + $0x18] sm:$0xff]
  %v1313 = vld [vmem:[%s7 + $0x20] sm:$0xff]
  %v1314 = vld [vmem:[%s7 + $0x28] sm:$0xff]
  %v1315 = vld [vmem:[%s7 + $0x30] sm:$0xff]
  %v1316 = vld [vmem:[%s7 + $0x38] sm:$0xff]
  %v1317 = vld [vmem:[%s7 + $0x40] sm:$0xff]
  %v1318 = vld [vmem:[%s7 + $0x48] sm:$0xff]
  %v1319 = vld [vmem:[%s7 + $0x50] sm:$0xff]
  %v1320 = vld [vmem:[%s7 + $0x58] sm:$0xff]
  %v1321 = vld [vmem:[%s7 + $0x60] sm:$0xff]
  %v1322 = vld [vmem:[%s7 + $0x68] sm:$0xff]
  %v1323 = vld [vmem:[%s7 + $0x70] sm:$0xff]
  %v1324 = vld [vmem:[%s7 + $0x78] sm:$0xff]
  %v1325 = vld [vmem:[%s8] sm:$0xff]
  %v1326 = vadd.f32 %v1303, %v1304
  %v1327 = vadd.f32 %v1326, %v1305
  %v1328 = vadd.f32 %v1327, %v1306
  %v1329 = vrot.slane %v1328, 4
  %v1330 = vadd.f32 %v1328, %v1329
  %v1331 = vrot.slane %v1330, 2
  %v1332 = vadd.f32 %v1330, %v1331
  %v1333 = vrot.slane %v1332, 1
  %v1334 = vadd.f32 %v1332, %v1333
  %v1335 = vmul.f32 %v1303, %v1303
  %v1336 = vmul.f32 %v1304, %v1304
  %v1337 = vmul.f32 %v1305, %v1305
  %v1338 = vmul.f32 %v1306, %v1306
  %v1339 = vadd.f32 %v1335, %v1336
  %v1340 = vadd.f32 %v1339, %v1337
  %v1341 = vadd.f32 %v1340, %v1338
  %v1342 = vrot.slane %v1341, 4
  %v1343 = vadd.f32 %v1341, %v1342
  %v1344 = vrot.slane %v1343, 2
  %v1345 = vadd.f32 %v1343, %v1344
  %v1346 = vrot.slane %v1345, 1
  %v1347 = vadd.f32 %v1345, %v1346
  %1348 = vmatprep.subr.mxu0 0.0
  %1349 = vmatpush1.msra.mxu0 %v1324
  %1350 = vmatprep.subr.mxu0 0.0
  %1351 = vmatpush1.msra.mxu0 %v1323
  %1352 = vmatprep.subr.mxu0 0.0
  %1353 = vmatpush1.msra.mxu0 %v1322
  %1354 = vmatprep.subr.mxu0 0.0
  %1355 = vmatpush1.msra.mxu0 %v1321
  %1356 = vmatprep.subr.mxu0 0.0
  %1357 = vmatpush1.msra.mxu0 %v1320
  %1358 = vmatprep.subr.mxu0 0.0
  %1359 = vmatpush1.msra.mxu0 %v1319
  %1360 = vmatprep.subr.mxu0 0.0
  %1361 = vmatpush1.msra.mxu0 %v1318
  %1362 = vmatprep.subr.mxu0 0.0
  %1363 = vmatpush1.msra.mxu0 %v1317
  %1364 = vmatprep.subr.mxu0 0.0
  %1365 = vmatpush1.msra.mxu0 %v1316
  %1366 = vmatprep.subr.mxu0 0.0
  %1367 = vmatpush1.msra.mxu0 %v1315
  %1368 = vmatprep.subr.mxu0 0.0
  %1369 = vmatpush1.msra.mxu0 %v1314
  %1370 = vmatprep.subr.mxu0 0.0
  %1371 = vmatpush1.msra.mxu0 %v1313
  %1372 = vmatprep.subr.mxu0 0.0
  %1373 = vmatpush1.msra.mxu0 %v1312
  %1374 = vmatprep.subr.mxu0 0.0
  %1375 = vmatpush1.msra.mxu0 %v1311
  %1376 = vmatprep.subr.mxu0 0.0
  %1377 = vmatpush1.msra.mxu0 %v1310
  %1378 = vmatprep.subr.mxu0 0.0
  %1379 = vmatpush1.msra.mxu0 %v1309
  %1380 = vmatprep.subr.mxu0 0.0
  %1381 = vmatpush2.msra.mxu0 0.0
  %1382 = vmatprep.subr.mxu0 0.0
  %1383 = vmatpush2.msra.mxu0 0.0
  %1384 = vmatprep.subr.mxu0 0.0
  %1385 = vmatpush2.msra.mxu0 0.0
  %1386 = vmatprep.subr.mxu0 0.0
  %1387 = vmatpush2.msra.mxu0 0.0
  %1388 = vmatprep.subr.mxu0 0.0
  %1389 = vmatpush2.msra.mxu0 0.0
  %1390 = vmatprep.subr.mxu0 0.0
  %1391 = vmatpush2.msra.mxu0 0.0
  %1392 = vmatprep.subr.mxu0 0.0
  %1393 = vmatpush2.msra.mxu0 0.0
  %1394 = vmatprep.subr.mxu0 0.0
  %1395 = vmatpush2.msra.mxu0 0.0
  %1396 = vmatprep.subr.mxu0 0.0
  %1397 = vmatpush2.msra.mxu0 0.0
  %1398 = vmatprep.subr.mxu0 0.0
  %1399 = vmatpush2.msra.mxu0 0.0
  %1400 = vmatprep.subr.mxu0 0.0
  %1401 = vmatpush2.msra.mxu0 0.0
  %1402 = vmatprep.subr.mxu0 0.0
  %1403 = vmatpush2.msra.mxu0 0.0
  %1404 = vmatprep.subr.mxu0 0.0
  %1405 = vmatpush2.msra.mxu0 0.0
  %1406 = vmatprep.subr.mxu0 0.0
  %1407 = vmatpush2.msra.mxu0 0.0
  %1408 = vmatprep.subr.mxu0 0.0
  %1409 = vmatpush2.msra.mxu0 0.0
  %1410 = vmatprep.subr.mxu0 0.0
  %1411 = vmatpush2.msra.mxu0 0.0
  %1412 = vmatprep.mubr.f32.mxu0 0.0
  %1413 = vmatmul.mubr.f32.gmra.mxu0 %v1334
  %v1414 = vpop.f32.mrf.mxu0
  %v1415 = vadd.f32 0.0, %v1414
  %v1416 = vpop.f32.mrf.mxu0
  %1417 = vdwg.mxu0
  %1418 = vmatprep.subr.mxu0 0.0
  %1419 = vmatpush1.msra.mxu0 %v1324
  %1420 = vmatprep.subr.mxu0 0.0
  %1421 = vmatpush1.msra.mxu0 %v1323
  %1422 = vmatprep.subr.mxu0 0.0
  %1423 = vmatpush1.msra.mxu0 %v1322
  %1424 = vmatprep.subr.mxu0 0.0
  %1425 = vmatpush1.msra.mxu0 %v1321
  %1426 = vmatprep.subr.mxu0 0.0
  %1427 = vmatpush1.msra.mxu0 %v1320
  %1428 = vmatprep.subr.mxu0 0.0
  %1429 = vmatpush1.msra.mxu0 %v1319
  %1430 = vmatprep.subr.mxu0 0.0
  %1431 = vmatpush1.msra.mxu0 %v1318
  %1432 = vmatprep.subr.mxu0 0.0
  %1433 = vmatpush1.msra.mxu0 %v1317
  %1434 = vmatprep.subr.mxu0 0.0
  %1435 = vmatpush1.msra.mxu0 %v1316
  %1436 = vmatprep.subr.mxu0 0.0
  %1437 = vmatpush1.msra.mxu0 %v1315
  %1438 = vmatprep.subr.mxu0 0.0
  %1439 = vmatpush1.msra.mxu0 %v1314
  %1440 = vmatprep.subr.mxu0 0.0
  %1441 = vmatpush1.msra.mxu0 %v1313
  %1442 = vmatprep.subr.mxu0 0.0
  %1443 = vmatpush1.msra.mxu0 %v1312
  %1444 = vmatprep.subr.mxu0 0.0
  %1445 = vmatpush1.msra.mxu0 %v1311
  %1446 = vmatprep.subr.mxu0 0.0
  %1447 = vmatpush1.msra.mxu0 %v1310
  %1448 = vmatprep.subr.mxu0 0.0
  %1449 = vmatpush1.msra.mxu0 %v1309
  %1450 = vmatprep.subr.mxu0 0.0
  %1451 = vmatpush2.msra.mxu0 0.0
  %1452 = vmatprep.subr.mxu0 0.0
  %1453 = vmatpush2.msra.mxu0 0.0
  %1454 = vmatprep.subr.mxu0 0.0
  %1455 = vmatpush2.msra.mxu0 0.0
  %1456 = vmatprep.subr.mxu0 0.0
  %1457 = vmatpush2.msra.mxu0 0.0
  %1458 = vmatprep.subr.mxu0 0.0
  %1459 = vmatpush2.msra.mxu0 0.0
  %1460 = vmatprep.subr.mxu0 0.0
  %1461 = vmatpush2.msra.mxu0 0.0
  %1462 = vmatprep.subr.mxu0 0.0
  %1463 = vmatpush2.msra.mxu0 0.0
  %1464 = vmatprep.subr.mxu0 0.0
  %1465 = vmatpush2.msra.mxu0 0.0
  %1466 = vmatprep.subr.mxu0 0.0
  %1467 = vmatpush2.msra.mxu0 0.0
  %1468 = vmatprep.subr.mxu0 0.0
  %1469 = vmatpush2.msra.mxu0 0.0
  %1470 = vmatprep.subr.mxu0 0.0
  %1471 = vmatpush2.msra.mxu0 0.0
  %1472 = vmatprep.subr.mxu0 0.0
  %1473 = vmatpush2.msra.mxu0 0.0
  %1474 = vmatprep.subr.mxu0 0.0
  %1475 = vmatpush2.msra.mxu0 0.0
  %1476 = vmatprep.subr.mxu0 0.0
  %1477 = vmatpush2.msra.mxu0 0.0
  %1478 = vmatprep.subr.mxu0 0.0
  %1479 = vmatpush2.msra.mxu0 0.0
  %1480 = vmatprep.subr.mxu0 0.0
  %1481 = vmatpush2.msra.mxu0 0.0
  %1482 = vmatprep.mubr.f32.mxu0 0.0
  %1483 = vmatmul.mubr.f32.gmra.mxu0 %v1347
  %v1484 = vpop.f32.mrf.mxu0
  %v1485 = vadd.f32 0.0, %v1484
  %v1486 = vpop.f32.mrf.mxu0
  %1487 = vdwg.mxu0
  %v1488 = vrcp.pop 512.0
  %v1489 = vmul.f32 %v1415, %v1488
  %v1490 = vmul.f32 %v1485, %v1488
  %v1491 = vmul.f32 %v1489, %v1489
  %v1492 = vsub.f32 %v1490, %v1491
  %v1493 = vmax.f32 %v1492, 0.0
  %v1494 = vadd.f32 %v1493, 1e-05
  %v1495 = vrsqrt.pop %v1494
  %v1496 = vmul.f32 %v1307, %v1495
  %v1497 = vmul.f32 %v1489, %v1496
  %v1498 = vsub.f32 %v1308, %v1497
  %vm1499 = vcmask 64512
  %v1501 = vsel %vm1499, %v1496, 0
  %1503 = vmatprep.subr.mxu0 0.0
  %1504 = vmatpush1.msra.mxu0 0.0
  %1505 = vmatprep.subr.mxu0 0.0
  %1506 = vmatpush1.msra.mxu0 0.0
  %1507 = vmatprep.subr.mxu0 0.0
  %1508 = vmatpush1.msra.mxu0 0.0
  %1509 = vmatprep.subr.mxu0 0.0
  %1510 = vmatpush1.msra.mxu0 0.0
  %1511 = vmatprep.subr.mxu0 0.0
  %1512 = vmatpush1.msra.mxu0 0.0
  %1513 = vmatprep.subr.mxu0 0.0
  %1514 = vmatpush1.msra.mxu0 0.0
  %1515 = vmatprep.subr.mxu0 0.0
  %1516 = vmatpush1.msra.mxu0 0.0
  %1517 = vmatprep.subr.mxu0 0.0
  %1518 = vmatpush1.msra.mxu0 0.0
  %1519 = vmatprep.subr.mxu0 0.0
  %1520 = vmatpush1.msra.mxu0 0.0
  %1521 = vmatprep.subr.mxu0 0.0
  %1522 = vmatpush1.msra.mxu0 0.0
  %1523 = vmatprep.subr.mxu0 0.0
  %1524 = vmatpush1.msra.mxu0 0.0
  %1525 = vmatprep.subr.mxu0 0.0
  %1526 = vmatpush1.msra.mxu0 0.0
  %1527 = vmatprep.subr.mxu0 0.0
  %1528 = vmatpush1.msra.mxu0 0.0
  %1529 = vmatprep.subr.mxu0 0.0
  %1530 = vmatpush1.msra.mxu0 0.0
  %1531 = vmatprep.subr.mxu0 0.0
  %1532 = vmatpush1.msra.mxu0 0.0
  %1533 = vmatprep.subr.mxu0 0.0
  %1534 = vmatpush1.msra.mxu0 %v1325
  %1535 = vmatprep.subr.mxu0 0.0
  %1536 = vmatpush2.msra.mxu0 0.0
  %1537 = vmatprep.subr.mxu0 0.0
  %1538 = vmatpush2.msra.mxu0 0.0
  %1539 = vmatprep.subr.mxu0 0.0
  %1540 = vmatpush2.msra.mxu0 0.0
  %1541 = vmatprep.subr.mxu0 0.0
  %1542 = vmatpush2.msra.mxu0 0.0
  %1543 = vmatprep.subr.mxu0 0.0
  %1544 = vmatpush2.msra.mxu0 0.0
  %1545 = vmatprep.subr.mxu0 0.0
  %1546 = vmatpush2.msra.mxu0 0.0
  %1547 = vmatprep.subr.mxu0 0.0
  %1548 = vmatpush2.msra.mxu0 0.0
  %1549 = vmatprep.subr.mxu0 0.0
  %1550 = vmatpush2.msra.mxu0 0.0
  %1551 = vmatprep.subr.mxu0 0.0
  %1552 = vmatpush2.msra.mxu0 0.0
  %1553 = vmatprep.subr.mxu0 0.0
  %1554 = vmatpush2.msra.mxu0 0.0
  %1555 = vmatprep.subr.mxu0 0.0
  %1556 = vmatpush2.msra.mxu0 0.0
  %1557 = vmatprep.subr.mxu0 0.0
  %1558 = vmatpush2.msra.mxu0 0.0
  %1559 = vmatprep.subr.mxu0 0.0
  %1560 = vmatpush2.msra.mxu0 0.0
  %1561 = vmatprep.subr.mxu0 0.0
  %1562 = vmatpush2.msra.mxu0 0.0
  %1563 = vmatprep.subr.mxu0 0.0
  %1564 = vmatpush2.msra.mxu0 0.0
  %1565 = vmatprep.subr.mxu0 0.0
  %1566 = vmatpush2.msra.mxu0 0.0
  %1567 = vmatprep.mubr.f32.mxu0 0.0
  %1568 = vmatmul.mubr.f32.gmra.mxu0 %v1501
  %v1569 = vpop.f32.mrf.mxu0
  %v1570 = vadd.f32 0.0, %v1569
  %v1571 = vpop.f32.mrf.mxu0
  %1572 = vdwg.mxu0
  %v1574 = vsel %vm1499, %v1498, 0
  %1576 = vmatprep.subr.mxu0 0.0
  %1577 = vmatpush1.msra.mxu0 0.0
  %1578 = vmatprep.subr.mxu0 0.0
  %1579 = vmatpush1.msra.mxu0 0.0
  %1580 = vmatprep.subr.mxu0 0.0
  %1581 = vmatpush1.msra.mxu0 0.0
  %1582 = vmatprep.subr.mxu0 0.0
  %1583 = vmatpush1.msra.mxu0 0.0
  %1584 = vmatprep.subr.mxu0 0.0
  %1585 = vmatpush1.msra.mxu0 0.0
  %1586 = vmatprep.subr.mxu0 0.0
  %1587 = vmatpush1.msra.mxu0 0.0
  %1588 = vmatprep.subr.mxu0 0.0
  %1589 = vmatpush1.msra.mxu0 0.0
  %1590 = vmatprep.subr.mxu0 0.0
  %1591 = vmatpush1.msra.mxu0 0.0
  %1592 = vmatprep.subr.mxu0 0.0
  %1593 = vmatpush1.msra.mxu0 0.0
  %1594 = vmatprep.subr.mxu0 0.0
  %1595 = vmatpush1.msra.mxu0 0.0
  %1596 = vmatprep.subr.mxu0 0.0
  %1597 = vmatpush1.msra.mxu0 0.0
  %1598 = vmatprep.subr.mxu0 0.0
  %1599 = vmatpush1.msra.mxu0 0.0
  %1600 = vmatprep.subr.mxu0 0.0
  %1601 = vmatpush1.msra.mxu0 0.0
  %1602 = vmatprep.subr.mxu0 0.0
  %1603 = vmatpush1.msra.mxu0 0.0
  %1604 = vmatprep.subr.mxu0 0.0
  %1605 = vmatpush1.msra.mxu0 0.0
  %1606 = vmatprep.subr.mxu0 0.0
  %1607 = vmatpush1.msra.mxu0 %v1325
  %1608 = vmatprep.subr.mxu0 0.0
  %1609 = vmatpush2.msra.mxu0 0.0
  %1610 = vmatprep.subr.mxu0 0.0
  %1611 = vmatpush2.msra.mxu0 0.0
  %1612 = vmatprep.subr.mxu0 0.0
  %1613 = vmatpush2.msra.mxu0 0.0
  %1614 = vmatprep.subr.mxu0 0.0
  %1615 = vmatpush2.msra.mxu0 0.0
  %1616 = vmatprep.subr.mxu0 0.0
  %1617 = vmatpush2.msra.mxu0 0.0
  %1618 = vmatprep.subr.mxu0 0.0
  %1619 = vmatpush2.msra.mxu0 0.0
  %1620 = vmatprep.subr.mxu0 0.0
  %1621 = vmatpush2.msra.mxu0 0.0
  %1622 = vmatprep.subr.mxu0 0.0
  %1623 = vmatpush2.msra.mxu0 0.0
  %1624 = vmatprep.subr.mxu0 0.0
  %1625 = vmatpush2.msra.mxu0 0.0
  %1626 = vmatprep.subr.mxu0 0.0
  %1627 = vmatpush2.msra.mxu0 0.0
  %1628 = vmatprep.subr.mxu0 0.0
  %1629 = vmatpush2.msra.mxu0 0.0
  %1630 = vmatprep.subr.mxu0 0.0
  %1631 = vmatpush2.msra.mxu0 0.0
  %1632 = vmatprep.subr.mxu0 0.0
  %1633 = vmatpush2.msra.mxu0 0.0
  %1634 = vmatprep.subr.mxu0 0.0
  %1635 = vmatpush2.msra.mxu0 0.0
  %1636 = vmatprep.subr.mxu0 0.0
  %1637 = vmatpush2.msra.mxu0 0.0
  %1638 = vmatprep.subr.mxu0 0.0
  %1639 = vmatpush2.msra.mxu0 0.0
  %1640 = vmatprep.mubr.f32.mxu0 0.0
  %1641 = vmatmul.mubr.f32.gmra.mxu0 %v1574
  %v1642 = vpop.f32.mrf.mxu0
  %v1643 = vadd.f32 0.0, %v1642
  %v1644 = vpop.f32.mrf.mxu0
  %1645 = vdwg.mxu0
  %v1646 = vlaneseq
  %v1647 = vshrl.u32 %v1646, 7
  %v1648 = vsub.s32 0, %v1647
  %v1649 = vrot.slane %v1570, %v1648
  %v1650 = vmul.f32 %v1303, %v1649
  %v1651 = vmul.f32 %v1304, %v1649
  %v1652 = vmul.f32 %v1305, %v1649
  %v1653 = vmul.f32 %v1306, %v1649
  %v1654 = vlaneseq
  %v1655 = vshrl.u32 %v1654, 7
  %v1656 = vsub.s32 0, %v1655
  %v1657 = vrot.slane %v1643, %v1656
  %v1658 = vadd.f32 %v1650, %v1657
  %v1659 = vadd.f32 %v1651, %v1657
  %v1660 = vadd.f32 %v1652, %v1657
  %v1661 = vadd.f32 %v1653, %v1657
  %vm1662 = vcmp.gt.f32.partialorder %v1658, 0.0
  %vm1663 = vcmp.gt.f32.partialorder %v1659, 0.0
  %vm1664 = vcmp.gt.f32.partialorder %v1660, 0.0
  %vm1665 = vcmp.gt.f32.partialorder %v1661, 0.0
  %v1666 = vmul.f32 %v1658, 0.2
  %v1667 = vmul.f32 %v1659, 0.2
  %v1668 = vmul.f32 %v1660, 0.2
  %v1669 = vmul.f32 %v1661, 0.2
  %v1670 = vsel %vm1662, %v1658, %v1666
  %v1671 = vsel %vm1663, %v1659, %v1667
  %v1672 = vsel %vm1664, %v1660, %v1668
  %v1673 = vsel %vm1665, %v1661, %v1669
  %v1674 = vld [vmem:[%s9] sm:$0xff]
  %v1675 = vld [vmem:[%s9 + $0x8] sm:$0xff]
  %v1676 = vld [vmem:[%s9 + $0x10] sm:$0xff]
  %v1677 = vld [vmem:[%s9 + $0x18] sm:$0xff]
  %v1678 = vld [vmem:[%s9 + $0x20] sm:$0xff]
  %v1679 = vld [vmem:[%s9 + $0x28] sm:$0xff]
  %v1680 = vld [vmem:[%s10] sm:$0xff]
  %v1681 = vld [vmem:[%s10 + $0x8] sm:$0xff]
  %v1682 = vld [vmem:[%s10 + $0x10] sm:$0xff]
  %v1683 = vld [vmem:[%s10 + $0x18] sm:$0xff]
  %v1684 = vld [vmem:[%s10 + $0x20] sm:$0xff]
  %v1685 = vld [vmem:[%s10 + $0x28] sm:$0xff]
  %v1686 = vld [vmem:[%s10 + $0x30] sm:$0xff]
  %v1687 = vld [vmem:[%s10 + $0x38] sm:$0xff]
  %v1688 = vld [vmem:[%s10 + $0x40] sm:$0xff]
  %v1689 = vld [vmem:[%s10 + $0x48] sm:$0xff]
  %v1690 = vld [vmem:[%s10 + $0x50] sm:$0xff]
  %v1691 = vld [vmem:[%s10 + $0x58] sm:$0xff]
  %v1692 = vld [vmem:[%s10 + $0x60] sm:$0xff]
  %v1693 = vld [vmem:[%s10 + $0x68] sm:$0xff]
  %v1694 = vld [vmem:[%s10 + $0x70] sm:$0xff]
  %v1695 = vld [vmem:[%s10 + $0x78] sm:$0xff]
  %v1696 = vld [vmem:[%s10 + $0x80] sm:$0xff]
  %v1697 = vld [vmem:[%s10 + $0x88] sm:$0xff]
  %v1698 = vld [vmem:[%s10 + $0x90] sm:$0xff]
  %v1699 = vld [vmem:[%s10 + $0x98] sm:$0xff]
  %v1700 = vld [vmem:[%s10 + $0xa0] sm:$0xff]
  %v1701 = vld [vmem:[%s10 + $0xa8] sm:$0xff]
  %v1702 = vld [vmem:[%s10 + $0xb0] sm:$0xff]
  %v1703 = vld [vmem:[%s10 + $0xb8] sm:$0xff]
  %v1704 = vld [vmem:[%s10 + $0xc0] sm:$0xff]
  %v1705 = vld [vmem:[%s10 + $0xc8] sm:$0xff]
  %v1706 = vld [vmem:[%s10 + $0xd0] sm:$0xff]
  %v1707 = vld [vmem:[%s10 + $0xd8] sm:$0xff]
  %v1708 = vld [vmem:[%s10 + $0xe0] sm:$0xff]
  %v1709 = vld [vmem:[%s10 + $0xe8] sm:$0xff]
  %v1710 = vld [vmem:[%s10 + $0xf0] sm:$0xff]
  %v1711 = vld [vmem:[%s10 + $0xf8] sm:$0xff]
  %v1712 = vld [vmem:[%s10 + $0x100] sm:$0xff]
  %v1713 = vld [vmem:[%s10 + $0x108] sm:$0xff]
  %v1714 = vld [vmem:[%s10 + $0x110] sm:$0xff]
  %v1715 = vld [vmem:[%s10 + $0x118] sm:$0xff]
  %v1716 = vld [vmem:[%s10 + $0x120] sm:$0xff]
  %v1717 = vld [vmem:[%s10 + $0x128] sm:$0xff]
  %v1718 = vld [vmem:[%s10 + $0x130] sm:$0xff]
  %v1719 = vld [vmem:[%s10 + $0x138] sm:$0xff]
  %v1720 = vld [vmem:[%s10 + $0x140] sm:$0xff]
  %v1721 = vld [vmem:[%s10 + $0x148] sm:$0xff]
  %v1722 = vld [vmem:[%s10 + $0x150] sm:$0xff]
  %v1723 = vld [vmem:[%s10 + $0x158] sm:$0xff]
  %v1724 = vld [vmem:[%s10 + $0x160] sm:$0xff]
  %v1725 = vld [vmem:[%s10 + $0x168] sm:$0xff]
  %v1726 = vld [vmem:[%s10 + $0x170] sm:$0xff]
  %v1727 = vld [vmem:[%s10 + $0x178] sm:$0xff]
  %vm1728 = vcmask 261120
  %v1730 = vsel %vm1728, %v1674, 0
  %v1733 = vsel %vm1728, %v1675, 0
  %v1736 = vsel %vm1728, %v1676, 0
  %v1739 = vsel %vm1728, %v1677, 0
  %v1742 = vsel %vm1728, %v1678, 0
  %v1745 = vsel %vm1728, %v1679, 0
  %1747 = vmatprep.subr.mxu0 0.0
  %1748 = vmatpush1.msra.mxu0 0.0
  %1749 = vmatprep.subr.mxu0 0.0
  %1750 = vmatpush1.msra.mxu0 0.0
  %1751 = vmatprep.subr.mxu0 0.0
  %1752 = vmatpush1.msra.mxu0 0.0
  %1753 = vmatprep.subr.mxu0 0.0
  %1754 = vmatpush1.msra.mxu0 0.0
  %1755 = vmatprep.subr.mxu0 0.0
  %1756 = vmatpush1.msra.mxu0 0.0
  %1757 = vmatprep.subr.mxu0 0.0
  %1758 = vmatpush1.msra.mxu0 0.0
  %1759 = vmatprep.subr.mxu0 0.0
  %1760 = vmatpush1.msra.mxu0 0.0
  %1761 = vmatprep.subr.mxu0 0.0
  %1762 = vmatpush1.msra.mxu0 0.0
  %1763 = vmatprep.subr.mxu0 0.0
  %1764 = vmatpush1.msra.mxu0 0.0
  %1765 = vmatprep.subr.mxu0 0.0
  %1766 = vmatpush1.msra.mxu0 0.0
  %1767 = vmatprep.subr.mxu0 0.0
  %1768 = vmatpush1.msra.mxu0 0.0
  %1769 = vmatprep.subr.mxu0 0.0
  %1770 = vmatpush1.msra.mxu0 0.0
  %1771 = vmatprep.subr.mxu0 0.0
  %1772 = vmatpush1.msra.mxu0 %v1673
  %1773 = vmatprep.subr.mxu0 0.0
  %1774 = vmatpush1.msra.mxu0 %v1672
  %1775 = vmatprep.subr.mxu0 0.0
  %1776 = vmatpush1.msra.mxu0 %v1671
  %1777 = vmatprep.subr.mxu0 0.0
  %1778 = vmatpush1.msra.mxu0 %v1670
  %1779 = vmatprep.subr.mxu0 0.0
  %1780 = vmatpush2.msra.mxu0 0.0
  %1781 = vmatprep.subr.mxu0 0.0
  %1782 = vmatpush2.msra.mxu0 0.0
  %1783 = vmatprep.subr.mxu0 0.0
  %1784 = vmatpush2.msra.mxu0 0.0
  %1785 = vmatprep.subr.mxu0 0.0
  %1786 = vmatpush2.msra.mxu0 0.0
  %1787 = vmatprep.subr.mxu0 0.0
  %1788 = vmatpush2.msra.mxu0 0.0
  %1789 = vmatprep.subr.mxu0 0.0
  %1790 = vmatpush2.msra.mxu0 0.0
  %1791 = vmatprep.subr.mxu0 0.0
  %1792 = vmatpush2.msra.mxu0 0.0
  %1793 = vmatprep.subr.mxu0 0.0
  %1794 = vmatpush2.msra.mxu0 0.0
  %1795 = vmatprep.subr.mxu0 0.0
  %1796 = vmatpush2.msra.mxu0 0.0
  %1797 = vmatprep.subr.mxu0 0.0
  %1798 = vmatpush2.msra.mxu0 0.0
  %1799 = vmatprep.subr.mxu0 0.0
  %1800 = vmatpush2.msra.mxu0 0.0
  %1801 = vmatprep.subr.mxu0 0.0
  %1802 = vmatpush2.msra.mxu0 0.0
  %1803 = vmatprep.subr.mxu0 0.0
  %1804 = vmatpush2.msra.mxu0 0.0
  %1805 = vmatprep.subr.mxu0 0.0
  %1806 = vmatpush2.msra.mxu0 0.0
  %1807 = vmatprep.subr.mxu0 0.0
  %1808 = vmatpush2.msra.mxu0 0.0
  %1809 = vmatprep.subr.mxu0 0.0
  %1810 = vmatpush2.msra.mxu0 0.0
  %1811 = vmatprep.mubr.f32.mxu0 0.0
  %1812 = vmatmul.mubr.f32.gmra.mxu0 %v1730
  %v1813 = vpop.f32.mrf.mxu0
  %v1814 = vadd.f32 0.0, %v1813
  %v1815 = vpop.f32.mrf.mxu0
  %1816 = vmatprep.mubr.f32.mxu0 0.0
  %1817 = vmatmul.mubr.f32.gmra.mxu0 %v1733
  %v1818 = vpop.f32.mrf.mxu0
  %v1819 = vadd.f32 0.0, %v1818
  %v1820 = vpop.f32.mrf.mxu0
  %1821 = vmatprep.mubr.f32.mxu0 0.0
  %1822 = vmatmul.mubr.f32.gmra.mxu0 %v1736
  %v1823 = vpop.f32.mrf.mxu0
  %v1824 = vadd.f32 0.0, %v1823
  %v1825 = vpop.f32.mrf.mxu0
  %1826 = vmatprep.mubr.f32.mxu0 0.0
  %1827 = vmatmul.mubr.f32.gmra.mxu0 %v1739
  %v1828 = vpop.f32.mrf.mxu0
  %v1829 = vadd.f32 0.0, %v1828
  %v1830 = vpop.f32.mrf.mxu0
  %1831 = vmatprep.mubr.f32.mxu0 0.0
  %1832 = vmatmul.mubr.f32.gmra.mxu0 %v1742
  %v1833 = vpop.f32.mrf.mxu0
  %v1834 = vadd.f32 0.0, %v1833
  %v1835 = vpop.f32.mrf.mxu0
  %1836 = vmatprep.mubr.f32.mxu0 0.0
  %1837 = vmatmul.mubr.f32.gmra.mxu0 %v1745
  %v1838 = vpop.f32.mrf.mxu0
  %v1839 = vadd.f32 0.0, %v1838
  %v1840 = vpop.f32.mrf.mxu0
  %1841 = vdwg.mxu0
  %1842 = vmatprep.subr.mxu0 0.0
  %1843 = vmatpush1.msra.mxu0 %v1711
  %1844 = vmatprep.subr.mxu0 0.0
  %1845 = vmatpush1.msra.mxu0 %v1710
  %1846 = vmatprep.subr.mxu0 0.0
  %1847 = vmatpush1.msra.mxu0 %v1709
  %1848 = vmatprep.subr.mxu0 0.0
  %1849 = vmatpush1.msra.mxu0 %v1708
  %1850 = vmatprep.subr.mxu0 0.0
  %1851 = vmatpush1.msra.mxu0 %v1707
  %1852 = vmatprep.subr.mxu0 0.0
  %1853 = vmatpush1.msra.mxu0 %v1706
  %1854 = vmatprep.subr.mxu0 0.0
  %1855 = vmatpush1.msra.mxu0 %v1705
  %1856 = vmatprep.subr.mxu0 0.0
  %1857 = vmatpush1.msra.mxu0 %v1704
  %1858 = vmatprep.subr.mxu0 0.0
  %1859 = vmatpush1.msra.mxu0 %v1703
  %1860 = vmatprep.subr.mxu0 0.0
  %1861 = vmatpush1.msra.mxu0 %v1702
  %1862 = vmatprep.subr.mxu0 0.0
  %1863 = vmatpush1.msra.mxu0 %v1701
  %1864 = vmatprep.subr.mxu0 0.0
  %1865 = vmatpush1.msra.mxu0 %v1700
  %1866 = vmatprep.subr.mxu0 0.0
  %1867 = vmatpush1.msra.mxu0 %v1699
  %1868 = vmatprep.subr.mxu0 0.0
  %1869 = vmatpush1.msra.mxu0 %v1698
  %1870 = vmatprep.subr.mxu0 0.0
  %1871 = vmatpush1.msra.mxu0 %v1697
  %1872 = vmatprep.subr.mxu0 0.0
  %1873 = vmatpush1.msra.mxu0 %v1696
  %1874 = vmatprep.subr.mxu0 0.0
  %1875 = vmatpush2.msra.mxu0 0.0
  %1876 = vmatprep.subr.mxu0 0.0
  %1877 = vmatpush2.msra.mxu0 0.0
  %1878 = vmatprep.subr.mxu0 0.0
  %1879 = vmatpush2.msra.mxu0 0.0
  %1880 = vmatprep.subr.mxu0 0.0
  %1881 = vmatpush2.msra.mxu0 0.0
  %1882 = vmatprep.subr.mxu0 0.0
  %1883 = vmatpush2.msra.mxu0 0.0
  %1884 = vmatprep.subr.mxu0 0.0
  %1885 = vmatpush2.msra.mxu0 0.0
  %1886 = vmatprep.subr.mxu0 0.0
  %1887 = vmatpush2.msra.mxu0 0.0
  %1888 = vmatprep.subr.mxu0 0.0
  %1889 = vmatpush2.msra.mxu0 0.0
  %1890 = vmatprep.subr.mxu0 0.0
  %1891 = vmatpush2.msra.mxu0 0.0
  %1892 = vmatprep.subr.mxu0 0.0
  %1893 = vmatpush2.msra.mxu0 0.0
  %1894 = vmatprep.subr.mxu0 0.0
  %1895 = vmatpush2.msra.mxu0 0.0
  %1896 = vmatprep.subr.mxu0 0.0
  %1897 = vmatpush2.msra.mxu0 0.0
  %1898 = vmatprep.subr.mxu0 0.0
  %1899 = vmatpush2.msra.mxu0 0.0
  %1900 = vmatprep.subr.mxu0 0.0
  %1901 = vmatpush2.msra.mxu0 0.0
  %1902 = vmatprep.subr.mxu0 0.0
  %1903 = vmatpush2.msra.mxu0 0.0
  %1904 = vmatprep.subr.mxu0 0.0
  %1905 = vmatpush2.msra.mxu0 0.0
  %1906 = vmatprep.mubr.f32.mxu0 0.0
  %1907 = vmatmul.mubr.f32.gmra.mxu0 %v1824
  %v1908 = vpop.f32.mrf.mxu0
  %v1909 = vadd.f32 0.0, %v1908
  %v1910 = vpop.f32.mrf.mxu0
  %1911 = vmatprep.mubr.f32.mxu0 0.0
  %1912 = vmatmul.mubr.f32.gmra.mxu0 %v1829
  %v1913 = vpop.f32.mrf.mxu0
  %v1914 = vadd.f32 0.0, %v1913
  %v1915 = vpop.f32.mrf.mxu0
  %1916 = vdwg.mxu0
  %1917 = vmatprep.subr.mxu0 0.0
  %1918 = vmatpush1.msra.mxu0 %v1695
  %1919 = vmatprep.subr.mxu0 0.0
  %1920 = vmatpush1.msra.mxu0 %v1694
  %1921 = vmatprep.subr.mxu0 0.0
  %1922 = vmatpush1.msra.mxu0 %v1693
  %1923 = vmatprep.subr.mxu0 0.0
  %1924 = vmatpush1.msra.mxu0 %v1692
  %1925 = vmatprep.subr.mxu0 0.0
  %1926 = vmatpush1.msra.mxu0 %v1691
  %1927 = vmatprep.subr.mxu0 0.0
  %1928 = vmatpush1.msra.mxu0 %v1690
  %1929 = vmatprep.subr.mxu0 0.0
  %1930 = vmatpush1.msra.mxu0 %v1689
  %1931 = vmatprep.subr.mxu0 0.0
  %1932 = vmatpush1.msra.mxu0 %v1688
  %1933 = vmatprep.subr.mxu0 0.0
  %1934 = vmatpush1.msra.mxu0 %v1687
  %1935 = vmatprep.subr.mxu0 0.0
  %1936 = vmatpush1.msra.mxu0 %v1686
  %1937 = vmatprep.subr.mxu0 0.0
  %1938 = vmatpush1.msra.mxu0 %v1685
  %1939 = vmatprep.subr.mxu0 0.0
  %1940 = vmatpush1.msra.mxu0 %v1684
  %1941 = vmatprep.subr.mxu0 0.0
  %1942 = vmatpush1.msra.mxu0 %v1683
  %1943 = vmatprep.subr.mxu0 0.0
  %1944 = vmatpush1.msra.mxu0 %v1682
  %1945 = vmatprep.subr.mxu0 0.0
  %1946 = vmatpush1.msra.mxu0 %v1681
  %1947 = vmatprep.subr.mxu0 0.0
  %1948 = vmatpush1.msra.mxu0 %v1680
  %1949 = vmatprep.subr.mxu0 0.0
  %1950 = vmatpush2.msra.mxu0 0.0
  %1951 = vmatprep.subr.mxu0 0.0
  %1952 = vmatpush2.msra.mxu0 0.0
  %1953 = vmatprep.subr.mxu0 0.0
  %1954 = vmatpush2.msra.mxu0 0.0
  %1955 = vmatprep.subr.mxu0 0.0
  %1956 = vmatpush2.msra.mxu0 0.0
  %1957 = vmatprep.subr.mxu0 0.0
  %1958 = vmatpush2.msra.mxu0 0.0
  %1959 = vmatprep.subr.mxu0 0.0
  %1960 = vmatpush2.msra.mxu0 0.0
  %1961 = vmatprep.subr.mxu0 0.0
  %1962 = vmatpush2.msra.mxu0 0.0
  %1963 = vmatprep.subr.mxu0 0.0
  %1964 = vmatpush2.msra.mxu0 0.0
  %1965 = vmatprep.subr.mxu0 0.0
  %1966 = vmatpush2.msra.mxu0 0.0
  %1967 = vmatprep.subr.mxu0 0.0
  %1968 = vmatpush2.msra.mxu0 0.0
  %1969 = vmatprep.subr.mxu0 0.0
  %1970 = vmatpush2.msra.mxu0 0.0
  %1971 = vmatprep.subr.mxu0 0.0
  %1972 = vmatpush2.msra.mxu0 0.0
  %1973 = vmatprep.subr.mxu0 0.0
  %1974 = vmatpush2.msra.mxu0 0.0
  %1975 = vmatprep.subr.mxu0 0.0
  %1976 = vmatpush2.msra.mxu0 0.0
  %1977 = vmatprep.subr.mxu0 0.0
  %1978 = vmatpush2.msra.mxu0 0.0
  %1979 = vmatprep.subr.mxu0 0.0
  %1980 = vmatpush2.msra.mxu0 0.0
  %1981 = vmatprep.mubr.f32.mxu0 0.0
  %1982 = vmatmul.mubr.f32.gmra.mxu0 %v1814
  %v1983 = vpop.f32.mrf.mxu0
  %v1984 = vadd.f32 %v1909, %v1983
  %v1985 = vpop.f32.mrf.mxu0
  %1986 = vmatprep.mubr.f32.mxu0 0.0
  %1987 = vmatmul.mubr.f32.gmra.mxu0 %v1819
  %v1988 = vpop.f32.mrf.mxu0
  %v1989 = vadd.f32 %v1914, %v1988
  %v1990 = vpop.f32.mrf.mxu0
  %1991 = vdwg.mxu0
  %1992 = vmatprep.subr.mxu0 0.0
  %1993 = vmatpush1.msra.mxu0 %v1727
  %1994 = vmatprep.subr.mxu0 0.0
  %1995 = vmatpush1.msra.mxu0 %v1726
  %1996 = vmatprep.subr.mxu0 0.0
  %1997 = vmatpush1.msra.mxu0 %v1725
  %1998 = vmatprep.subr.mxu0 0.0
  %1999 = vmatpush1.msra.mxu0 %v1724
  %2000 = vmatprep.subr.mxu0 0.0
  %2001 = vmatpush1.msra.mxu0 %v1723
  %2002 = vmatprep.subr.mxu0 0.0
  %2003 = vmatpush1.msra.mxu0 %v1722
  %2004 = vmatprep.subr.mxu0 0.0
  %2005 = vmatpush1.msra.mxu0 %v1721
  %2006 = vmatprep.subr.mxu0 0.0
  %2007 = vmatpush1.msra.mxu0 %v1720
  %2008 = vmatprep.subr.mxu0 0.0
  %2009 = vmatpush1.msra.mxu0 %v1719
  %2010 = vmatprep.subr.mxu0 0.0
  %2011 = vmatpush1.msra.mxu0 %v1718
  %2012 = vmatprep.subr.mxu0 0.0
  %2013 = vmatpush1.msra.mxu0 %v1717
  %2014 = vmatprep.subr.mxu0 0.0
  %2015 = vmatpush1.msra.mxu0 %v1716
  %2016 = vmatprep.subr.mxu0 0.0
  %2017 = vmatpush1.msra.mxu0 %v1715
  %2018 = vmatprep.subr.mxu0 0.0
  %2019 = vmatpush1.msra.mxu0 %v1714
  %2020 = vmatprep.subr.mxu0 0.0
  %2021 = vmatpush1.msra.mxu0 %v1713
  %2022 = vmatprep.subr.mxu0 0.0
  %2023 = vmatpush1.msra.mxu0 %v1712
  %2024 = vmatprep.subr.mxu0 0.0
  %2025 = vmatpush2.msra.mxu0 0.0
  %2026 = vmatprep.subr.mxu0 0.0
  %2027 = vmatpush2.msra.mxu0 0.0
  %2028 = vmatprep.subr.mxu0 0.0
  %2029 = vmatpush2.msra.mxu0 0.0
  %2030 = vmatprep.subr.mxu0 0.0
  %2031 = vmatpush2.msra.mxu0 0.0
  %2032 = vmatprep.subr.mxu0 0.0
  %2033 = vmatpush2.msra.mxu0 0.0
  %2034 = vmatprep.subr.mxu0 0.0
  %2035 = vmatpush2.msra.mxu0 0.0
  %2036 = vmatprep.subr.mxu0 0.0
  %2037 = vmatpush2.msra.mxu0 0.0
  %2038 = vmatprep.subr.mxu0 0.0
  %2039 = vmatpush2.msra.mxu0 0.0
  %2040 = vmatprep.subr.mxu0 0.0
  %2041 = vmatpush2.msra.mxu0 0.0
  %2042 = vmatprep.subr.mxu0 0.0
  %2043 = vmatpush2.msra.mxu0 0.0
  %2044 = vmatprep.subr.mxu0 0.0
  %2045 = vmatpush2.msra.mxu0 0.0
  %2046 = vmatprep.subr.mxu0 0.0
  %2047 = vmatpush2.msra.mxu0 0.0
  %2048 = vmatprep.subr.mxu0 0.0
  %2049 = vmatpush2.msra.mxu0 0.0
  %2050 = vmatprep.subr.mxu0 0.0
  %2051 = vmatpush2.msra.mxu0 0.0
  %2052 = vmatprep.subr.mxu0 0.0
  %2053 = vmatpush2.msra.mxu0 0.0
  %2054 = vmatprep.subr.mxu0 0.0
  %2055 = vmatpush2.msra.mxu0 0.0
  %2056 = vmatprep.mubr.f32.mxu0 0.0
  %2057 = vmatmul.mubr.f32.gmra.mxu0 %v1834
  %v2058 = vpop.f32.mrf.mxu0
  %v2059 = vadd.f32 0.0, %v2058
  %v2060 = vpop.f32.mrf.mxu0
  %2061 = vmatprep.mubr.f32.mxu0 0.0
  %2062 = vmatmul.mubr.f32.gmra.mxu0 %v1839
  %v2063 = vpop.f32.mrf.mxu0
  %v2064 = vadd.f32 0.0, %v2063
  %v2065 = vpop.f32.mrf.mxu0
  %2066 = vdwg.mxu0
  %v2067 = vadd.f32 %v1984, %v2059
  %v2068 = vadd.f32 %v1989, %v2064
  %v2069 = vld [vmem:[%s11] sm:$0x1]
  %v2070 = vld [vmem:[%s12] sm:$0x1]
  %v2071 = vld [vmem:[%s13] sm:$0xff]
  %v2072 = vld [vmem:[%s13 + $0x8] sm:$0xff]
  %v2073 = vld [vmem:[%s13 + $0x10] sm:$0xff]
  %v2074 = vld [vmem:[%s13 + $0x18] sm:$0xff]
  %v2075 = vld [vmem:[%s13 + $0x20] sm:$0xff]
  %v2076 = vld [vmem:[%s13 + $0x28] sm:$0xff]
  %v2077 = vld [vmem:[%s13 + $0x30] sm:$0xff]
  %v2078 = vld [vmem:[%s13 + $0x38] sm:$0xff]
  %v2079 = vld [vmem:[%s13 + $0x40] sm:$0xff]
  %v2080 = vld [vmem:[%s13 + $0x48] sm:$0xff]
  %v2081 = vld [vmem:[%s13 + $0x50] sm:$0xff]
  %v2082 = vld [vmem:[%s13 + $0x58] sm:$0xff]
  %v2083 = vld [vmem:[%s13 + $0x60] sm:$0xff]
  %v2084 = vld [vmem:[%s13 + $0x68] sm:$0xff]
  %v2085 = vld [vmem:[%s13 + $0x70] sm:$0xff]
  %v2086 = vld [vmem:[%s13 + $0x78] sm:$0xff]
  %v2087 = vld [vmem:[%s14] sm:$0xff]
  %v2088 = vld [vmem:[%s14 + $0x8] sm:$0xff]
  %v2089 = vadd.f32 %v2067, %v2068
  %v2090 = vrot.slane %v2089, 4
  %v2091 = vadd.f32 %v2089, %v2090
  %v2092 = vrot.slane %v2091, 2
  %v2093 = vadd.f32 %v2091, %v2092
  %v2094 = vrot.slane %v2093, 1
  %v2095 = vadd.f32 %v2093, %v2094
  %v2096 = vmul.f32 %v2067, %v2067
  %v2097 = vmul.f32 %v2068, %v2068
  %v2098 = vadd.f32 %v2096, %v2097
  %v2099 = vrot.slane %v2098, 4
  %v2100 = vadd.f32 %v2098, %v2099
  %v2101 = vrot.slane %v2100, 2
  %v2102 = vadd.f32 %v2100, %v2101
  %v2103 = vrot.slane %v2102, 1
  %v2104 = vadd.f32 %v2102, %v2103
  %2105 = vmatprep.subr.mxu0 0.0
  %2106 = vmatpush1.msra.mxu0 %v2086
  %2107 = vmatprep.subr.mxu0 0.0
  %2108 = vmatpush1.msra.mxu0 %v2085
  %2109 = vmatprep.subr.mxu0 0.0
  %2110 = vmatpush1.msra.mxu0 %v2084
  %2111 = vmatprep.subr.mxu0 0.0
  %2112 = vmatpush1.msra.mxu0 %v2083
  %2113 = vmatprep.subr.mxu0 0.0
  %2114 = vmatpush1.msra.mxu0 %v2082
  %2115 = vmatprep.subr.mxu0 0.0
  %2116 = vmatpush1.msra.mxu0 %v2081
  %2117 = vmatprep.subr.mxu0 0.0
  %2118 = vmatpush1.msra.mxu0 %v2080
  %2119 = vmatprep.subr.mxu0 0.0
  %2120 = vmatpush1.msra.mxu0 %v2079
  %2121 = vmatprep.subr.mxu0 0.0
  %2122 = vmatpush1.msra.mxu0 %v2078
  %2123 = vmatprep.subr.mxu0 0.0
  %2124 = vmatpush1.msra.mxu0 %v2077
  %2125 = vmatprep.subr.mxu0 0.0
  %2126 = vmatpush1.msra.mxu0 %v2076
  %2127 = vmatprep.subr.mxu0 0.0
  %2128 = vmatpush1.msra.mxu0 %v2075
  %2129 = vmatprep.subr.mxu0 0.0
  %2130 = vmatpush1.msra.mxu0 %v2074
  %2131 = vmatprep.subr.mxu0 0.0
  %2132 = vmatpush1.msra.mxu0 %v2073
  %2133 = vmatprep.subr.mxu0 0.0
  %2134 = vmatpush1.msra.mxu0 %v2072
  %2135 = vmatprep.subr.mxu0 0.0
  %2136 = vmatpush1.msra.mxu0 %v2071
  %2137 = vmatprep.subr.mxu0 0.0
  %2138 = vmatpush2.msra.mxu0 0.0
  %2139 = vmatprep.subr.mxu0 0.0
  %2140 = vmatpush2.msra.mxu0 0.0
  %2141 = vmatprep.subr.mxu0 0.0
  %2142 = vmatpush2.msra.mxu0 0.0
  %2143 = vmatprep.subr.mxu0 0.0
  %2144 = vmatpush2.msra.mxu0 0.0
  %2145 = vmatprep.subr.mxu0 0.0
  %2146 = vmatpush2.msra.mxu0 0.0
  %2147 = vmatprep.subr.mxu0 0.0
  %2148 = vmatpush2.msra.mxu0 0.0
  %2149 = vmatprep.subr.mxu0 0.0
  %2150 = vmatpush2.msra.mxu0 0.0
  %2151 = vmatprep.subr.mxu0 0.0
  %2152 = vmatpush2.msra.mxu0 0.0
  %2153 = vmatprep.subr.mxu0 0.0
  %2154 = vmatpush2.msra.mxu0 0.0
  %2155 = vmatprep.subr.mxu0 0.0
  %2156 = vmatpush2.msra.mxu0 0.0
  %2157 = vmatprep.subr.mxu0 0.0
  %2158 = vmatpush2.msra.mxu0 0.0
  %2159 = vmatprep.subr.mxu0 0.0
  %2160 = vmatpush2.msra.mxu0 0.0
  %2161 = vmatprep.subr.mxu0 0.0
  %2162 = vmatpush2.msra.mxu0 0.0
  %2163 = vmatprep.subr.mxu0 0.0
  %2164 = vmatpush2.msra.mxu0 0.0
  %2165 = vmatprep.subr.mxu0 0.0
  %2166 = vmatpush2.msra.mxu0 0.0
  %2167 = vmatprep.subr.mxu0 0.0
  %2168 = vmatpush2.msra.mxu0 0.0
  %2169 = vmatprep.mubr.f32.mxu0 0.0
  %2170 = vmatmul.mubr.f32.gmra.mxu0 %v2095
  %v2171 = vpop.f32.mrf.mxu0
  %v2172 = vadd.f32 0.0, %v2171
  %v2173 = vpop.f32.mrf.mxu0
  %2174 = vdwg.mxu0
  %2175 = vmatprep.subr.mxu0 0.0
  %2176 = vmatpush1.msra.mxu0 %v2086
  %2177 = vmatprep.subr.mxu0 0.0
  %2178 = vmatpush1.msra.mxu0 %v2085
  %2179 = vmatprep.subr.mxu0 0.0
  %2180 = vmatpush1.msra.mxu0 %v2084
  %2181 = vmatprep.subr.mxu0 0.0
  %2182 = vmatpush1.msra.mxu0 %v2083
  %2183 = vmatprep.subr.mxu0 0.0
  %2184 = vmatpush1.msra.mxu0 %v2082
  %2185 = vmatprep.subr.mxu0 0.0
  %2186 = vmatpush1.msra.mxu0 %v2081
  %2187 = vmatprep.subr.mxu0 0.0
  %2188 = vmatpush1.msra.mxu0 %v2080
  %2189 = vmatprep.subr.mxu0 0.0
  %2190 = vmatpush1.msra.mxu0 %v2079
  %2191 = vmatprep.subr.mxu0 0.0
  %2192 = vmatpush1.msra.mxu0 %v2078
  %2193 = vmatprep.subr.mxu0 0.0
  %2194 = vmatpush1.msra.mxu0 %v2077
  %2195 = vmatprep.subr.mxu0 0.0
  %2196 = vmatpush1.msra.mxu0 %v2076
  %2197 = vmatprep.subr.mxu0 0.0
  %2198 = vmatpush1.msra.mxu0 %v2075
  %2199 = vmatprep.subr.mxu0 0.0
  %2200 = vmatpush1.msra.mxu0 %v2074
  %2201 = vmatprep.subr.mxu0 0.0
  %2202 = vmatpush1.msra.mxu0 %v2073
  %2203 = vmatprep.subr.mxu0 0.0
  %2204 = vmatpush1.msra.mxu0 %v2072
  %2205 = vmatprep.subr.mxu0 0.0
  %2206 = vmatpush1.msra.mxu0 %v2071
  %2207 = vmatprep.subr.mxu0 0.0
  %2208 = vmatpush2.msra.mxu0 0.0
  %2209 = vmatprep.subr.mxu0 0.0
  %2210 = vmatpush2.msra.mxu0 0.0
  %2211 = vmatprep.subr.mxu0 0.0
  %2212 = vmatpush2.msra.mxu0 0.0
  %2213 = vmatprep.subr.mxu0 0.0
  %2214 = vmatpush2.msra.mxu0 0.0
  %2215 = vmatprep.subr.mxu0 0.0
  %2216 = vmatpush2.msra.mxu0 0.0
  %2217 = vmatprep.subr.mxu0 0.0
  %2218 = vmatpush2.msra.mxu0 0.0
  %2219 = vmatprep.subr.mxu0 0.0
  %2220 = vmatpush2.msra.mxu0 0.0
  %2221 = vmatprep.subr.mxu0 0.0
  %2222 = vmatpush2.msra.mxu0 0.0
  %2223 = vmatprep.subr.mxu0 0.0
  %2224 = vmatpush2.msra.mxu0 0.0
  %2225 = vmatprep.subr.mxu0 0.0
  %2226 = vmatpush2.msra.mxu0 0.0
  %2227 = vmatprep.subr.mxu0 0.0
  %2228 = vmatpush2.msra.mxu0 0.0
  %2229 = vmatprep.subr.mxu0 0.0
  %2230 = vmatpush2.msra.mxu0 0.0
  %2231 = vmatprep.subr.mxu0 0.0
  %2232 = vmatpush2.msra.mxu0 0.0
  %2233 = vmatprep.subr.mxu0 0.0
  %2234 = vmatpush2.msra.mxu0 0.0
  %2235 = vmatprep.subr.mxu0 0.0
  %2236 = vmatpush2.msra.mxu0 0.0
  %2237 = vmatprep.subr.mxu0 0.0
  %2238 = vmatpush2.msra.mxu0 0.0
  %2239 = vmatprep.mubr.f32.mxu0 0.0
  %2240 = vmatmul.mubr.f32.gmra.mxu0 %v2104
  %v2241 = vpop.f32.mrf.mxu0
  %v2242 = vadd.f32 0.0, %v2241
  %v2243 = vpop.f32.mrf.mxu0
  %2244 = vdwg.mxu0
  %v2245 = vrcp.pop 128.0
  %v2246 = vmul.f32 %v2172, %v2245
  %v2247 = vmul.f32 %v2242, %v2245
  %v2248 = vmul.f32 %v2246, %v2246
  %v2249 = vsub.f32 %v2247, %v2248
  %v2250 = vmax.f32 %v2249, 0.0
  %v2251 = vadd.f32 %v2250, 1e-05
  %v2252 = vrsqrt.pop %v2251
  %v2253 = vmul.f32 %v2069, %v2252
  %v2254 = vmul.f32 %v2246, %v2253
  %v2255 = vsub.f32 %v2070, %v2254
  %vm2256 = vcmask 130048
  %v2258 = vsel %vm2256, %v2253, 0
  %2260 = vmatprep.subr.mxu0 0.0
  %2261 = vmatpush1.msra.mxu0 0.0
  %2262 = vmatprep.subr.mxu0 0.0
  %2263 = vmatpush1.msra.mxu0 0.0
  %2264 = vmatprep.subr.mxu0 0.0
  %2265 = vmatpush1.msra.mxu0 0.0
  %2266 = vmatprep.subr.mxu0 0.0
  %2267 = vmatpush1.msra.mxu0 0.0
  %2268 = vmatprep.subr.mxu0 0.0
  %2269 = vmatpush1.msra.mxu0 0.0
  %2270 = vmatprep.subr.mxu0 0.0
  %2271 = vmatpush1.msra.mxu0 0.0
  %2272 = vmatprep.subr.mxu0 0.0
  %2273 = vmatpush1.msra.mxu0 0.0
  %2274 = vmatprep.subr.mxu0 0.0
  %2275 = vmatpush1.msra.mxu0 0.0
  %2276 = vmatprep.subr.mxu0 0.0
  %2277 = vmatpush1.msra.mxu0 0.0
  %2278 = vmatprep.subr.mxu0 0.0
  %2279 = vmatpush1.msra.mxu0 0.0
  %2280 = vmatprep.subr.mxu0 0.0
  %2281 = vmatpush1.msra.mxu0 0.0
  %2282 = vmatprep.subr.mxu0 0.0
  %2283 = vmatpush1.msra.mxu0 0.0
  %2284 = vmatprep.subr.mxu0 0.0
  %2285 = vmatpush1.msra.mxu0 0.0
  %2286 = vmatprep.subr.mxu0 0.0
  %2287 = vmatpush1.msra.mxu0 0.0
  %2288 = vmatprep.subr.mxu0 0.0
  %2289 = vmatpush1.msra.mxu0 %v2088
  %2290 = vmatprep.subr.mxu0 0.0
  %2291 = vmatpush1.msra.mxu0 %v2087
  %2292 = vmatprep.subr.mxu0 0.0
  %2293 = vmatpush2.msra.mxu0 0.0
  %2294 = vmatprep.subr.mxu0 0.0
  %2295 = vmatpush2.msra.mxu0 0.0
  %2296 = vmatprep.subr.mxu0 0.0
  %2297 = vmatpush2.msra.mxu0 0.0
  %2298 = vmatprep.subr.mxu0 0.0
  %2299 = vmatpush2.msra.mxu0 0.0
  %2300 = vmatprep.subr.mxu0 0.0
  %2301 = vmatpush2.msra.mxu0 0.0
  %2302 = vmatprep.subr.mxu0 0.0
  %2303 = vmatpush2.msra.mxu0 0.0
  %2304 = vmatprep.subr.mxu0 0.0
  %2305 = vmatpush2.msra.mxu0 0.0
  %2306 = vmatprep.subr.mxu0 0.0
  %2307 = vmatpush2.msra.mxu0 0.0
  %2308 = vmatprep.subr.mxu0 0.0
  %2309 = vmatpush2.msra.mxu0 0.0
  %2310 = vmatprep.subr.mxu0 0.0
  %2311 = vmatpush2.msra.mxu0 0.0
  %2312 = vmatprep.subr.mxu0 0.0
  %2313 = vmatpush2.msra.mxu0 0.0
  %2314 = vmatprep.subr.mxu0 0.0
  %2315 = vmatpush2.msra.mxu0 0.0
  %2316 = vmatprep.subr.mxu0 0.0
  %2317 = vmatpush2.msra.mxu0 0.0
  %2318 = vmatprep.subr.mxu0 0.0
  %2319 = vmatpush2.msra.mxu0 0.0
  %2320 = vmatprep.subr.mxu0 0.0
  %2321 = vmatpush2.msra.mxu0 0.0
  %2322 = vmatprep.subr.mxu0 0.0
  %2323 = vmatpush2.msra.mxu0 0.0
  %2324 = vmatprep.mubr.f32.mxu0 0.0
  %2325 = vmatmul.mubr.f32.gmra.mxu0 %v2258
  %v2326 = vpop.f32.mrf.mxu0
  %v2327 = vadd.f32 0.0, %v2326
  %v2328 = vpop.f32.mrf.mxu0
  %2329 = vdwg.mxu0
  %v2331 = vsel %vm2256, %v2255, 0
  %2333 = vmatprep.subr.mxu0 0.0
  %2334 = vmatpush1.msra.mxu0 0.0
  %2335 = vmatprep.subr.mxu0 0.0
  %2336 = vmatpush1.msra.mxu0 0.0
  %2337 = vmatprep.subr.mxu0 0.0
  %2338 = vmatpush1.msra.mxu0 0.0
  %2339 = vmatprep.subr.mxu0 0.0
  %2340 = vmatpush1.msra.mxu0 0.0
  %2341 = vmatprep.subr.mxu0 0.0
  %2342 = vmatpush1.msra.mxu0 0.0
  %2343 = vmatprep.subr.mxu0 0.0
  %2344 = vmatpush1.msra.mxu0 0.0
  %2345 = vmatprep.subr.mxu0 0.0
  %2346 = vmatpush1.msra.mxu0 0.0
  %2347 = vmatprep.subr.mxu0 0.0
  %2348 = vmatpush1.msra.mxu0 0.0
  %2349 = vmatprep.subr.mxu0 0.0
  %2350 = vmatpush1.msra.mxu0 0.0
  %2351 = vmatprep.subr.mxu0 0.0
  %2352 = vmatpush1.msra.mxu0 0.0
  %2353 = vmatprep.subr.mxu0 0.0
  %2354 = vmatpush1.msra.mxu0 0.0
  %2355 = vmatprep.subr.mxu0 0.0
  %2356 = vmatpush1.msra.mxu0 0.0
  %2357 = vmatprep.subr.mxu0 0.0
  %2358 = vmatpush1.msra.mxu0 0.0
  %2359 = vmatprep.subr.mxu0 0.0
  %2360 = vmatpush1.msra.mxu0 0.0
  %2361 = vmatprep.subr.mxu0 0.0
  %2362 = vmatpush1.msra.mxu0 %v2088
  %2363 = vmatprep.subr.mxu0 0.0
  %2364 = vmatpush1.msra.mxu0 %v2087
  %2365 = vmatprep.subr.mxu0 0.0
  %2366 = vmatpush2.msra.mxu0 0.0
  %2367 = vmatprep.subr.mxu0 0.0
  %2368 = vmatpush2.msra.mxu0 0.0
  %2369 = vmatprep.subr.mxu0 0.0
  %2370 = vmatpush2.msra.mxu0 0.0
  %2371 = vmatprep.subr.mxu0 0.0
  %2372 = vmatpush2.msra.mxu0 0.0
  %2373 = vmatprep.subr.mxu0 0.0
  %2374 = vmatpush2.msra.mxu0 0.0
  %2375 = vmatprep.subr.mxu0 0.0
  %2376 = vmatpush2.msra.mxu0 0.0
  %2377 = vmatprep.subr.mxu0 0.0
  %2378 = vmatpush2.msra.mxu0 0.0
  %2379 = vmatprep.subr.mxu0 0.0
  %2380 = vmatpush2.msra.mxu0 0.0
  %2381 = vmatprep.subr.mxu0 0.0
  %2382 = vmatpush2.msra.mxu0 0.0
  %2383 = vmatprep.subr.mxu0 0.0
  %2384 = vmatpush2.msra.mxu0 0.0
  %2385 = vmatprep.subr.mxu0 0.0
  %2386 = vmatpush2.msra.mxu0 0.0
  %2387 = vmatprep.subr.mxu0 0.0
  %2388 = vmatpush2.msra.mxu0 0.0
  %2389 = vmatprep.subr.mxu0 0.0
  %2390 = vmatpush2.msra.mxu0 0.0
  %2391 = vmatprep.subr.mxu0 0.0
  %2392 = vmatpush2.msra.mxu0 0.0
  %2393 = vmatprep.subr.mxu0 0.0
  %2394 = vmatpush2.msra.mxu0 0.0
  %2395 = vmatprep.subr.mxu0 0.0
  %2396 = vmatpush2.msra.mxu0 0.0
  %2397 = vmatprep.mubr.f32.mxu0 0.0
  %2398 = vmatmul.mubr.f32.gmra.mxu0 %v2331
  %v2399 = vpop.f32.mrf.mxu0
  %v2400 = vadd.f32 0.0, %v2399
  %v2401 = vpop.f32.mrf.mxu0
  %2402 = vdwg.mxu0
  %v2403 = vlaneseq
  %v2404 = vshrl.u32 %v2403, 7
  %v2405 = vsub.s32 0, %v2404
  %v2406 = vrot.slane %v2327, %v2405
  %v2407 = vmul.f32 %v2067, %v2406
  %v2408 = vmul.f32 %v2068, %v2406
  %v2409 = vlaneseq
  %v2410 = vshrl.u32 %v2409, 7
  %v2411 = vsub.s32 0, %v2410
  %v2412 = vrot.slane %v2400, %v2411
  %v2413 = vadd.f32 %v2407, %v2412
  %v2414 = vadd.f32 %v2408, %v2412
  %vm2415 = vcmp.gt.f32.partialorder %v2413, 0.0
  %vm2416 = vcmp.gt.f32.partialorder %v2414, 0.0
  %v2417 = vmul.f32 %v2413, 0.2
  %v2418 = vmul.f32 %v2414, 0.2
  %v2419 = vsel %vm2415, %v2413, %v2417
  %v2420 = vsel %vm2416, %v2414, %v2418
  %v2421 = vld [vmem:[%s15] sm:$0xff]
  %v2422 = vld [vmem:[%s15 + $0x8] sm:$0xff]
  %v2423 = vld [vmem:[%s15 + $0x10] sm:$0xff]
  %v2424 = vld [vmem:[%s16] sm:$0xff]
  %v2425 = vld [vmem:[%s16 + $0x8] sm:$0xff]
  %v2426 = vld [vmem:[%s16 + $0x10] sm:$0xff]
  %v2427 = vld [vmem:[%s16 + $0x18] sm:$0xff]
  %v2428 = vld [vmem:[%s16 + $0x20] sm:$0xff]
  %v2429 = vld [vmem:[%s16 + $0x28] sm:$0xff]
  %v2430 = vld [vmem:[%s16 + $0x30] sm:$0xff]
  %v2431 = vld [vmem:[%s16 + $0x38] sm:$0xff]
  %v2432 = vld [vmem:[%s16 + $0x40] sm:$0xff]
  %v2433 = vld [vmem:[%s16 + $0x48] sm:$0xff]
  %v2434 = vld [vmem:[%s16 + $0x50] sm:$0xff]
  %v2435 = vld [vmem:[%s16 + $0x58] sm:$0xff]
  %v2436 = vld [vmem:[%s16 + $0x60] sm:$0xff]
  %v2437 = vld [vmem:[%s16 + $0x68] sm:$0xff]
  %v2438 = vld [vmem:[%s16 + $0x70] sm:$0xff]
  %v2439 = vld [vmem:[%s16 + $0x78] sm:$0xff]
  %v2440 = vld [vmem:[%s16 + $0x80] sm:$0xff]
  %v2441 = vld [vmem:[%s16 + $0x88] sm:$0xff]
  %v2442 = vld [vmem:[%s16 + $0x90] sm:$0xff]
  %v2443 = vld [vmem:[%s16 + $0x98] sm:$0xff]
  %v2444 = vld [vmem:[%s16 + $0xa0] sm:$0xff]
  %v2445 = vld [vmem:[%s16 + $0xa8] sm:$0xff]
  %v2446 = vld [vmem:[%s16 + $0xb0] sm:$0xff]
  %v2447 = vld [vmem:[%s16 + $0xb8] sm:$0xff]
  %v2448 = vld [vmem:[%s16 + $0xc0] sm:$0xff]
  %v2449 = vld [vmem:[%s16 + $0xc8] sm:$0xff]
  %v2450 = vld [vmem:[%s16 + $0xd0] sm:$0xff]
  %v2451 = vld [vmem:[%s16 + $0xd8] sm:$0xff]
  %v2452 = vld [vmem:[%s16 + $0xe0] sm:$0xff]
  %v2453 = vld [vmem:[%s16 + $0xe8] sm:$0xff]
  %v2454 = vld [vmem:[%s16 + $0xf0] sm:$0xff]
  %v2455 = vld [vmem:[%s16 + $0xf8] sm:$0xff]
  %v2456 = vld [vmem:[%s16 + $0x100] sm:$0xff]
  %v2457 = vld [vmem:[%s16 + $0x108] sm:$0xff]
  %v2458 = vld [vmem:[%s16 + $0x110] sm:$0xff]
  %v2459 = vld [vmem:[%s16 + $0x118] sm:$0xff]
  %v2460 = vld [vmem:[%s16 + $0x120] sm:$0xff]
  %v2461 = vld [vmem:[%s16 + $0x128] sm:$0xff]
  %v2462 = vld [vmem:[%s16 + $0x130] sm:$0xff]
  %v2463 = vld [vmem:[%s16 + $0x138] sm:$0xff]
  %v2464 = vld [vmem:[%s16 + $0x140] sm:$0xff]
  %v2465 = vld [vmem:[%s16 + $0x148] sm:$0xff]
  %v2466 = vld [vmem:[%s16 + $0x150] sm:$0xff]
  %v2467 = vld [vmem:[%s16 + $0x158] sm:$0xff]
  %v2468 = vld [vmem:[%s16 + $0x160] sm:$0xff]
  %v2469 = vld [vmem:[%s16 + $0x168] sm:$0xff]
  %v2470 = vld [vmem:[%s16 + $0x170] sm:$0xff]
  %v2471 = vld [vmem:[%s16 + $0x178] sm:$0xff]
  %v2473 = vsel %vm2256, %v2421, 0
  %v2476 = vsel %vm2256, %v2422, 0
  %v2479 = vsel %vm2256, %v2423, 0
  %2481 = vmatprep.subr.mxu0 0.0
  %2482 = vmatpush1.msra.mxu0 0.0
  %2483 = vmatprep.subr.mxu0 0.0
  %2484 = vmatpush1.msra.mxu0 0.0
  %2485 = vmatprep.subr.mxu0 0.0
  %2486 = vmatpush1.msra.mxu0 0.0
  %2487 = vmatprep.subr.mxu0 0.0
  %2488 = vmatpush1.msra.mxu0 0.0
  %2489 = vmatprep.subr.mxu0 0.0
  %2490 = vmatpush1.msra.mxu0 0.0
  %2491 = vmatprep.subr.mxu0 0.0
  %2492 = vmatpush1.msra.mxu0 0.0
  %2493 = vmatprep.subr.mxu0 0.0
  %2494 = vmatpush1.msra.mxu0 0.0
  %2495 = vmatprep.subr.mxu0 0.0
  %2496 = vmatpush1.msra.mxu0 0.0
  %2497 = vmatprep.subr.mxu0 0.0
  %2498 = vmatpush1.msra.mxu0 0.0
  %2499 = vmatprep.subr.mxu0 0.0
  %2500 = vmatpush1.msra.mxu0 0.0
  %2501 = vmatprep.subr.mxu0 0.0
  %2502 = vmatpush1.msra.mxu0 0.0
  %2503 = vmatprep.subr.mxu0 0.0
  %2504 = vmatpush1.msra.mxu0 0.0
  %2505 = vmatprep.subr.mxu0 0.0
  %2506 = vmatpush1.msra.mxu0 0.0
  %2507 = vmatprep.subr.mxu0 0.0
  %2508 = vmatpush1.msra.mxu0 0.0
  %2509 = vmatprep.subr.mxu0 0.0
  %2510 = vmatpush1.msra.mxu0 %v2420
  %2511 = vmatprep.subr.mxu0 0.0
  %2512 = vmatpush1.msra.mxu0 %v2419
  %2513 = vmatprep.subr.mxu0 0.0
  %2514 = vmatpush2.msra.mxu0 0.0
  %2515 = vmatprep.subr.mxu0 0.0
  %2516 = vmatpush2.msra.mxu0 0.0
  %2517 = vmatprep.subr.mxu0 0.0
  %2518 = vmatpush2.msra.mxu0 0.0
  %2519 = vmatprep.subr.mxu0 0.0
  %2520 = vmatpush2.msra.mxu0 0.0
  %2521 = vmatprep.subr.mxu0 0.0
  %2522 = vmatpush2.msra.mxu0 0.0
  %2523 = vmatprep.subr.mxu0 0.0
  %2524 = vmatpush2.msra.mxu0 0.0
  %2525 = vmatprep.subr.mxu0 0.0
  %2526 = vmatpush2.msra.mxu0 0.0
  %2527 = vmatprep.subr.mxu0 0.0
  %2528 = vmatpush2.msra.mxu0 0.0
  %2529 = vmatprep.subr.mxu0 0.0
  %2530 = vmatpush2.msra.mxu0 0.0
  %2531 = vmatprep.subr.mxu0 0.0
  %2532 = vmatpush2.msra.mxu0 0.0
  %2533 = vmatprep.subr.mxu0 0.0
  %2534 = vmatpush2.msra.mxu0 0.0
  %2535 = vmatprep.subr.mxu0 0.0
  %2536 = vmatpush2.msra.mxu0 0.0
  %2537 = vmatprep.subr.mxu0 0.0
  %2538 = vmatpush2.msra.mxu0 0.0
  %2539 = vmatprep.subr.mxu0 0.0
  %2540 = vmatpush2.msra.mxu0 0.0
  %2541 = vmatprep.subr.mxu0 0.0
  %2542 = vmatpush2.msra.mxu0 0.0
  %2543 = vmatprep.subr.mxu0 0.0
  %2544 = vmatpush2.msra.mxu0 0.0
  %2545 = vmatprep.mubr.f32.mxu0 0.0
  %2546 = vmatmul.mubr.f32.gmra.mxu0 %v2473
  %v2547 = vpop.f32.mrf.mxu0
  %v2548 = vadd.f32 0.0, %v2547
  %v2549 = vpop.f32.mrf.mxu0
  %2550 = vmatprep.mubr.f32.mxu0 0.0
  %2551 = vmatmul.mubr.f32.gmra.mxu0 %v2476
  %v2552 = vpop.f32.mrf.mxu0
  %v2553 = vadd.f32 0.0, %v2552
  %v2554 = vpop.f32.mrf.mxu0
  %2555 = vmatprep.mubr.f32.mxu0 0.0
  %2556 = vmatmul.mubr.f32.gmra.mxu0 %v2479
  %v2557 = vpop.f32.mrf.mxu0
  %v2558 = vadd.f32 0.0, %v2557
  %v2559 = vpop.f32.mrf.mxu0
  %2560 = vdwg.mxu0
  %2561 = vmatprep.subr.mxu0 0.0
  %2562 = vmatpush1.msra.mxu0 %v2455
  %2563 = vmatprep.subr.mxu0 0.0
  %2564 = vmatpush1.msra.mxu0 %v2454
  %2565 = vmatprep.subr.mxu0 0.0
  %2566 = vmatpush1.msra.mxu0 %v2453
  %2567 = vmatprep.subr.mxu0 0.0
  %2568 = vmatpush1.msra.mxu0 %v2452
  %2569 = vmatprep.subr.mxu0 0.0
  %2570 = vmatpush1.msra.mxu0 %v2451
  %2571 = vmatprep.subr.mxu0 0.0
  %2572 = vmatpush1.msra.mxu0 %v2450
  %2573 = vmatprep.subr.mxu0 0.0
  %2574 = vmatpush1.msra.mxu0 %v2449
  %2575 = vmatprep.subr.mxu0 0.0
  %2576 = vmatpush1.msra.mxu0 %v2448
  %2577 = vmatprep.subr.mxu0 0.0
  %2578 = vmatpush1.msra.mxu0 %v2447
  %2579 = vmatprep.subr.mxu0 0.0
  %2580 = vmatpush1.msra.mxu0 %v2446
  %2581 = vmatprep.subr.mxu0 0.0
  %2582 = vmatpush1.msra.mxu0 %v2445
  %2583 = vmatprep.subr.mxu0 0.0
  %2584 = vmatpush1.msra.mxu0 %v2444
  %2585 = vmatprep.subr.mxu0 0.0
  %2586 = vmatpush1.msra.mxu0 %v2443
  %2587 = vmatprep.subr.mxu0 0.0
  %2588 = vmatpush1.msra.mxu0 %v2442
  %2589 = vmatprep.subr.mxu0 0.0
  %2590 = vmatpush1.msra.mxu0 %v2441
  %2591 = vmatprep.subr.mxu0 0.0
  %2592 = vmatpush1.msra.mxu0 %v2440
  %2593 = vmatprep.subr.mxu0 0.0
  %2594 = vmatpush2.msra.mxu0 0.0
  %2595 = vmatprep.subr.mxu0 0.0
  %2596 = vmatpush2.msra.mxu0 0.0
  %2597 = vmatprep.subr.mxu0 0.0
  %2598 = vmatpush2.msra.mxu0 0.0
  %2599 = vmatprep.subr.mxu0 0.0
  %2600 = vmatpush2.msra.mxu0 0.0
  %2601 = vmatprep.subr.mxu0 0.0
  %2602 = vmatpush2.msra.mxu0 0.0
  %2603 = vmatprep.subr.mxu0 0.0
  %2604 = vmatpush2.msra.mxu0 0.0
  %2605 = vmatprep.subr.mxu0 0.0
  %2606 = vmatpush2.msra.mxu0 0.0
  %2607 = vmatprep.subr.mxu0 0.0
  %2608 = vmatpush2.msra.mxu0 0.0
  %2609 = vmatprep.subr.mxu0 0.0
  %2610 = vmatpush2.msra.mxu0 0.0
  %2611 = vmatprep.subr.mxu0 0.0
  %2612 = vmatpush2.msra.mxu0 0.0
  %2613 = vmatprep.subr.mxu0 0.0
  %2614 = vmatpush2.msra.mxu0 0.0
  %2615 = vmatprep.subr.mxu0 0.0
  %2616 = vmatpush2.msra.mxu0 0.0
  %2617 = vmatprep.subr.mxu0 0.0
  %2618 = vmatpush2.msra.mxu0 0.0
  %2619 = vmatprep.subr.mxu0 0.0
  %2620 = vmatpush2.msra.mxu0 0.0
  %2621 = vmatprep.subr.mxu0 0.0
  %2622 = vmatpush2.msra.mxu0 0.0
  %2623 = vmatprep.subr.mxu0 0.0
  %2624 = vmatpush2.msra.mxu0 0.0
  %2625 = vmatprep.mubr.f32.mxu0 0.0
  %2626 = vmatmul.mubr.f32.gmra.mxu0 %v2553
  %v2627 = vpop.f32.mrf.mxu0
  %v2628 = vadd.f32 0.0, %v2627
  %v2629 = vpop.f32.mrf.mxu0
  %2630 = vdwg.mxu0
  %2631 = vmatprep.subr.mxu0 0.0
  %2632 = vmatpush1.msra.mxu0 %v2439
  %2633 = vmatprep.subr.mxu0 0.0
  %2634 = vmatpush1.msra.mxu0 %v2438
  %2635 = vmatprep.subr.mxu0 0.0
  %2636 = vmatpush1.msra.mxu0 %v2437
  %2637 = vmatprep.subr.mxu0 0.0
  %2638 = vmatpush1.msra.mxu0 %v2436
  %2639 = vmatprep.subr.mxu0 0.0
  %2640 = vmatpush1.msra.mxu0 %v2435
  %2641 = vmatprep.subr.mxu0 0.0
  %2642 = vmatpush1.msra.mxu0 %v2434
  %2643 = vmatprep.subr.mxu0 0.0
  %2644 = vmatpush1.msra.mxu0 %v2433
  %2645 = vmatprep.subr.mxu0 0.0
  %2646 = vmatpush1.msra.mxu0 %v2432
  %2647 = vmatprep.subr.mxu0 0.0
  %2648 = vmatpush1.msra.mxu0 %v2431
  %2649 = vmatprep.subr.mxu0 0.0
  %2650 = vmatpush1.msra.mxu0 %v2430
  %2651 = vmatprep.subr.mxu0 0.0
  %2652 = vmatpush1.msra.mxu0 %v2429
  %2653 = vmatprep.subr.mxu0 0.0
  %2654 = vmatpush1.msra.mxu0 %v2428
  %2655 = vmatprep.subr.mxu0 0.0
  %2656 = vmatpush1.msra.mxu0 %v2427
  %2657 = vmatprep.subr.mxu0 0.0
  %2658 = vmatpush1.msra.mxu0 %v2426
  %2659 = vmatprep.subr.mxu0 0.0
  %2660 = vmatpush1.msra.mxu0 %v2425
  %2661 = vmatprep.subr.mxu0 0.0
  %2662 = vmatpush1.msra.mxu0 %v2424
  %2663 = vmatprep.subr.mxu0 0.0
  %2664 = vmatpush2.msra.mxu0 0.0
  %2665 = vmatprep.subr.mxu0 0.0
  %2666 = vmatpush2.msra.mxu0 0.0
  %2667 = vmatprep.subr.mxu0 0.0
  %2668 = vmatpush2.msra.mxu0 0.0
  %2669 = vmatprep.subr.mxu0 0.0
  %2670 = vmatpush2.msra.mxu0 0.0
  %2671 = vmatprep.subr.mxu0 0.0
  %2672 = vmatpush2.msra.mxu0 0.0
  %2673 = vmatprep.subr.mxu0 0.0
  %2674 = vmatpush2.msra.mxu0 0.0
  %2675 = vmatprep.subr.mxu0 0.0
  %2676 = vmatpush2.msra.mxu0 0.0
  %2677 = vmatprep.subr.mxu0 0.0
  %2678 = vmatpush2.msra.mxu0 0.0
  %2679 = vmatprep.subr.mxu0 0.0
  %2680 = vmatpush2.msra.mxu0 0.0
  %2681 = vmatprep.subr.mxu0 0.0
  %2682 = vmatpush2.msra.mxu0 0.0
  %2683 = vmatprep.subr.mxu0 0.0
  %2684 = vmatpush2.msra.mxu0 0.0
  %2685 = vmatprep.subr.mxu0 0.0
  %2686 = vmatpush2.msra.mxu0 0.0
  %2687 = vmatprep.subr.mxu0 0.0
  %2688 = vmatpush2.msra.mxu0 0.0
  %2689 = vmatprep.subr.mxu0 0.0
  %2690 = vmatpush2.msra.mxu0 0.0
  %2691 = vmatprep.subr.mxu0 0.0
  %2692 = vmatpush2.msra.mxu0 0.0
  %2693 = vmatprep.subr.mxu0 0.0
  %2694 = vmatpush2.msra.mxu0 0.0
  %2695 = vmatprep.mubr.f32.mxu0 0.0
  %2696 = vmatmul.mubr.f32.gmra.mxu0 %v2548
  %v2697 = vpop.f32.mrf.mxu0
  %v2698 = vadd.f32 %v2628, %v2697
  %v2699 = vpop.f32.mrf.mxu0
  %2700 = vdwg.mxu0
  %2701 = vmatprep.subr.mxu0 0.0
  %2702 = vmatpush1.msra.mxu0 %v2471
  %2703 = vmatprep.subr.mxu0 0.0
  %2704 = vmatpush1.msra.mxu0 %v2470
  %2705 = vmatprep.subr.mxu0 0.0
  %2706 = vmatpush1.msra.mxu0 %v2469
  %2707 = vmatprep.subr.mxu0 0.0
  %2708 = vmatpush1.msra.mxu0 %v2468
  %2709 = vmatprep.subr.mxu0 0.0
  %2710 = vmatpush1.msra.mxu0 %v2467
  %2711 = vmatprep.subr.mxu0 0.0
  %2712 = vmatpush1.msra.mxu0 %v2466
  %2713 = vmatprep.subr.mxu0 0.0
  %2714 = vmatpush1.msra.mxu0 %v2465
  %2715 = vmatprep.subr.mxu0 0.0
  %2716 = vmatpush1.msra.mxu0 %v2464
  %2717 = vmatprep.subr.mxu0 0.0
  %2718 = vmatpush1.msra.mxu0 %v2463
  %2719 = vmatprep.subr.mxu0 0.0
  %2720 = vmatpush1.msra.mxu0 %v2462
  %2721 = vmatprep.subr.mxu0 0.0
  %2722 = vmatpush1.msra.mxu0 %v2461
  %2723 = vmatprep.subr.mxu0 0.0
  %2724 = vmatpush1.msra.mxu0 %v2460
  %2725 = vmatprep.subr.mxu0 0.0
  %2726 = vmatpush1.msra.mxu0 %v2459
  %2727 = vmatprep.subr.mxu0 0.0
  %2728 = vmatpush1.msra.mxu0 %v2458
  %2729 = vmatprep.subr.mxu0 0.0
  %2730 = vmatpush1.msra.mxu0 %v2457
  %2731 = vmatprep.subr.mxu0 0.0
  %2732 = vmatpush1.msra.mxu0 %v2456
  %2733 = vmatprep.subr.mxu0 0.0
  %2734 = vmatpush2.msra.mxu0 0.0
  %2735 = vmatprep.subr.mxu0 0.0
  %2736 = vmatpush2.msra.mxu0 0.0
  %2737 = vmatprep.subr.mxu0 0.0
  %2738 = vmatpush2.msra.mxu0 0.0
  %2739 = vmatprep.subr.mxu0 0.0
  %2740 = vmatpush2.msra.mxu0 0.0
  %2741 = vmatprep.subr.mxu0 0.0
  %2742 = vmatpush2.msra.mxu0 0.0
  %2743 = vmatprep.subr.mxu0 0.0
  %2744 = vmatpush2.msra.mxu0 0.0
  %2745 = vmatprep.subr.mxu0 0.0
  %2746 = vmatpush2.msra.mxu0 0.0
  %2747 = vmatprep.subr.mxu0 0.0
  %2748 = vmatpush2.msra.mxu0 0.0
  %2749 = vmatprep.subr.mxu0 0.0
  %2750 = vmatpush2.msra.mxu0 0.0
  %2751 = vmatprep.subr.mxu0 0.0
  %2752 = vmatpush2.msra.mxu0 0.0
  %2753 = vmatprep.subr.mxu0 0.0
  %2754 = vmatpush2.msra.mxu0 0.0
  %2755 = vmatprep.subr.mxu0 0.0
  %2756 = vmatpush2.msra.mxu0 0.0
  %2757 = vmatprep.subr.mxu0 0.0
  %2758 = vmatpush2.msra.mxu0 0.0
  %2759 = vmatprep.subr.mxu0 0.0
  %2760 = vmatpush2.msra.mxu0 0.0
  %2761 = vmatprep.subr.mxu0 0.0
  %2762 = vmatpush2.msra.mxu0 0.0
  %2763 = vmatprep.subr.mxu0 0.0
  %2764 = vmatpush2.msra.mxu0 0.0
  %2765 = vmatprep.mubr.f32.mxu0 0.0
  %2766 = vmatmul.mubr.f32.gmra.mxu0 %v2558
  %v2767 = vpop.f32.mrf.mxu0
  %v2768 = vadd.f32 0.0, %v2767
  %v2769 = vpop.f32.mrf.mxu0
  %2770 = vdwg.mxu0
  %v2771 = vadd.f32 %v2698, %v2768
  %v2772 = vld [vmem:[%s17] sm:$0xf]
  %v2774 = vsel %vm1499, %v2772, 0
  %2776 = vmatprep.subr.mxu0 0.0
  %2777 = vmatpush1.msra.mxu0 0.0
  %2778 = vmatprep.subr.mxu0 0.0
  %2779 = vmatpush1.msra.mxu0 0.0
  %2780 = vmatprep.subr.mxu0 0.0
  %2781 = vmatpush1.msra.mxu0 0.0
  %2782 = vmatprep.subr.mxu0 0.0
  %2783 = vmatpush1.msra.mxu0 0.0
  %2784 = vmatprep.subr.mxu0 0.0
  %2785 = vmatpush1.msra.mxu0 0.0
  %2786 = vmatprep.subr.mxu0 0.0
  %2787 = vmatpush1.msra.mxu0 0.0
  %2788 = vmatprep.subr.mxu0 0.0
  %2789 = vmatpush1.msra.mxu0 0.0
  %2790 = vmatprep.subr.mxu0 0.0
  %2791 = vmatpush1.msra.mxu0 0.0
  %2792 = vmatprep.subr.mxu0 0.0
  %2793 = vmatpush1.msra.mxu0 0.0
  %2794 = vmatprep.subr.mxu0 0.0
  %2795 = vmatpush1.msra.mxu0 0.0
  %2796 = vmatprep.subr.mxu0 0.0
  %2797 = vmatpush1.msra.mxu0 0.0
  %2798 = vmatprep.subr.mxu0 0.0
  %2799 = vmatpush1.msra.mxu0 0.0
  %2800 = vmatprep.subr.mxu0 0.0
  %2801 = vmatpush1.msra.mxu0 0.0
  %2802 = vmatprep.subr.mxu0 0.0
  %2803 = vmatpush1.msra.mxu0 0.0
  %2804 = vmatprep.subr.mxu0 0.0
  %2805 = vmatpush1.msra.mxu0 0.0
  %2806 = vmatprep.subr.mxu0 0.0
  %2807 = vmatpush1.msra.mxu0 %v2771
  %2808 = vmatprep.subr.mxu0 0.0
  %2809 = vmatpush2.msra.mxu0 0.0
  %2810 = vmatprep.subr.mxu0 0.0
  %2811 = vmatpush2.msra.mxu0 0.0
  %2812 = vmatprep.subr.mxu0 0.0
  %2813 = vmatpush2.msra.mxu0 0.0
  %2814 = vmatprep.subr.mxu0 0.0
  %2815 = vmatpush2.msra.mxu0 0.0
  %2816 = vmatprep.subr.mxu0 0.0
  %2817 = vmatpush2.msra.mxu0 0.0
  %2818 = vmatprep.subr.mxu0 0.0
  %2819 = vmatpush2.msra.mxu0 0.0
  %2820 = vmatprep.subr.mxu0 0.0
  %2821 = vmatpush2.msra.mxu0 0.0
  %2822 = vmatprep.subr.mxu0 0.0
  %2823 = vmatpush2.msra.mxu0 0.0
  %2824 = vmatprep.subr.mxu0 0.0
  %2825 = vmatpush2.msra.mxu0 0.0
  %2826 = vmatprep.subr.mxu0 0.0
  %2827 = vmatpush2.msra.mxu0 0.0
  %2828 = vmatprep.subr.mxu0 0.0
  %2829 = vmatpush2.msra.mxu0 0.0
  %2830 = vmatprep.subr.mxu0 0.0
  %2831 = vmatpush2.msra.mxu0 0.0
  %2832 = vmatprep.subr.mxu0 0.0
  %2833 = vmatpush2.msra.mxu0 0.0
  %2834 = vmatprep.subr.mxu0 0.0
  %2835 = vmatpush2.msra.mxu0 0.0
  %2836 = vmatprep.subr.mxu0 0.0
  %2837 = vmatpush2.msra.mxu0 0.0
  %2838 = vmatprep.subr.mxu0 0.0
  %2839 = vmatpush2.msra.mxu0 0.0
  %2840 = vmatprep.mubr.f32.mxu0 0.0
  %2841 = vmatmul.mubr.f32.gmra.mxu0 %v2774
  %v2842 = vpop.f32.mrf.mxu0
  %v2843 = vadd.f32 0.0, %v2842
  %v2844 = vpop.f32.mrf.mxu0
  %2845 = vdwg.mxu0
  %v2846 = vmul.f32 %v2771, %v2771
  %2847 = vmatprep.subr.mxu0 0.0
  %2848 = vmatpush1.msra.mxu0 0.0
  %2849 = vmatprep.subr.mxu0 0.0
  %2850 = vmatpush1.msra.mxu0 0.0
  %2851 = vmatprep.subr.mxu0 0.0
  %2852 = vmatpush1.msra.mxu0 0.0
  %2853 = vmatprep.subr.mxu0 0.0
  %2854 = vmatpush1.msra.mxu0 0.0
  %2855 = vmatprep.subr.mxu0 0.0
  %2856 = vmatpush1.msra.mxu0 0.0
  %2857 = vmatprep.subr.mxu0 0.0
  %2858 = vmatpush1.msra.mxu0 0.0
  %2859 = vmatprep.subr.mxu0 0.0
  %2860 = vmatpush1.msra.mxu0 0.0
  %2861 = vmatprep.subr.mxu0 0.0
  %2862 = vmatpush1.msra.mxu0 0.0
  %2863 = vmatprep.subr.mxu0 0.0
  %2864 = vmatpush1.msra.mxu0 0.0
  %2865 = vmatprep.subr.mxu0 0.0
  %2866 = vmatpush1.msra.mxu0 0.0
  %2867 = vmatprep.subr.mxu0 0.0
  %2868 = vmatpush1.msra.mxu0 0.0
  %2869 = vmatprep.subr.mxu0 0.0
  %2870 = vmatpush1.msra.mxu0 0.0
  %2871 = vmatprep.subr.mxu0 0.0
  %2872 = vmatpush1.msra.mxu0 0.0
  %2873 = vmatprep.subr.mxu0 0.0
  %2874 = vmatpush1.msra.mxu0 0.0
  %2875 = vmatprep.subr.mxu0 0.0
  %2876 = vmatpush1.msra.mxu0 0.0
  %2877 = vmatprep.subr.mxu0 0.0
  %2878 = vmatpush1.msra.mxu0 %v2846
  %2879 = vmatprep.subr.mxu0 0.0
  %2880 = vmatpush2.msra.mxu0 0.0
  %2881 = vmatprep.subr.mxu0 0.0
  %2882 = vmatpush2.msra.mxu0 0.0
  %2883 = vmatprep.subr.mxu0 0.0
  %2884 = vmatpush2.msra.mxu0 0.0
  %2885 = vmatprep.subr.mxu0 0.0
  %2886 = vmatpush2.msra.mxu0 0.0
  %2887 = vmatprep.subr.mxu0 0.0
  %2888 = vmatpush2.msra.mxu0 0.0
  %2889 = vmatprep.subr.mxu0 0.0
  %2890 = vmatpush2.msra.mxu0 0.0
  %2891 = vmatprep.subr.mxu0 0.0
  %2892 = vmatpush2.msra.mxu0 0.0
  %2893 = vmatprep.subr.mxu0 0.0
  %2894 = vmatpush2.msra.mxu0 0.0
  %2895 = vmatprep.subr.mxu0 0.0
  %2896 = vmatpush2.msra.mxu0 0.0
  %2897 = vmatprep.subr.mxu0 0.0
  %2898 = vmatpush2.msra.mxu0 0.0
  %2899 = vmatprep.subr.mxu0 0.0
  %2900 = vmatpush2.msra.mxu0 0.0
  %2901 = vmatprep.subr.mxu0 0.0
  %2902 = vmatpush2.msra.mxu0 0.0
  %2903 = vmatprep.subr.mxu0 0.0
  %2904 = vmatpush2.msra.mxu0 0.0
  %2905 = vmatprep.subr.mxu0 0.0
  %2906 = vmatpush2.msra.mxu0 0.0
  %2907 = vmatprep.subr.mxu0 0.0
  %2908 = vmatpush2.msra.mxu0 0.0
  %2909 = vmatprep.subr.mxu0 0.0
  %2910 = vmatpush2.msra.mxu0 0.0
  %2911 = vmatprep.mubr.f32.mxu0 0.0
  %2912 = vmatmul.mubr.f32.gmra.mxu0 %v2774
  %v2913 = vpop.f32.mrf.mxu0
  %v2914 = vadd.f32 0.0, %v2913
  %v2915 = vpop.f32.mrf.mxu0
  %2916 = vdwg.mxu0
  %v2917 = vmul.f32 %v2843, %v2843
  %v2918 = vsub.f32 %v2914, %v2917
  %v2919 = vmax.f32 %v2918, 0.0
  %v2920 = vadd.f32 %v2919, 1e-08
  %v2921 = vrsqrt.pop %v2920
  %v2922 = vmul.f32 %v2920, %v2921
  %vm2923 = vcmp.eq.f32.partialorder %v2920, inf
  %v2924 = vsel %vm2923, %v2920, %v2922
  %vm2925 = vcmp.eq.f32.partialorder %v2920, 0.0
  %v2926 = vand.u32 %v2920, 2147483648
  %v2927 = vsel %vm2925, %v2926, %v2924
  %vm2928 = vcmask 1043456
  %v2929 = vsel %vm2928, %v2927, 0.0
  %2930 = vadd.xlane.f32.xlu0 %v2929
  %v2931 = vpop.xlane.xlu0 %2930
  %v2932 = vsel %vm2928, %v2931, 0.0
  %v2933 = vrot.slane %v2932, 4
  %v2934 = vadd.f32 %v2932, %v2933
  %v2935 = vrot.slane %v2934, 2
  %v2936 = vadd.f32 %v2934, %v2935
  %v2937 = vrot.slane %v2936, 1
  %v2938 = vadd.f32 %v2936, %v2937
  %v2939 = vmul.f32 %v2938, %v1488
  %vm2940 = vcmp.gt.f32.partialorder %v2771, 0.0
  %v2941 = vmul.f32 %v2771, 0.2
  %v2942 = vsel %vm2940, %v2771, %v2941
  %v2943 = vld [vmem:[%s18] sm:$0xff]
  %v2944 = vmul.f32 %v2942, %v2943
  %v2945 = vld [vmem:[%s19] sm:$0x3]
  %v2947 = vsel %vm1499, %v2945, 0
  %2949 = vmatprep.subr.mxu0 0.0
  %2950 = vmatpush1.msra.mxu0 0.0
  %2951 = vmatprep.subr.mxu0 0.0
  %2952 = vmatpush1.msra.mxu0 0.0
  %2953 = vmatprep.subr.mxu0 0.0
  %2954 = vmatpush1.msra.mxu0 0.0
  %2955 = vmatprep.subr.mxu0 0.0
  %2956 = vmatpush1.msra.mxu0 0.0
  %2957 = vmatprep.subr.mxu0 0.0
  %2958 = vmatpush1.msra.mxu0 0.0
  %2959 = vmatprep.subr.mxu0 0.0
  %2960 = vmatpush1.msra.mxu0 0.0
  %2961 = vmatprep.subr.mxu0 0.0
  %2962 = vmatpush1.msra.mxu0 0.0
  %2963 = vmatprep.subr.mxu0 0.0
  %2964 = vmatpush1.msra.mxu0 0.0
  %2965 = vmatprep.subr.mxu0 0.0
  %2966 = vmatpush1.msra.mxu0 0.0
  %2967 = vmatprep.subr.mxu0 0.0
  %2968 = vmatpush1.msra.mxu0 0.0
  %2969 = vmatprep.subr.mxu0 0.0
  %2970 = vmatpush1.msra.mxu0 0.0
  %2971 = vmatprep.subr.mxu0 0.0
  %2972 = vmatpush1.msra.mxu0 0.0
  %2973 = vmatprep.subr.mxu0 0.0
  %2974 = vmatpush1.msra.mxu0 0.0
  %2975 = vmatprep.subr.mxu0 0.0
  %2976 = vmatpush1.msra.mxu0 0.0
  %2977 = vmatprep.subr.mxu0 0.0
  %2978 = vmatpush1.msra.mxu0 0.0
  %2979 = vmatprep.subr.mxu0 0.0
  %2980 = vmatpush1.msra.mxu0 %v2944
  %2981 = vmatprep.subr.mxu0 0.0
  %2982 = vmatpush2.msra.mxu0 0.0
  %2983 = vmatprep.subr.mxu0 0.0
  %2984 = vmatpush2.msra.mxu0 0.0
  %2985 = vmatprep.subr.mxu0 0.0
  %2986 = vmatpush2.msra.mxu0 0.0
  %2987 = vmatprep.subr.mxu0 0.0
  %2988 = vmatpush2.msra.mxu0 0.0
  %2989 = vmatprep.subr.mxu0 0.0
  %2990 = vmatpush2.msra.mxu0 0.0
  %2991 = vmatprep.subr.mxu0 0.0
  %2992 = vmatpush2.msra.mxu0 0.0
  %2993 = vmatprep.subr.mxu0 0.0
  %2994 = vmatpush2.msra.mxu0 0.0
  %2995 = vmatprep.subr.mxu0 0.0
  %2996 = vmatpush2.msra.mxu0 0.0
  %2997 = vmatprep.subr.mxu0 0.0
  %2998 = vmatpush2.msra.mxu0 0.0
  %2999 = vmatprep.subr.mxu0 0.0
  %3000 = vmatpush2.msra.mxu0 0.0
  %3001 = vmatprep.subr.mxu0 0.0
  %3002 = vmatpush2.msra.mxu0 0.0
  %3003 = vmatprep.subr.mxu0 0.0
  %3004 = vmatpush2.msra.mxu0 0.0
  %3005 = vmatprep.subr.mxu0 0.0
  %3006 = vmatpush2.msra.mxu0 0.0
  %3007 = vmatprep.subr.mxu0 0.0
  %3008 = vmatpush2.msra.mxu0 0.0
  %3009 = vmatprep.subr.mxu0 0.0
  %3010 = vmatpush2.msra.mxu0 0.0
  %3011 = vmatprep.subr.mxu0 0.0
  %3012 = vmatpush2.msra.mxu0 0.0
  %3013 = vmatprep.mubr.f32.mxu0 0.0
  %3014 = vmatmul.mubr.f32.gmra.mxu0 %v2947
  %v3015 = vpop.f32.mrf.mxu0
  %v3016 = vadd.f32 0.0, %v3015
  %v3017 = vpop.f32.mrf.mxu0
  %3018 = vdwg.mxu0
  %vm3019 = vcmask 1041408
  %v3020 = vsel %vm3019, %v3016, 0.0
  %3021 = vadd.xlane.f32.xlu0 %v3020
  %v3022 = vpop.xlane.xlu0 %3021
  %v3023 = vld [vmem:[#allocation2] sm:$0x1]
  %v3024 = vmul.f32 %v2939, %v3023
  %v3026 = vlaneseq
  %v3027 = vshrl.u32 %v3026, 7
  %v3028 = vsub.s32 0, %v3027
  %v3029 = vrot.slane %v3024, %v3028
  %v3031 = vadd.f32 %v3022, %v3029
  %v3032 = vxor.u32 %v3031, 2147483648
  %v3033 = vmul.f32 %v3032, 1.442695
  %v3034 = vpow.pop %v3033
  %v3035 = vadd.f32 %v3034, 1.0
  %v3036 = vrcp.pop %v3035
  %v3037 = vmul.f32 1.0, %v3036
  %vm3038 = vcmask 1024
  %3039 = vst.msk [vmem:[%s21] sm:$0x3] %vm3038, %v3037
  // Predicated region
  $region86: #{discriminator_forward.1} parent=0 // pred_check
    _
  $region87: #{discriminator_forward.1} parent=0 // pred_check_branch
    %3041 = sbr.rel (0) target = $region89
  $region88: #{discriminator_forward.1} parent=0 // pred_region
    _
  $region89: #{discriminator_forward.1} parent=0 // pred_fallthru
    _
  // Predicated region
  $region90: #{discriminator_forward.1} parent=0 // pred_check
    _
  $region91: #{discriminator_forward.1} parent=0 // pred_check_branch
    %3043 = sbr.rel (0) target = $region93
  $region92: #{discriminator_forward.1} parent=0 // pred_region
    _
  $region93: #{discriminator_forward.1} parent=0 // pred_fallthru
    _

</llo_original>
